<compile_context>
chip_gen: v5e
topology: v5e:2x2
jax: 0.10.0
libtpu: 0.0.40
codegen_flags: <defaults>
</compile_context>

<pallas_src>
import math

import jax
import jax.numpy as jnp
import numpy as np
from jax.experimental import pallas as pl
from jax.experimental.pallas import tpu as pltpu

BN_EPS = 1e-5


def autopad(k, p=None, dilation=1):
    if dilation > 1:
        k = dilation * (k - 1) + 1
    if p is None:
        p = k // 2
    return p


def _round_up(v, m):
    return (v + m - 1) // m * m


def _cdiv(a, b):
    return (a + b - 1) // b


def _pick_vmem_limit():
    """48 MiB on v7x (64 MiB physical VMEM), 100 MiB on v5e/v6e (128 MiB physical)."""
    try:
        kind = jax.devices()[0].device_kind.lower()
    except Exception:
        kind = ""
    if "v7" in kind or "7x" in kind:
        return 48 << 20
    return 100 << 20


def _make_patch_builder(K, stride, dilation, tm_rows, Wo, Cin_pad):
    """Local im2col for one (rows_in, Wp, Cin_pad) bf16 tile -> (tm_rows*Wo, K*K*Cin_pad) bf16.

    Taps are concatenated along the lane axis (kh-major, kw, cin-minor) so a single MXU matmul
    against the (K*K*Cin_pad, TC) weight block covers the whole receptive field.
    """

    def build(x_ref):
        taps = []
        for kh in range(K):
            for kw in range(K):
                h0 = kh * dilation
                w0 = kw * dilation
                if stride == 1:
                    patch = x_ref[h0:h0 + tm_rows, w0:w0 + Wo, :]
                else:
                    # TODO(synk): space-to-depth in the wrapper would make these reads dense.
                    patch = x_ref[pl.ds(h0, tm_rows, stride), pl.ds(w0, Wo, stride), :]
                taps.append(patch)
        col = jnp.concatenate(taps, axis=-1)              # (tm_rows, Wo, K*K*Cin_pad)
        return col.reshape(tm_rows * Wo, K * K * Cin_pad)

    return build


def _conv_bn_silu_impl(x, weight, gamma, beta, stride, padding, dilation, groups,
                       out_layout="NCHW", out_dtype=jnp.bfloat16):
    if groups != 1:
        raise NotImplementedError("groups > 1 is not supported by this Pallas kernel")

    N, Cin, H, W = x.shape
    Cout, Cin_w, KH, KW = weight.shape
    assert Cin == Cin_w and KH == KW
    K = KH
    p = autopad(K, padding, dilation)

    Ho = (H + 2 * p - dilation * (K - 1) - 1) // stride + 1
    Wo = (W + 2 * p - dilation * (K - 1) - 1) // stride + 1
    Hp, Wp = H + 2 * p, W + 2 * p
    M_img = Ho * Wo

    Cin_pad = _round_up(Cin, 16)       # bf16 packs 16 sublanes per vreg
    Cout_pad = _round_up(Cout, 128)    # lane-dense output (no masked vst)
    TC = 256 if Cout_pad % 256 == 0 else 128   # feed the 256-wide MXU on v6e/v7x when possible
    CB = Cout_pad // TC

    # ---- spatial tile: ~256 flattened-M rows per tile; keep TM a multiple of 8 when tiled ----
    target_m = 256
    tm_rows = max(1, _cdiv(target_m, Wo))
    if tm_rows >= Ho:
        tm_rows = Ho
    else:
        step = 8 // math.gcd(Wo, 8)
        tm_rows = max(step, (tm_rows // step) * step)
        if tm_rows >= Ho:
            tm_rows = Ho
    MB = _cdiv(Ho, tm_rows)
    TM = tm_rows * Wo
    M_pad = MB * TM
    rows_in = (tm_rows - 1) * stride + (K - 1) * dilation + 1
    KKC = K * K * Cin_pad

    # ---- layout prep (plain-JAX glue; no K*K im2col in HBM, only a small row halo) ----
    x_nhwc = jnp.transpose(x, (0, 2, 3, 1))
    xp = jnp.pad(x_nhwc, ((0, 0), (p, p), (p, p), (0, Cin_pad - Cin))).astype(jnp.bfloat16)
    needed_h = (MB - 1) * tm_rows * stride + rows_in
    if needed_h > Hp:
        xp = jnp.pad(xp, ((0, 0), (0, needed_h - Hp), (0, 0), (0, 0)))
    # Overlapping row chunks with a (K-1)*dilation halo so BlockSpec tiling needs no halo logic.
    x_chunks = jnp.stack(
        [xp[:, m * tm_rows * stride: m * tm_rows * stride + rows_in] for m in range(MB)],
        axis=1)                                            # (N, MB, rows_in, Wp, Cin_pad) bf16

    # OIHW -> (K, K, Cin_pad, Cout_pad) -> (K*K*Cin_pad, Cout_pad); matches the tap concat order.
    w = jnp.transpose(weight, (2, 3, 1, 0))
    w = jnp.pad(w, ((0, 0), (0, 0), (0, Cin_pad - Cin), (0, Cout_pad - Cout)))
    w = w.reshape(KKC, Cout_pad).astype(jnp.bfloat16)

    build_patches = _make_patch_builder(K, stride, dilation, tm_rows, Wo, Cin_pad)
    mask_needed = (M_pad != M_img)

    cparams = pltpu.CompilerParams(
        dimension_semantics=("parallel", "parallel", "parallel"),
        vmem_limit_bytes=_pick_vmem_limit(),
    )

    grid = (N, MB, CB)
    x_spec = pl.BlockSpec((None, None, rows_in, Wp, Cin_pad), lambda n, m, c: (n, m, 0, 0, 0))
    w_spec = pl.BlockSpec((KKC, TC), lambda n, m, c: (0, c))
    y_spec = pl.BlockSpec((None, TM, TC), lambda n, m, c: (n, m, c))
    st_spec = pl.BlockSpec((None, None, 1, TC), lambda n, m, c: (n, m, 0, c))
    sc_spec = pl.BlockSpec((1, TC), lambda n, m, c: (0, c))

    # ---- pass 1: conv (single tap-folded matmul) + masked per-tile BN partials, y kept in HBM ----
    def conv_stats_kernel(x_ref, w_ref, y_ref, sum_ref, sumsq_ref):
        patches = build_patches(x_ref)                                     # (TM, KKC) bf16
        y32 = jnp.dot(patches, w_ref[...], preferred_element_type=jnp.float32)
        y_bf = y32.astype(jnp.bfloat16)
        y_ref[...] = y_bf
        # Stats from the bf16-rounded values so they are exactly consistent with pass 2.
        ys = y_bf.astype(jnp.float32)
        if mask_needed:
            m = pl.program_id(1)
            row = jax.lax.broadcasted_iota(jnp.int32, (TM, 1), 0) + m * TM
            ys = jnp.where(row < M_img, ys, 0.0)
        sum_ref[...] = jnp.sum(ys, axis=0, keepdims=True)
        sumsq_ref[...] = jnp.sum(ys * ys, axis=0, keepdims=True)

    y_flat, part_sum, part_sumsq = pl.pallas_call(
        conv_stats_kernel,
        out_shape=(
            jax.ShapeDtypeStruct((N, M_pad, Cout_pad), jnp.bfloat16),
            jax.ShapeDtypeStruct((N, MB, 1, Cout_pad), jnp.float32),
            jax.ShapeDtypeStruct((N, MB, 1, Cout_pad), jnp.float32),
        ),
        grid=grid,
        in_specs=[x_spec, w_spec],
        out_specs=(y_spec, st_spec, st_spec),
        compiler_params=cparams,
    )(x_chunks, w)

    # ---- fold global batch stats into per-channel affine (tiny, plain-JAX, f32) ----
    cnt = jnp.float32(N * M_img)
    s = jnp.sum(part_sum, axis=(0, 1, 2))                 # (Cout_pad,)
    ss = jnp.sum(part_sumsq, axis=(0, 1, 2))
    mean = s / cnt
    var = jnp.maximum(ss / cnt - mean * mean, 0.0)        # biased variance (train-mode BN)
    gamma_pad = jnp.pad(gamma.astype(jnp.float32), (0, Cout_pad - Cout))
    beta_pad = jnp.pad(beta.astype(jnp.float32), (0, Cout_pad - Cout))
    scale = gamma_pad * jax.lax.rsqrt(var + BN_EPS)
    shift = beta_pad - mean * scale
    scale2d = scale.reshape(1, Cout_pad)
    shift2d = shift.reshape(1, Cout_pad)

    # ---- pass 2: pure elementwise BN + SiLU over the stored y (no conv recompute) ----
    def bn_silu_kernel(y_ref, scale_ref, shift_ref, o_ref):
        z = y_ref[...].astype(jnp.float32) * scale_ref[...] + shift_ref[...]
        sig = pl.reciprocal(1.0 + jnp.exp(-z), approx=True)   # EUP slot, ~2^-12 accurate
        o_ref[...] = (z * sig).astype(o_ref.dtype)

    out_flat = pl.pallas_call(
        bn_silu_kernel,
        out_shape=jax.ShapeDtypeStruct((N, M_pad, Cout_pad), out_dtype),
        grid=grid,
        in_specs=[y_spec, sc_spec, sc_spec],
        out_specs=y_spec,
        compiler_params=cparams,
    )(y_flat, scale2d, shift2d)

    out_nhwc = out_flat[:, :M_img, :Cout].reshape(N, Ho, Wo, Cout)
    if out_layout == "NHWC":
        return out_nhwc
    # NCHW kept as the default to preserve the PyTorch module's interface.
    return jnp.transpose(out_nhwc, (0, 3, 1, 2))


conv_bn_silu = jax.jit(
    _conv_bn_silu_impl,
    static_argnames=("stride", "padding", "dilation", "groups", "out_layout", "out_dtype"),
)


def _reference(x, weight, gamma, beta, stride=1, padding=None, dilation=1):
    """Pure-JAX reference (same math as the PyTorch forward). Conv operands are rounded to
    bf16 to mirror the kernel's bf16 MXU inputs; accumulation / BN / SiLU are f32. The kernel
    additionally rounds the conv output and the final result to bf16."""
    K = weight.shape[2]
    p = autopad(K, padding, dilation)
    xr = x.astype(jnp.bfloat16).astype(jnp.float32)
    wr = weight.astype(jnp.bfloat16).astype(jnp.float32)
    y = jax.lax.conv_general_dilated(
        xr, wr,
        window_strides=(stride, stride),
        padding=[(p, p), (p, p)],
        rhs_dilation=(dilation, dilation),
        dimension_numbers=("NCHW", "OIHW", "NCHW"),
        precision=jax.lax.Precision.HIGHEST,
    )
    mean = jnp.mean(y, axis=(0, 2, 3), keepdims=True)
    var = jnp.mean((y - mean) ** 2, axis=(0, 2, 3), keepdims=True)
    y_hat = (y - mean) * jax.lax.rsqrt(var + BN_EPS)
    z = y_hat * gamma.reshape(1, -1, 1, 1) + beta.reshape(1, -1, 1, 1)
    return z * jax.nn.sigmoid(z)


if __name__ == "__main__":
    key = jax.random.PRNGKey(0)
    k_x, k_w, k_g, k_b = jax.random.split(key, 4)

    # Conv(cin=4, cout=8, kernel_size=3, stride=1) with autopad -> padding=1
    N, Cin, H, W = 2, 4, 16, 16
    Cout, K = 8, 3

    x = jax.random.normal(k_x, (N, Cin, H, W), dtype=jnp.float32)
    weight = jax.random.normal(k_w, (Cout, Cin, K, K), dtype=jnp.float32) * 0.1
    gamma = jax.random.normal(k_g, (Cout,), dtype=jnp.float32) * 0.1 + 1.0
    beta = jax.random.normal(k_b, (Cout,), dtype=jnp.float32) * 0.1

    out = conv_bn_silu(x, weight, gamma, beta,
                       stride=1, padding=None, dilation=1, groups=1)
    out = jax.block_until_ready(out)
    assert out.shape == (N, Cout, H, W), out.shape

    ref = _reference(x, weight, gamma, beta, stride=1, padding=None, dilation=1)
    # bf16 conv-output + bf16 final writeback -> compare at a bf16-appropriate tolerance.
    np.testing.assert_allclose(np.asarray(out.astype(jnp.float32)), np.asarray(ref),
                               atol=3e-2, rtol=3e-2)

    print("KERNEL_OK")
</pallas_src>

<mosaic_0001>
module attributes {stable_mosaic.version = 11 : i64} {
  func.func @conv_stats_kernel(%arg0: i32, %arg1: i32, %arg2: i32, %arg3: memref<1x1x18x18x16xbf16, #tpu.memory_space<vmem>>, %arg4: memref<144x128xbf16, #tpu.memory_space<vmem>>, %arg5: memref<1x256x128xbf16, #tpu.memory_space<vmem>>, %arg6: memref<1x1x1x128xf32, #tpu.memory_space<vmem>>, %arg7: memref<1x1x1x128xf32, #tpu.memory_space<vmem>>) attributes {dimension_semantics = [#tpu.dimension_semantics<parallel>, #tpu.dimension_semantics<parallel>, #tpu.dimension_semantics<parallel>], iteration_bounds = array<i64: 2, 1, 1>, scalar_prefetch = 0 : i64, scratch_operands = 0 : i64, tpu.core_type = #tpu.core_type<tc>, window_params = [{transform_indices = @transform_0, window_bounds = array<i64: 1, 1, 18, 18, 16>}, {transform_indices = @transform_1, window_bounds = array<i64: 144, 128>}, {transform_indices = @transform_2, window_bounds = array<i64: 1, 256, 128>}, {transform_indices = @transform_3, window_bounds = array<i64: 1, 1, 1, 128>}, {transform_indices = @transform_4, window_bounds = array<i64: 1, 1, 1, 128>}]} {
    %c0 = arith.constant 0 : index
    %c0_0 = arith.constant 0 : index
    %c0_1 = arith.constant 0 : index
    %c0_2 = arith.constant 0 : index
    %c0_3 = arith.constant 0 : index
    %0 = vector.load %arg3[%c0, %c0_0, %c0_1, %c0_2, %c0_3] : memref<1x1x18x18x16xbf16, #tpu.memory_space<vmem>>, vector<1x1x16x16x16xbf16>
    %1 = vector.shape_cast %0 : vector<1x1x16x16x16xbf16> to vector<16x16x16xbf16>
    %c0_4 = arith.constant 0 : index
    %c0_5 = arith.constant 0 : index
    %c0_6 = arith.constant 0 : index
    %c1 = arith.constant 1 : index
    %c0_7 = arith.constant 0 : index
    %2 = vector.load %arg3[%c0_4, %c0_5, %c0_6, %c1, %c0_7] : memref<1x1x18x18x16xbf16, #tpu.memory_space<vmem>>, vector<1x1x16x16x16xbf16>
    %3 = vector.shape_cast %2 : vector<1x1x16x16x16xbf16> to vector<16x16x16xbf16>
    %c0_8 = arith.constant 0 : index
    %c0_9 = arith.constant 0 : index
    %c0_10 = arith.constant 0 : index
    %c2 = arith.constant 2 : index
    %c0_11 = arith.constant 0 : index
    %4 = vector.load %arg3[%c0_8, %c0_9, %c0_10, %c2, %c0_11] : memref<1x1x18x18x16xbf16, #tpu.memory_space<vmem>>, vector<1x1x16x16x16xbf16>
    %5 = vector.shape_cast %4 : vector<1x1x16x16x16xbf16> to vector<16x16x16xbf16>
    %c0_12 = arith.constant 0 : index
    %c0_13 = arith.constant 0 : index
    %c1_14 = arith.constant 1 : index
    %c0_15 = arith.constant 0 : index
    %c0_16 = arith.constant 0 : index
    %6 = vector.load %arg3[%c0_12, %c0_13, %c1_14, %c0_15, %c0_16] : memref<1x1x18x18x16xbf16, #tpu.memory_space<vmem>>, vector<1x1x16x16x16xbf16>
    %7 = vector.shape_cast %6 : vector<1x1x16x16x16xbf16> to vector<16x16x16xbf16>
    %c0_17 = arith.constant 0 : index
    %c0_18 = arith.constant 0 : index
    %c1_19 = arith.constant 1 : index
    %c1_20 = arith.constant 1 : index
    %c0_21 = arith.constant 0 : index
    %8 = vector.load %arg3[%c0_17, %c0_18, %c1_19, %c1_20, %c0_21] : memref<1x1x18x18x16xbf16, #tpu.memory_space<vmem>>, vector<1x1x16x16x16xbf16>
    %9 = vector.shape_cast %8 : vector<1x1x16x16x16xbf16> to vector<16x16x16xbf16>
    %c0_22 = arith.constant 0 : index
    %c0_23 = arith.constant 0 : index
    %c1_24 = arith.constant 1 : index
    %c2_25 = arith.constant 2 : index
    %c0_26 = arith.constant 0 : index
    %10 = vector.load %arg3[%c0_22, %c0_23, %c1_24, %c2_25, %c0_26] : memref<1x1x18x18x16xbf16, #tpu.memory_space<vmem>>, vector<1x1x16x16x16xbf16>
    %11 = vector.shape_cast %10 : vector<1x1x16x16x16xbf16> to vector<16x16x16xbf16>
    %c0_27 = arith.constant 0 : index
    %c0_28 = arith.constant 0 : index
    %c2_29 = arith.constant 2 : index
    %c0_30 = arith.constant 0 : index
    %c0_31 = arith.constant 0 : index
    %12 = vector.load %arg3[%c0_27, %c0_28, %c2_29, %c0_30, %c0_31] : memref<1x1x18x18x16xbf16, #tpu.memory_space<vmem>>, vector<1x1x16x16x16xbf16>
    %13 = vector.shape_cast %12 : vector<1x1x16x16x16xbf16> to vector<16x16x16xbf16>
    %c0_32 = arith.constant 0 : index
    %c0_33 = arith.constant 0 : index
    %c2_34 = arith.constant 2 : index
    %c1_35 = arith.constant 1 : index
    %c0_36 = arith.constant 0 : index
    %14 = vector.load %arg3[%c0_32, %c0_33, %c2_34, %c1_35, %c0_36] : memref<1x1x18x18x16xbf16, #tpu.memory_space<vmem>>, vector<1x1x16x16x16xbf16>
    %15 = vector.shape_cast %14 : vector<1x1x16x16x16xbf16> to vector<16x16x16xbf16>
    %c0_37 = arith.constant 0 : index
    %c0_38 = arith.constant 0 : index
    %c2_39 = arith.constant 2 : index
    %c2_40 = arith.constant 2 : index
    %c0_41 = arith.constant 0 : index
    %16 = vector.load %arg3[%c0_37, %c0_38, %c2_39, %c2_40, %c0_41] : memref<1x1x18x18x16xbf16, #tpu.memory_space<vmem>>, vector<1x1x16x16x16xbf16>
    %17 = vector.shape_cast %16 : vector<1x1x16x16x16xbf16> to vector<16x16x16xbf16>
    %18 = tpu.concatenate %1, %3, %5, %7, %9, %11, %13, %15, %17 in 2 : vector<16x16x16xbf16>, vector<16x16x16xbf16>, vector<16x16x16xbf16>, vector<16x16x16xbf16>, vector<16x16x16xbf16>, vector<16x16x16xbf16>, vector<16x16x16xbf16>, vector<16x16x16xbf16>, vector<16x16x16xbf16> -> vector<16x16x144xbf16>
    %19 = vector.shape_cast %18 : vector<16x16x144xbf16> to vector<256x144xbf16>
    %c0_42 = arith.constant 0 : index
    %c0_43 = arith.constant 0 : index
    %20 = vector.load %arg4[%c0_42, %c0_43] : memref<144x128xbf16, #tpu.memory_space<vmem>>, vector<144x128xbf16>
    %cst = arith.constant dense<0.000000e+00> : vector<256x128xf32>
    %21 = tpu.matmul %19, %20, %cst {dimension_numbers = #tpu.dot_dimension_numbers<[1], [0], [0], [1], [0, 0, 1, 1], [], []>} : vector<256x144xbf16>, vector<144x128xbf16>, vector<256x128xf32> -> vector<256x128xf32>
    %22 = arith.truncf %21 : vector<256x128xf32> to vector<256x128xbf16>
    %c0_44 = arith.constant 0 : index
    %c0_45 = arith.constant 0 : index
    %c0_46 = arith.constant 0 : index
    %23 = vector.load %arg5[%c0_44, %c0_45, %c0_46] : memref<1x256x128xbf16, #tpu.memory_space<vmem>>, vector<1x256x128xbf16>
    %24 = vector.shape_cast %23 : vector<1x256x128xbf16> to vector<256x128xbf16>
    %25 = vector.shape_cast %22 : vector<256x128xbf16> to vector<1x256x128xbf16>
    tpu.vector_store %arg5[%c0_44, %c0_45, %c0_46], %25 {strides = array<i32>} : memref<1x256x128xbf16, #tpu.memory_space<vmem>>, vector<1x256x128xbf16>,
    %26 = arith.extf %22 : vector<256x128xbf16> to vector<256x128xf32>
    %cst_47 = arith.constant dense<0.000000e+00> : vector<128xf32>
    %27 = vector.multi_reduction <add>, %26, %cst_47 [0] : vector<256x128xf32> to vector<128xf32>
    %28 = vector.shape_cast %27 : vector<128xf32> to vector<1x128xf32>
    %c0_48 = arith.constant 0 : index
    %c0_49 = arith.constant 0 : index
    %c0_50 = arith.constant 0 : index
    %c0_51 = arith.constant 0 : index
    %29 = vector.load %arg6[%c0_48, %c0_49, %c0_50, %c0_51] : memref<1x1x1x128xf32, #tpu.memory_space<vmem>>, vector<1x1x1x128xf32>
    %30 = vector.shape_cast %29 : vector<1x1x1x128xf32> to vector<1x128xf32>
    %31 = vector.shape_cast %28 : vector<1x128xf32> to vector<1x1x1x128xf32>
    tpu.vector_store %arg6[%c0_48, %c0_49, %c0_50, %c0_51], %31 {strides = array<i32>} : memref<1x1x1x128xf32, #tpu.memory_space<vmem>>, vector<1x1x1x128xf32>,
    %32 = arith.mulf %26, %26 : vector<256x128xf32>
    %cst_52 = arith.constant dense<0.000000e+00> : vector<128xf32>
    %33 = vector.multi_reduction <add>, %32, %cst_52 [0] : vector<256x128xf32> to vector<128xf32>
    %34 = vector.shape_cast %33 : vector<128xf32> to vector<1x128xf32>
    %c0_53 = arith.constant 0 : index
    %c0_54 = arith.constant 0 : index
    %c0_55 = arith.constant 0 : index
    %c0_56 = arith.constant 0 : index
    %35 = vector.load %arg7[%c0_53, %c0_54, %c0_55, %c0_56] : memref<1x1x1x128xf32, #tpu.memory_space<vmem>>, vector<1x1x1x128xf32>
    %36 = vector.shape_cast %35 : vector<1x1x1x128xf32> to vector<1x128xf32>
    %37 = vector.shape_cast %34 : vector<1x128xf32> to vector<1x1x1x128xf32>
    tpu.vector_store %arg7[%c0_53, %c0_54, %c0_55, %c0_56], %37 {strides = array<i32>} : memref<1x1x1x128xf32, #tpu.memory_space<vmem>>, vector<1x1x1x128xf32>,
    return
  }
  func.func @transform_0(%arg0: i32, %arg1: i32, %arg2: i32) -> (i32, i32, i32, i32, i32) {
    %c0_i32 = arith.constant 0 : i32
    %c0_i32_0 = arith.constant 0 : i32
    %c0_i32_1 = arith.constant 0 : i32
    %c0_i32_2 = arith.constant 0 : i32
    return %arg0, %arg1, %c0_i32, %c0_i32_0, %c0_i32_1 : i32, i32, i32, i32, i32
  }
  func.func @transform_1(%arg0: i32, %arg1: i32, %arg2: i32) -> (i32, i32) {
    %c0_i32 = arith.constant 0 : i32
    %c0_i32_0 = arith.constant 0 : i32
    return %c0_i32, %arg2 : i32, i32
  }
  func.func @transform_2(%arg0: i32, %arg1: i32, %arg2: i32) -> (i32, i32, i32) {
    %c0_i32 = arith.constant 0 : i32
    return %arg0, %arg1, %arg2 : i32, i32, i32
  }
  func.func @transform_3(%arg0: i32, %arg1: i32, %arg2: i32) -> (i32, i32, i32, i32) {
    %c0_i32 = arith.constant 0 : i32
    %c0_i32_0 = arith.constant 0 : i32
    return %arg0, %arg1, %c0_i32, %arg2 : i32, i32, i32, i32
  }
  func.func @transform_4(%arg0: i32, %arg1: i32, %arg2: i32) -> (i32, i32, i32, i32) {
    %c0_i32 = arith.constant 0 : i32
    %c0_i32_0 = arith.constant 0 : i32
    return %arg0, %arg1, %c0_i32, %arg2 : i32, i32, i32, i32
  }
}

module attributes {stable_mosaic.version = 11 : i64} {
  func.func @bn_silu_kernel(%arg0: i32, %arg1: i32, %arg2: i32, %arg3: memref<1x256x128xbf16, #tpu.memory_space<vmem>>, %arg4: memref<1x128xf32, #tpu.memory_space<vmem>>, %arg5: memref<1x128xf32, #tpu.memory_space<vmem>>, %arg6: memref<1x256x128xbf16, #tpu.memory_space<vmem>>) attributes {dimension_semantics = [#tpu.dimension_semantics<parallel>, #tpu.dimension_semantics<parallel>, #tpu.dimension_semantics<parallel>], iteration_bounds = array<i64: 2, 1, 1>, scalar_prefetch = 0 : i64, scratch_operands = 0 : i64, tpu.core_type = #tpu.core_type<tc>, window_params = [{transform_indices = @transform_0, window_bounds = array<i64: 1, 256, 128>}, {transform_indices = @transform_1, window_bounds = array<i64: 1, 128>}, {transform_indices = @transform_2, window_bounds = array<i64: 1, 128>}, {transform_indices = @transform_3, window_bounds = array<i64: 1, 256, 128>}]} {
    %c0 = arith.constant 0 : index
    %c0_0 = arith.constant 0 : index
    %c0_1 = arith.constant 0 : index
    %0 = vector.load %arg3[%c0, %c0_0, %c0_1] : memref<1x256x128xbf16, #tpu.memory_space<vmem>>, vector<1x256x128xbf16>
    %1 = vector.shape_cast %0 : vector<1x256x128xbf16> to vector<256x128xbf16>
    %2 = arith.extf %1 : vector<256x128xbf16> to vector<256x128xf32>
    %c0_2 = arith.constant 0 : index
    %c0_3 = arith.constant 0 : index
    %3 = vector.load %arg4[%c0_2, %c0_3] : memref<1x128xf32, #tpu.memory_space<vmem>>, vector<1x128xf32>
    %4 = vector.broadcast %3 : vector<1x128xf32> to vector<256x128xf32>
    %5 = arith.mulf %2, %4 : vector<256x128xf32>
    %c0_4 = arith.constant 0 : index
    %c0_5 = arith.constant 0 : index
    %6 = vector.load %arg5[%c0_4, %c0_5] : memref<1x128xf32, #tpu.memory_space<vmem>>, vector<1x128xf32>
    %7 = vector.broadcast %6 : vector<1x128xf32> to vector<256x128xf32>
    %8 = arith.addf %5, %7 : vector<256x128xf32>
    %cst = arith.constant 0.000000e+00 : f32
    %9 = vector.broadcast %cst : f32 to vector<256x128xf32>
    %10 = arith.subf %9, %8 : vector<256x128xf32>
    %11 = math.exp %10 : vector<256x128xf32>
    %cst_6 = arith.constant 1.000000e+00 : f32
    %12 = vector.broadcast %cst_6 : f32 to vector<256x128xf32>
    %13 = arith.addf %12, %11 : vector<256x128xf32>
    %14 = tpu.reciprocal %13 {approx = true} : vector<256x128xf32> -> vector<256x128xf32>
    %15 = arith.mulf %8, %14 : vector<256x128xf32>
    %16 = arith.truncf %15 : vector<256x128xf32> to vector<256x128xbf16>
    %c0_7 = arith.constant 0 : index
    %c0_8 = arith.constant 0 : index
    %c0_9 = arith.constant 0 : index
    %17 = vector.load %arg6[%c0_7, %c0_8, %c0_9] : memref<1x256x128xbf16, #tpu.memory_space<vmem>>, vector<1x256x128xbf16>
    %18 = vector.shape_cast %17 : vector<1x256x128xbf16> to vector<256x128xbf16>
    %19 = vector.shape_cast %16 : vector<256x128xbf16> to vector<1x256x128xbf16>
    tpu.vector_store %arg6[%c0_7, %c0_8, %c0_9], %19 {strides = array<i32>} : memref<1x256x128xbf16, #tpu.memory_space<vmem>>, vector<1x256x128xbf16>,
    return
  }
  func.func @transform_0(%arg0: i32, %arg1: i32, %arg2: i32) -> (i32, i32, i32) {
    %c0_i32 = arith.constant 0 : i32
    return %arg0, %arg1, %arg2 : i32, i32, i32
  }
  func.func @transform_1(%arg0: i32, %arg1: i32, %arg2: i32) -> (i32, i32) {
    %c0_i32 = arith.constant 0 : i32
    %c0_i32_0 = arith.constant 0 : i32
    return %c0_i32, %arg2 : i32, i32
  }
  func.func @transform_2(%arg0: i32, %arg1: i32, %arg2: i32) -> (i32, i32) {
    %c0_i32 = arith.constant 0 : i32
    %c0_i32_0 = arith.constant 0 : i32
    return %c0_i32, %arg2 : i32, i32
  }
  func.func @transform_3(%arg0: i32, %arg1: i32, %arg2: i32) -> (i32, i32, i32) {
    %c0_i32 = arith.constant 0 : i32
    return %arg0, %arg1, %arg2 : i32, i32, i32
  }
}

</mosaic_0001>

<llo_original>
// kernel: _conv_bn_silu_impl.3
$region0: #{_conv_bn_silu_impl.3}
  #allocation0 [shape = 'u32[]', space=smem, size = 0x4, offset = 0x4, fixed_abs, tag = 'smem constant byte address 0x4 - core index']
  #allocation1 [shape = 'u32[72,128]{1,0:T(1,128)}', space=vmem, size = 0x9000, scoped, tag = 'internal scratch']
  %s0 = inlined_call_operand.vmem [shape: bf16[2,256,128], index: 0, kind: input, shape index: {}]
  %s1 = inlined_call_operand.vmem [shape: f32[1,128], index: 1, kind: input, shape index: {}]
  %s2 = inlined_call_operand.vmem [shape: f32[1,128], index: 2, kind: input, shape index: {}]
  %s3 = inlined_call_operand.vmem [shape: bf16[2,256,128], index: 3, kind: output, shape index: {}]
  %s4 = sld [smem:[#allocation0]]
  $region45: #{_conv_bn_silu_impl.3} parent=0
    _
  %s6 = ssub.s32 1, %s4
  %s7 = scalar_select 0, %s6, %s4
  loop: start=0, step=1, limit=4
  $region2: #{_conv_bn_silu_impl.3} parent=0 // loop_pre_header
    _
  $region3: #{_conv_bn_silu_impl.3} parent=0 // loop_header
    %s9 = sphi 0, %s13
    %p10 = scmp.ge.s32.totalorder %s9, 4
    %s16 = sphi 0, %s35
    %s17 = sphi 0, %s31
    %s18 = sphi 0, %s27
    %s19 = sphi 0, %s16
    %s20 = sphi 0, %s17
    %s21 = sphi 0, %s18
    %s22 = sphi 0, %s19
    %s23 = sphi 0, %s20
    %s24 = sphi 0, %s21
    %s42 = sphi 0, %s44
    %s45 = sphi 0, %s42
    %s46 = sphi 0, %s45
    %s62 = sphi 0, %s46
    %s68 = sphi 0, %s70
    %s71 = sphi 0, %s68
    %s72 = sphi 0, %s71
    %s88 = sphi 0, %s72
    %s94 = sphi 0, %s96
    %s97 = sphi 0, %s94
    %s98 = sphi 0, %s97
    %s114 = sphi 0, %s98
    %s124 = sphi 0, %s126
    %s127 = sphi 0, %s124
    %s128 = sphi 0, %s127
    %s144 = sphi 0, %s128
  $region4: #{_conv_bn_silu_impl.3} parent=0 // loop_header_branch
    %12 = sbr.rel (%p10) target = $region8
  $region5: #{_conv_bn_silu_impl.3} parent=0 // loop_body
    %s14 = ssub.s32 %s9, 1
    %s15 = ssub.s32 %s9, 2
    %s25 = sadd.s32 1, %s18
    %p26 = scmp.ge.s32.totalorder %s25, 1
    %s27 = scalar_select %p26, 0, %s25
    %s28 = sadd.s32 1, %s17
    %s29 = scalar_select %p26, %s28, %s17
    %p30 = scmp.ge.s32.totalorder %s29, 1
    %s31 = scalar_select %p30, 0, %s29
    %s32 = sadd.s32 1, %s16
    %s33 = scalar_select %p30, %s32, %s16
    %p34 = scmp.ge.s32.totalorder %s33, 2
    %s35 = scalar_select %p34, 0, %s33
    %s36 = ssub.s32 %s16, %s35
    %s37 = ssub.s32 %s17, %s31
    %s38 = sor.u32 %s36, %s37
    %s39 = ssub.s32 %s18, %s27
    %s40 = sor.u32 %s38, %s39
    %p41 = scmp.eq.s32.totalorder %s40, 0
    %s43 = sadd.s32 %s42, 1
    %s44 = scalar_select %p41, %s42, %s43
    %p47 = pneg %p41
    %p48 = scmp.eq.s32.totalorder %s9, 1
    %p49 = por %p47, %p48
    %p50 = scmp.ne.s32.totalorder %s42, %s45
    %p51 = scmp.eq.s32.totalorder %s9, 0
    %p52 = por %p50, %p51
    %p53 = scmp.ne.s32.totalorder %s42, %s45
    %p54 = scmp.eq.s32.totalorder %s14, 1
    %p55 = por %p53, %p54
    %p56 = scmp.ne.s32.totalorder %s45, %s46
    %p57 = scmp.eq.s32.totalorder %s14, 0
    %p58 = por %p56, %p57
    %p59 = scmp.ne.s32.totalorder %s45, %s46
    %p60 = scmp.eq.s32.totalorder %s15, 1
    %p61 = por %p59, %p60
    %p63 = scmp.ne.s32.totalorder %s46, %s62
    %p64 = scmp.eq.s32.totalorder %s15, 0
    %p65 = por %p63, %p64
    %s66 = ssub.s32 %s18, %s27
    %p67 = scmp.eq.s32.totalorder %s66, 0
    %s69 = sadd.s32 %s68, 1
    %s70 = scalar_select %p67, %s68, %s69
    %p73 = pneg %p67
    %p74 = scmp.eq.s32.totalorder %s9, 1
    %p75 = por %p73, %p74
    %p76 = scmp.ne.s32.totalorder %s68, %s71
    %p77 = scmp.eq.s32.totalorder %s9, 0
    %p78 = por %p76, %p77
    %p79 = scmp.ne.s32.totalorder %s68, %s71
    %p80 = scmp.eq.s32.totalorder %s14, 1
    %p81 = por %p79, %p80
    %p82 = scmp.ne.s32.totalorder %s71, %s72
    %p83 = scmp.eq.s32.totalorder %s14, 0
    %p84 = por %p82, %p83
    %p85 = scmp.ne.s32.totalorder %s71, %s72
    %p86 = scmp.eq.s32.totalorder %s15, 1
    %p87 = por %p85, %p86
    %p89 = scmp.ne.s32.totalorder %s72, %s88
    %p90 = scmp.eq.s32.totalorder %s15, 0
    %p91 = por %p89, %p90
    %s92 = ssub.s32 %s18, %s27
    %p93 = scmp.eq.s32.totalorder %s92, 0
    %s95 = sadd.s32 %s94, 1
    %s96 = scalar_select %p93, %s94, %s95
    %p99 = pneg %p93
    %p100 = scmp.eq.s32.totalorder %s9, 1
    %p101 = por %p99, %p100
    %p102 = scmp.ne.s32.totalorder %s94, %s97
    %p103 = scmp.eq.s32.totalorder %s9, 0
    %p104 = por %p102, %p103
    %p105 = scmp.ne.s32.totalorder %s94, %s97
    %p106 = scmp.eq.s32.totalorder %s14, 1
    %p107 = por %p105, %p106
    %p108 = scmp.ne.s32.totalorder %s97, %s98
    %p109 = scmp.eq.s32.totalorder %s14, 0
    %p110 = por %p108, %p109
    %p111 = scmp.ne.s32.totalorder %s97, %s98
    %p112 = scmp.eq.s32.totalorder %s15, 1
    %p113 = por %p111, %p112
    %p115 = scmp.ne.s32.totalorder %s98, %s114
    %p116 = scmp.eq.s32.totalorder %s15, 0
    %p117 = por %p115, %p116
    %s118 = ssub.s32 %s16, %s35
    %s119 = ssub.s32 %s17, %s31
    %s120 = sor.u32 %s118, %s119
    %s121 = ssub.s32 %s18, %s27
    %s122 = sor.u32 %s120, %s121
    %p123 = scmp.eq.s32.totalorder %s122, 0
    %s125 = sadd.s32 %s124, 1
    %s126 = scalar_select %p123, %s124, %s125
    %p129 = pneg %p123
    %p130 = scmp.eq.s32.totalorder %s9, 1
    %p131 = por %p129, %p130
    %p132 = scmp.ne.s32.totalorder %s124, %s127
    %p133 = scmp.eq.s32.totalorder %s9, 0
    %p134 = por %p132, %p133
    %p135 = scmp.ne.s32.totalorder %s124, %s127
    %p136 = scmp.eq.s32.totalorder %s14, 1
    %p137 = por %p135, %p136
    %p138 = scmp.ne.s32.totalorder %s127, %s128
    %p139 = scmp.eq.s32.totalorder %s14, 0
    %p140 = por %p138, %p139
    %p141 = scmp.ne.s32.totalorder %s127, %s128
    %p142 = scmp.eq.s32.totalorder %s15, 1
    %p143 = por %p141, %p142
    %p145 = scmp.ne.s32.totalorder %s128, %s144
    %p146 = scmp.eq.s32.totalorder %s15, 0
    %p147 = por %p145, %p146
    %p148 = scmp.le.s32.totalorder 1, %s9
    %p149 = scmp.lt.s32.totalorder %s9, 3
    %p150 = pnand %p148, %p149
    %p151 = pneg %p150
    // Predicated region
    $region9: #{_conv_bn_silu_impl.3} parent=5 // pred_check
      _
    $region10: #{_conv_bn_silu_impl.3} parent=5 // pred_check_branch
      %153 = sbr.rel (%p150) target = $region12
    $region11: #{_conv_bn_silu_impl.3} parent=5 // pred_region
      %s154 = ssub.s32 %s9, 1
      // Predicated region
      $region13: #{_conv_bn_silu_impl.3} parent=11 // pred_check
        %p155 = pneg %p84
      $region14: #{_conv_bn_silu_impl.3} parent=11 // pred_check_branch
        %157 = sbr.rel (%p155) target = $region16
      $region15: #{_conv_bn_silu_impl.3} parent=11 // pred_region
        %p158 = scmp.lt.s32.totalorder %s21, 0
        %s159 = scalar_select %p158, %s21, 0
        %s160 = scalar_lea.vmem %s1, %s159
      $region16: #{_conv_bn_silu_impl.3} parent=11 // pred_fallthru
        _
      // Predicated region
      $region17: #{_conv_bn_silu_impl.3} parent=11 // pred_check
        %p161 = pneg %p110
      $region18: #{_conv_bn_silu_impl.3} parent=11 // pred_check_branch
        %163 = sbr.rel (%p161) target = $region20
      $region19: #{_conv_bn_silu_impl.3} parent=11 // pred_region
        %p164 = scmp.lt.s32.totalorder %s21, 0
        %s165 = scalar_select %p164, %s21, 0
        %s166 = scalar_lea.vmem %s2, %s165
      $region20: #{_conv_bn_silu_impl.3} parent=11 // pred_fallthru
        _
    $region12: #{_conv_bn_silu_impl.3} parent=5 // pred_fallthru
      _
    %p167 = scmp.lt.s32.totalorder %s9, 2
    // Predicated region
    $region21: #{_conv_bn_silu_impl.3} parent=5 // pred_check
      %p168 = pneg %p167
    $region22: #{_conv_bn_silu_impl.3} parent=5 // pred_check_branch
      %170 = sbr.rel (%p168) target = $region24
    $region23: #{_conv_bn_silu_impl.3} parent=5 // pred_region
      // Predicated region
      $region25: #{_conv_bn_silu_impl.3} parent=23 // pred_check
        %p171 = pneg %p52
      $region26: #{_conv_bn_silu_impl.3} parent=23 // pred_check_branch
        %173 = sbr.rel (%p171) target = $region28
      $region27: #{_conv_bn_silu_impl.3} parent=23 // pred_region
        %s174 = smul.u32 32, %s17
        %p175 = scmp.lt.s32.totalorder %s16, 1
        %s176 = scalar_select %p175, %s16, 1
        %p177 = scmp.lt.s32.totalorder %s174, 31
        %s178 = scalar_select %p177, %s174, 31
        %p179 = scmp.lt.s32.totalorder %s18, 0
        %s180 = scalar_select %p179, %s18, 0
        %s181 = sadd.s32 %s180, %s178
        %s182 = smul.addr %s176, 32
        %s183 = sadd.s32 %s181, %s182
        %s184 = smul.addr %s183, 4
        %s185 = scalar_lea.vmem %s0, %s184
        %s186 = smul.u32 32, %s17
      $region28: #{_conv_bn_silu_impl.3} parent=23 // pred_fallthru
        _
    $region24: #{_conv_bn_silu_impl.3} parent=5 // pred_fallthru
      _
    %p187 = scmp.le.s32.totalorder 1, %s9
    %p188 = scmp.lt.s32.totalorder %s9, 3
    %p189 = pnand %p187, %p188
    %p190 = pneg %p189
    // Predicated region
    $region29: #{_conv_bn_silu_impl.3} parent=5 // pred_check
      _
    $region30: #{_conv_bn_silu_impl.3} parent=5 // pred_check_branch
      %192 = sbr.rel (%p189) target = $region32
    $region31: #{_conv_bn_silu_impl.3} parent=5 // pred_region
      %s193 = ssub.s32 %s9, 1
      %s194 = smul.u32 32, %s20
      %p195 = scmp.lt.s32.totalorder %s19, 1
      %s196 = scalar_select %p195, %s19, 1
      %p197 = scmp.lt.s32.totalorder %s194, 31
      %s198 = scalar_select %p197, %s194, 31
      %p199 = scmp.lt.s32.totalorder %s21, 0
      %s200 = scalar_select %p199, %s21, 0
      %s201 = sadd.s32 %s200, %s198
      %s202 = smul.addr %s196, 32
      %s203 = sadd.s32 %s201, %s202
      %s204 = smul.addr %s203, 4
      %s205 = scalar_lea.vmem %s0, %s204
      %p206 = pneg %p58
      %p207 = pneg %p55
      %p208 = scmp.lt.s32.totalorder %s21, 0
      %s209 = scalar_select %p208, %s21, 0
      %s210 = scalar_lea.vmem %s1, %s209
      %p211 = pneg %p84
      %p212 = pneg %p81
      %p213 = scmp.lt.s32.totalorder %s21, 0
      %s214 = scalar_select %p213, %s21, 0
      %s215 = scalar_lea.vmem %s2, %s214
      %p216 = pneg %p110
      %p217 = pneg %p107
      %p218 = pneg %p140
      %p219 = pneg %p137
      %s220 = smul.u32 32, %s20
      %p221 = scmp.lt.s32.totalorder %s19, 1
      %s222 = scalar_select %p221, %s19, 1
      %p223 = scmp.lt.s32.totalorder %s220, 31
      %s224 = scalar_select %p223, %s220, 31
      %p225 = scmp.lt.s32.totalorder %s21, 0
      %s226 = scalar_select %p225, %s21, 0
      %s227 = sadd.s32 %s226, %s224
      %s228 = smul.addr %s222, 32
      %s229 = sadd.s32 %s227, %s228
      %s230 = smul.addr %s229, 4
      %s231 = scalar_lea.vmem %s3, %s230
      %s232 = smul.u32 32, %s20
      %p233 = scmp.lt.s32.totalorder %s19, 1
      %s234 = scalar_select %p233, %s19, 1
      %p235 = scmp.lt.s32.totalorder %s232, 31
      %s236 = scalar_select %p235, %s232, 31
      %p237 = scmp.lt.s32.totalorder %s21, 0
      %s238 = scalar_select %p237, %s21, 0
      %s239 = sadd.s32 %s238, %s236
      %s240 = smul.addr %s234, 32
      %s241 = sadd.s32 %s239, %s240
      %s242 = smul.addr %s241, 4
      %s243 = scalar_lea.vmem %s0, %s242
      %s244 = smul.u32 32, %s20
      %p245 = scmp.lt.s32.totalorder %s21, 0
      %s246 = scalar_select %p245, %s21, 0
      %s247 = scalar_lea.vmem %s1, %s246
      %p248 = scmp.lt.s32.totalorder %s21, 0
      %s249 = scalar_select %p248, %s21, 0
      %s250 = scalar_lea.vmem %s2, %s249
      %s251 = smul.u32 32, %s20
      %p252 = scmp.lt.s32.totalorder %s19, 1
      %s253 = scalar_select %p252, %s19, 1
      %p254 = scmp.lt.s32.totalorder %s251, 31
      %s255 = scalar_select %p254, %s251, 31
      %p256 = scmp.lt.s32.totalorder %s21, 0
      %s257 = scalar_select %p256, %s21, 0
      %s258 = sadd.s32 %s257, %s255
      %s259 = smul.addr %s253, 32
      %s260 = sadd.s32 %s258, %s259
      %s261 = smul.addr %s260, 4
      %s262 = scalar_lea.vmem %s3, %s261
      %s263 = smul.u32 32, %s20
      %v264 = vld [vmem:[%s243] sm:$0xf]
      %v265 = vld [vmem:[%s243 + $0x4] sm:$0xf]
      %v266 = vld [vmem:[%s243 + $0x8] sm:$0xf]
      %v267 = vld [vmem:[%s243 + $0xc] sm:$0xf]
      %v268 = vld [vmem:[%s243 + $0x10] sm:$0xf]
      %v269 = vld [vmem:[%s243 + $0x14] sm:$0xf]
      %v270 = vld [vmem:[%s243 + $0x18] sm:$0xf]
      %v271 = vld [vmem:[%s243 + $0x1c] sm:$0xf]
      %v272 = vld [vmem:[%s243 + $0x20] sm:$0xf]
      %v273 = vld [vmem:[%s243 + $0x24] sm:$0xf]
      %v274 = vld [vmem:[%s243 + $0x28] sm:$0xf]
      %v275 = vld [vmem:[%s243 + $0x2c] sm:$0xf]
      %v276 = vld [vmem:[%s243 + $0x30] sm:$0xf]
      %v277 = vld [vmem:[%s243 + $0x34] sm:$0xf]
      %v278 = vld [vmem:[%s243 + $0x38] sm:$0xf]
      %v279 = vld [vmem:[%s243 + $0x3c] sm:$0xf]
      %v280 = vld [vmem:[%s243 + $0x40] sm:$0xf]
      %v281 = vld [vmem:[%s243 + $0x44] sm:$0xf]
      %v282 = vld [vmem:[%s243 + $0x48] sm:$0xf]
      %v283 = vld [vmem:[%s243 + $0x4c] sm:$0xf]
      %v284 = vld [vmem:[%s243 + $0x50] sm:$0xf]
      %v285 = vld [vmem:[%s243 + $0x54] sm:$0xf]
      %v286 = vld [vmem:[%s243 + $0x58] sm:$0xf]
      %v287 = vld [vmem:[%s243 + $0x5c] sm:$0xf]
      %v288 = vld [vmem:[%s243 + $0x60] sm:$0xf]
      %v289 = vld [vmem:[%s243 + $0x64] sm:$0xf]
      %v290 = vld [vmem:[%s243 + $0x68] sm:$0xf]
      %v291 = vld [vmem:[%s243 + $0x6c] sm:$0xf]
      %v292 = vld [vmem:[%s243 + $0x70] sm:$0xf]
      %v293 = vld [vmem:[%s243 + $0x74] sm:$0xf]
      %v294 = vld [vmem:[%s243 + $0x78] sm:$0xf]
      %v295 = vld [vmem:[%s243 + $0x7c] sm:$0xf]
      %v296 = vunpack.c.l.bf16 %v264
      %v297 = vunpack.c.l.bf16 %v265
      %v298 = vunpack.c.l.bf16 %v266
      %v299 = vunpack.c.l.bf16 %v267
      %v300 = vunpack.c.l.bf16 %v268
      %v301 = vunpack.c.l.bf16 %v269
      %v302 = vunpack.c.l.bf16 %v270
      %v303 = vunpack.c.l.bf16 %v271
      %v304 = vunpack.c.l.bf16 %v272
      %v305 = vunpack.c.l.bf16 %v273
      %v306 = vunpack.c.l.bf16 %v274
      %v307 = vunpack.c.l.bf16 %v275
      %v308 = vunpack.c.l.bf16 %v276
      %v309 = vunpack.c.l.bf16 %v277
      %v310 = vunpack.c.l.bf16 %v278
      %v311 = vunpack.c.l.bf16 %v279
      %v312 = vunpack.c.l.bf16 %v280
      %v313 = vunpack.c.l.bf16 %v281
      %v314 = vunpack.c.l.bf16 %v282
      %v315 = vunpack.c.l.bf16 %v283
      %v316 = vunpack.c.l.bf16 %v284
      %v317 = vunpack.c.l.bf16 %v285
      %v318 = vunpack.c.l.bf16 %v286
      %v319 = vunpack.c.l.bf16 %v287
      %v320 = vunpack.c.l.bf16 %v288
      %v321 = vunpack.c.l.bf16 %v289
      %v322 = vunpack.c.l.bf16 %v290
      %v323 = vunpack.c.l.bf16 %v291
      %v324 = vunpack.c.l.bf16 %v292
      %v325 = vunpack.c.l.bf16 %v293
      %v326 = vunpack.c.l.bf16 %v294
      %v327 = vunpack.c.l.bf16 %v295
      %v328 = vld [vmem:[%s247] sm:$0x1]
      %v330 = vperm.slane %v328, 0
      %v332 = vmul.f32 %v296, %v330
      %v333 = vmul.f32 %v297, %v330
      %v334 = vmul.f32 %v298, %v330
      %v335 = vmul.f32 %v299, %v330
      %v336 = vmul.f32 %v300, %v330
      %v337 = vmul.f32 %v301, %v330
      %v338 = vmul.f32 %v302, %v330
      %v339 = vmul.f32 %v303, %v330
      %v340 = vmul.f32 %v304, %v330
      %v341 = vmul.f32 %v305, %v330
      %v342 = vmul.f32 %v306, %v330
      %v343 = vmul.f32 %v307, %v330
      %v344 = vmul.f32 %v308, %v330
      %v345 = vmul.f32 %v309, %v330
      %v346 = vmul.f32 %v310, %v330
      %v347 = vmul.f32 %v311, %v330
      %v348 = vmul.f32 %v312, %v330
      %v349 = vmul.f32 %v313, %v330
      %v350 = vmul.f32 %v314, %v330
      %v351 = vmul.f32 %v315, %v330
      %v352 = vmul.f32 %v316, %v330
      %v353 = vmul.f32 %v317, %v330
      %v354 = vmul.f32 %v318, %v330
      %v355 = vmul.f32 %v319, %v330
      %v356 = vmul.f32 %v320, %v330
      %v357 = vmul.f32 %v321, %v330
      %v358 = vmul.f32 %v322, %v330
      %v359 = vmul.f32 %v323, %v330
      %v360 = vmul.f32 %v324, %v330
      %v361 = vmul.f32 %v325, %v330
      %v362 = vmul.f32 %v326, %v330
      %v363 = vmul.f32 %v327, %v330
      %v364 = vld [vmem:[%s250] sm:$0x1]
      %v366 = vperm.slane %v364, 0
      %v368 = vadd.f32 %v332, %v366
      %v369 = vadd.f32 %v333, %v366
      %v370 = vadd.f32 %v334, %v366
      %v371 = vadd.f32 %v335, %v366
      %v372 = vadd.f32 %v336, %v366
      %v373 = vadd.f32 %v337, %v366
      %v374 = vadd.f32 %v338, %v366
      %v375 = vadd.f32 %v339, %v366
      %v376 = vadd.f32 %v340, %v366
      %v377 = vadd.f32 %v341, %v366
      %v378 = vadd.f32 %v342, %v366
      %v379 = vadd.f32 %v343, %v366
      %v380 = vadd.f32 %v344, %v366
      %v381 = vadd.f32 %v345, %v366
      %v382 = vadd.f32 %v346, %v366
      %v383 = vadd.f32 %v347, %v366
      %v384 = vadd.f32 %v348, %v366
      %v385 = vadd.f32 %v349, %v366
      %v386 = vadd.f32 %v350, %v366
      %v387 = vadd.f32 %v351, %v366
      %v388 = vadd.f32 %v352, %v366
      %v389 = vadd.f32 %v353, %v366
      %v390 = vadd.f32 %v354, %v366
      %v391 = vadd.f32 %v355, %v366
      %v392 = vadd.f32 %v356, %v366
      %v393 = vadd.f32 %v357, %v366
      %v394 = vadd.f32 %v358, %v366
      %v395 = vadd.f32 %v359, %v366
      %v396 = vadd.f32 %v360, %v366
      %v397 = vadd.f32 %v361, %v366
      %v398 = vadd.f32 %v362, %v366
      %v399 = vadd.f32 %v363, %v366
      %v400 = vsub.f32 0.0, %v368
      %v401 = vsub.f32 0.0, %v369
      %v402 = vsub.f32 0.0, %v370
      %v403 = vsub.f32 0.0, %v371
      %v404 = vsub.f32 0.0, %v372
      %v405 = vsub.f32 0.0, %v373
      %v406 = vsub.f32 0.0, %v374
      %v407 = vsub.f32 0.0, %v375
      %v408 = vsub.f32 0.0, %v376
      %v409 = vsub.f32 0.0, %v377
      %v410 = vsub.f32 0.0, %v378
      %v411 = vsub.f32 0.0, %v379
      %v412 = vsub.f32 0.0, %v380
      %v413 = vsub.f32 0.0, %v381
      %v414 = vsub.f32 0.0, %v382
      %v415 = vsub.f32 0.0, %v383
      %v416 = vsub.f32 0.0, %v384
      %v417 = vsub.f32 0.0, %v385
      %v418 = vsub.f32 0.0, %v386
      %v419 = vsub.f32 0.0, %v387
      %v420 = vsub.f32 0.0, %v388
      %v421 = vsub.f32 0.0, %v389
      %v422 = vsub.f32 0.0, %v390
      %v423 = vsub.f32 0.0, %v391
      %v424 = vsub.f32 0.0, %v392
      %v425 = vsub.f32 0.0, %v393
      %v426 = vsub.f32 0.0, %v394
      %v427 = vsub.f32 0.0, %v395
      %v428 = vsub.f32 0.0, %v396
      %v429 = vsub.f32 0.0, %v397
      %v430 = vsub.f32 0.0, %v398
      %v431 = vsub.f32 0.0, %v399
      %v432 = vmul.f32 %v400, 1.442695
      %v433 = vpow.pop %v432
      %v434 = vmul.f32 %v401, 1.442695
      %v435 = vpow.pop %v434
      %v436 = vmul.f32 %v402, 1.442695
      %v437 = vpow.pop %v436
      %v438 = vmul.f32 %v403, 1.442695
      %v439 = vpow.pop %v438
      %v440 = vmul.f32 %v404, 1.442695
      %v441 = vpow.pop %v440
      %v442 = vmul.f32 %v405, 1.442695
      %v443 = vpow.pop %v442
      %v444 = vmul.f32 %v406, 1.442695
      %v445 = vpow.pop %v444
      %v446 = vmul.f32 %v407, 1.442695
      %v447 = vpow.pop %v446
      %v448 = vmul.f32 %v408, 1.442695
      %v449 = vpow.pop %v448
      %v450 = vmul.f32 %v409, 1.442695
      %v451 = vpow.pop %v450
      %v452 = vmul.f32 %v410, 1.442695
      %v453 = vpow.pop %v452
      %v454 = vmul.f32 %v411, 1.442695
      %v455 = vpow.pop %v454
      %v456 = vmul.f32 %v412, 1.442695
      %v457 = vpow.pop %v456
      %v458 = vmul.f32 %v413, 1.442695
      %v459 = vpow.pop %v458
      %v460 = vmul.f32 %v414, 1.442695
      %v461 = vpow.pop %v460
      %v462 = vmul.f32 %v415, 1.442695
      %v463 = vpow.pop %v462
      %v464 = vmul.f32 %v416, 1.442695
      %v465 = vpow.pop %v464
      %v466 = vmul.f32 %v417, 1.442695
      %v467 = vpow.pop %v466
      %v468 = vmul.f32 %v418, 1.442695
      %v469 = vpow.pop %v468
      %v470 = vmul.f32 %v419, 1.442695
      %v471 = vpow.pop %v470
      %v472 = vmul.f32 %v420, 1.442695
      %v473 = vpow.pop %v472
      %v474 = vmul.f32 %v421, 1.442695
      %v475 = vpow.pop %v474
      %v476 = vmul.f32 %v422, 1.442695
      %v477 = vpow.pop %v476
      %v478 = vmul.f32 %v423, 1.442695
      %v479 = vpow.pop %v478
      %v480 = vmul.f32 %v424, 1.442695
      %v481 = vpow.pop %v480
      %v482 = vmul.f32 %v425, 1.442695
      %v483 = vpow.pop %v482
      %v484 = vmul.f32 %v426, 1.442695
      %v485 = vpow.pop %v484
      %v486 = vmul.f32 %v427, 1.442695
      %v487 = vpow.pop %v486
      %v488 = vmul.f32 %v428, 1.442695
      %v489 = vpow.pop %v488
      %v490 = vmul.f32 %v429, 1.442695
      %v491 = vpow.pop %v490
      %v492 = vmul.f32 %v430, 1.442695
      %v493 = vpow.pop %v492
      %v494 = vmul.f32 %v431, 1.442695
      %v495 = vpow.pop %v494
      %v496 = vadd.f32 %v433, 1.0
      %v497 = vadd.f32 %v435, 1.0
      %v498 = vadd.f32 %v437, 1.0
      %v499 = vadd.f32 %v439, 1.0
      %v500 = vadd.f32 %v441, 1.0
      %v501 = vadd.f32 %v443, 1.0
      %v502 = vadd.f32 %v445, 1.0
      %v503 = vadd.f32 %v447, 1.0
      %v504 = vadd.f32 %v449, 1.0
      %v505 = vadd.f32 %v451, 1.0
      %v506 = vadd.f32 %v453, 1.0
      %v507 = vadd.f32 %v455, 1.0
      %v508 = vadd.f32 %v457, 1.0
      %v509 = vadd.f32 %v459, 1.0
      %v510 = vadd.f32 %v461, 1.0
      %v511 = vadd.f32 %v463, 1.0
      %v512 = vadd.f32 %v465, 1.0
      %v513 = vadd.f32 %v467, 1.0
      %v514 = vadd.f32 %v469, 1.0
      %v515 = vadd.f32 %v471, 1.0
      %v516 = vadd.f32 %v473, 1.0
      %v517 = vadd.f32 %v475, 1.0
      %v518 = vadd.f32 %v477, 1.0
      %v519 = vadd.f32 %v479, 1.0
      %v520 = vadd.f32 %v481, 1.0
      %v521 = vadd.f32 %v483, 1.0
      %v522 = vadd.f32 %v485, 1.0
      %v523 = vadd.f32 %v487, 1.0
      %v524 = vadd.f32 %v489, 1.0
      %v525 = vadd.f32 %v491, 1.0
      %v526 = vadd.f32 %v493, 1.0
      %v527 = vadd.f32 %v495, 1.0
      %v528 = vrcp.pop %v496
      %v529 = vrcp.pop %v497
      %v530 = vrcp.pop %v498
      %v531 = vrcp.pop %v499
      %v532 = vrcp.pop %v500
      %v533 = vrcp.pop %v501
      %v534 = vrcp.pop %v502
      %v535 = vrcp.pop %v503
      %v536 = vrcp.pop %v504
      %v537 = vrcp.pop %v505
      %v538 = vrcp.pop %v506
      %v539 = vrcp.pop %v507
      %v540 = vrcp.pop %v508
      %v541 = vrcp.pop %v509
      %v542 = vrcp.pop %v510
      %v543 = vrcp.pop %v511
      %v544 = vrcp.pop %v512
      %v545 = vrcp.pop %v513
      %v546 = vrcp.pop %v514
      %v547 = vrcp.pop %v515
      %v548 = vrcp.pop %v516
      %v549 = vrcp.pop %v517
      %v550 = vrcp.pop %v518
      %v551 = vrcp.pop %v519
      %v552 = vrcp.pop %v520
      %v553 = vrcp.pop %v521
      %v554 = vrcp.pop %v522
      %v555 = vrcp.pop %v523
      %v556 = vrcp.pop %v524
      %v557 = vrcp.pop %v525
      %v558 = vrcp.pop %v526
      %v559 = vrcp.pop %v527
      %v560 = vmul.f32 %v368, %v528
      %v561 = vmul.f32 %v369, %v529
      %v562 = vmul.f32 %v370, %v530
      %v563 = vmul.f32 %v371, %v531
      %v564 = vmul.f32 %v372, %v532
      %v565 = vmul.f32 %v373, %v533
      %v566 = vmul.f32 %v374, %v534
      %v567 = vmul.f32 %v375, %v535
      %v568 = vmul.f32 %v376, %v536
      %v569 = vmul.f32 %v377, %v537
      %v570 = vmul.f32 %v378, %v538
      %v571 = vmul.f32 %v379, %v539
      %v572 = vmul.f32 %v380, %v540
      %v573 = vmul.f32 %v381, %v541
      %v574 = vmul.f32 %v382, %v542
      %v575 = vmul.f32 %v383, %v543
      %v576 = vmul.f32 %v384, %v544
      %v577 = vmul.f32 %v385, %v545
      %v578 = vmul.f32 %v386, %v546
      %v579 = vmul.f32 %v387, %v547
      %v580 = vmul.f32 %v388, %v548
      %v581 = vmul.f32 %v389, %v549
      %v582 = vmul.f32 %v390, %v550
      %v583 = vmul.f32 %v391, %v551
      %v584 = vmul.f32 %v392, %v552
      %v585 = vmul.f32 %v393, %v553
      %v586 = vmul.f32 %v394, %v554
      %v587 = vmul.f32 %v395, %v555
      %v588 = vmul.f32 %v396, %v556
      %v589 = vmul.f32 %v397, %v557
      %v590 = vmul.f32 %v398, %v558
      %v591 = vmul.f32 %v399, %v559
      %v592 = vpack.c.bf16 %v560, %v560
      %v593 = vpack.c.bf16 %v561, %v561
      %v594 = vpack.c.bf16 %v562, %v562
      %v595 = vpack.c.bf16 %v563, %v563
      %v596 = vpack.c.bf16 %v564, %v564
      %v597 = vpack.c.bf16 %v565, %v565
      %v598 = vpack.c.bf16 %v566, %v566
      %v599 = vpack.c.bf16 %v567, %v567
      %v600 = vpack.c.bf16 %v568, %v568
      %v601 = vpack.c.bf16 %v569, %v569
      %v602 = vpack.c.bf16 %v570, %v570
      %v603 = vpack.c.bf16 %v571, %v571
      %v604 = vpack.c.bf16 %v572, %v572
      %v605 = vpack.c.bf16 %v573, %v573
      %v606 = vpack.c.bf16 %v574, %v574
      %v607 = vpack.c.bf16 %v575, %v575
      %v608 = vpack.c.bf16 %v576, %v576
      %v609 = vpack.c.bf16 %v577, %v577
      %v610 = vpack.c.bf16 %v578, %v578
      %v611 = vpack.c.bf16 %v579, %v579
      %v612 = vpack.c.bf16 %v580, %v580
      %v613 = vpack.c.bf16 %v581, %v581
      %v614 = vpack.c.bf16 %v582, %v582
      %v615 = vpack.c.bf16 %v583, %v583
      %v616 = vpack.c.bf16 %v584, %v584
      %v617 = vpack.c.bf16 %v585, %v585
      %v618 = vpack.c.bf16 %v586, %v586
      %v619 = vpack.c.bf16 %v587, %v587
      %v620 = vpack.c.bf16 %v588, %v588
      %v621 = vpack.c.bf16 %v589, %v589
      %v622 = vpack.c.bf16 %v590, %v590
      %v623 = vpack.c.bf16 %v591, %v591
      %624 = vst [vmem:[%s262] sm:$0xf] %v592
      %625 = vst [vmem:[%s262 + $0x4] sm:$0xf] %v593
      %626 = vst [vmem:[%s262 + $0x8] sm:$0xf] %v594
      %627 = vst [vmem:[%s262 + $0xc] sm:$0xf] %v595
      %628 = vst [vmem:[%s262 + $0x10] sm:$0xf] %v596
      %629 = vst [vmem:[%s262 + $0x14] sm:$0xf] %v597
      %630 = vst [vmem:[%s262 + $0x18] sm:$0xf] %v598
      %631 = vst [vmem:[%s262 + $0x1c] sm:$0xf] %v599
      %632 = vst [vmem:[%s262 + $0x20] sm:$0xf] %v600
      %633 = vst [vmem:[%s262 + $0x24] sm:$0xf] %v601
      %634 = vst [vmem:[%s262 + $0x28] sm:$0xf] %v602
      %635 = vst [vmem:[%s262 + $0x2c] sm:$0xf] %v603
      %636 = vst [vmem:[%s262 + $0x30] sm:$0xf] %v604
      %637 = vst [vmem:[%s262 + $0x34] sm:$0xf] %v605
      %638 = vst [vmem:[%s262 + $0x38] sm:$0xf] %v606
      %639 = vst [vmem:[%s262 + $0x3c] sm:$0xf] %v607
      %640 = vst [vmem:[%s262 + $0x40] sm:$0xf] %v608
      %641 = vst [vmem:[%s262 + $0x44] sm:$0xf] %v609
      %642 = vst [vmem:[%s262 + $0x48] sm:$0xf] %v610
      %643 = vst [vmem:[%s262 + $0x4c] sm:$0xf] %v611
      %644 = vst [vmem:[%s262 + $0x50] sm:$0xf] %v612
      %645 = vst [vmem:[%s262 + $0x54] sm:$0xf] %v613
      %646 = vst [vmem:[%s262 + $0x58] sm:$0xf] %v614
      %647 = vst [vmem:[%s262 + $0x5c] sm:$0xf] %v615
      %648 = vst [vmem:[%s262 + $0x60] sm:$0xf] %v616
      %649 = vst [vmem:[%s262 + $0x64] sm:$0xf] %v617
      %650 = vst [vmem:[%s262 + $0x68] sm:$0xf] %v618
      %651 = vst [vmem:[%s262 + $0x6c] sm:$0xf] %v619
      %652 = vst [vmem:[%s262 + $0x70] sm:$0xf] %v620
      %653 = vst [vmem:[%s262 + $0x74] sm:$0xf] %v621
      %654 = vst [vmem:[%s262 + $0x78] sm:$0xf] %v622
      %655 = vst [vmem:[%s262 + $0x7c] sm:$0xf] %v623
      %s656 = smul.u32 32, %s20
      %p657 = scmp.lt.s32.totalorder %s19, 1
      %s658 = scalar_select %p657, %s19, 1
      %p659 = scmp.lt.s32.totalorder %s656, 31
      %s660 = scalar_select %p659, %s656, 31
      %p661 = scmp.lt.s32.totalorder %s21, 0
      %s662 = scalar_select %p661, %s21, 0
      %s663 = sadd.s32 %s662, %s660
      %s664 = smul.addr %s658, 32
      %s665 = sadd.s32 %s663, %s664
      %s666 = smul.addr %s665, 4
      %s667 = scalar_lea.vmem %s3, %s666
      // Predicated region
      $region33: #{_conv_bn_silu_impl.3} parent=31 // pred_check
        %p668 = pneg %p137
      $region34: #{_conv_bn_silu_impl.3} parent=31 // pred_check_branch
        %670 = sbr.rel (%p668) target = $region36
      $region35: #{_conv_bn_silu_impl.3} parent=31 // pred_region
        %s671 = smul.u32 32, %s20
      $region36: #{_conv_bn_silu_impl.3} parent=31 // pred_fallthru
        _
    $region32: #{_conv_bn_silu_impl.3} parent=5 // pred_fallthru
      _
    %p672 = scmp.le.s32.totalorder 2, %s9
    // Predicated region
    $region37: #{_conv_bn_silu_impl.3} parent=5 // pred_check
      %p673 = pneg %p672
    $region38: #{_conv_bn_silu_impl.3} parent=5 // pred_check_branch
      %675 = sbr.rel (%p673) target = $region40
    $region39: #{_conv_bn_silu_impl.3} parent=5 // pred_region
      %s676 = ssub.s32 %s9, 2
      // Predicated region
      $region41: #{_conv_bn_silu_impl.3} parent=39 // pred_check
        %p677 = pneg %p143
      $region42: #{_conv_bn_silu_impl.3} parent=39 // pred_check_branch
        %679 = sbr.rel (%p677) target = $region44
      $region43: #{_conv_bn_silu_impl.3} parent=39 // pred_region
        %s680 = smul.u32 32, %s23
        %p681 = scmp.lt.s32.totalorder %s22, 1
        %s682 = scalar_select %p681, %s22, 1
        %p683 = scmp.lt.s32.totalorder %s680, 31
        %s684 = scalar_select %p683, %s680, 31
        %p685 = scmp.lt.s32.totalorder %s24, 0
        %s686 = scalar_select %p685, %s24, 0
        %s687 = sadd.s32 %s686, %s684
        %s688 = smul.addr %s682, 32
        %s689 = sadd.s32 %s687, %s688
        %s690 = smul.addr %s689, 4
        %s691 = scalar_lea.vmem %s3, %s690
      $region44: #{_conv_bn_silu_impl.3} parent=39 // pred_fallthru
        _
    $region40: #{_conv_bn_silu_impl.3} parent=5 // pred_fallthru
      _
  $region6: #{_conv_bn_silu_impl.3} parent=0 // loop_footer
    %s13 = sadd.s32 1, %s9
  $region7: #{_conv_bn_silu_impl.3} parent=0 // loop_footer_branch
    %8 = sbr.rel target = $region3
  $region8: #{_conv_bn_silu_impl.3} parent=0 // loop_exit
    _

// kernel: _conv_bn_silu_impl.2
$region0: #{_conv_bn_silu_impl.2}
  #allocation0 [shape = 'u32[]', space=smem, size = 0x4, offset = 0x4, fixed_abs, tag = 'smem constant byte address 0x4 - core index']
  #allocation1 [shape = 'u32[72,128]{1,0:T(1,128)}', space=vmem, size = 0x9000, scoped, tag = 'internal scratch']
  %s0 = inlined_call_operand.vmem [shape: bf16[2,1,18,18,16], index: 0, kind: input, shape index: {}]
  %s1 = inlined_call_operand.vmem [shape: bf16[144,128], index: 1, kind: input, shape index: {}]
  %s2 = inlined_call_operand.vmem [shape: bf16[2,256,128], index: 2, kind: output, shape index: {0}]
  %s3 = inlined_call_operand.vmem [shape: f32[2,1,1,128], index: 3, kind: output, shape index: {1}]
  %s4 = inlined_call_operand.vmem [shape: f32[2,1,1,128], index: 4, kind: output, shape index: {2}]
  %5 = xla_tuple %s2, %s3, %s4
  %s6 = sld [smem:[#allocation0]]
  $region57: #{_conv_bn_silu_impl.2} parent=0
    _
  %s8 = ssub.s32 1, %s6
  %s9 = scalar_select 0, %s8, %s6
  loop: start=0, step=1, limit=4
  $region2: #{_conv_bn_silu_impl.2} parent=0 // loop_pre_header
    _
  $region3: #{_conv_bn_silu_impl.2} parent=0 // loop_header
    %s11 = sphi 0, %s15
    %p12 = scmp.ge.s32.totalorder %s11, 4
    %s18 = sphi 0, %s37
    %s19 = sphi 0, %s33
    %s20 = sphi 0, %s29
    %s21 = sphi 0, %s18
    %s22 = sphi 0, %s19
    %s23 = sphi 0, %s20
    %s24 = sphi 0, %s21
    %s25 = sphi 0, %s22
    %s26 = sphi 0, %s23
    %s42 = sphi 0, %s44
    %s45 = sphi 0, %s42
    %s46 = sphi 0, %s45
    %s62 = sphi 0, %s46
    %s68 = sphi 0, %s70
    %s71 = sphi 0, %s68
    %s72 = sphi 0, %s71
    %s88 = sphi 0, %s72
    %s98 = sphi 0, %s100
    %s101 = sphi 0, %s98
    %s102 = sphi 0, %s101
    %s118 = sphi 0, %s102
    %s128 = sphi 0, %s130
    %s131 = sphi 0, %s128
    %s132 = sphi 0, %s131
    %s148 = sphi 0, %s132
    %s158 = sphi 0, %s160
    %s161 = sphi 0, %s158
    %s162 = sphi 0, %s161
    %s178 = sphi 0, %s162
  $region4: #{_conv_bn_silu_impl.2} parent=0 // loop_header_branch
    %14 = sbr.rel (%p12) target = $region8
  $region5: #{_conv_bn_silu_impl.2} parent=0 // loop_body
    %s16 = ssub.s32 %s11, 1
    %s17 = ssub.s32 %s11, 2
    %s27 = sadd.s32 1, %s20
    %p28 = scmp.ge.s32.totalorder %s27, 1
    %s29 = scalar_select %p28, 0, %s27
    %s30 = sadd.s32 1, %s19
    %s31 = scalar_select %p28, %s30, %s19
    %p32 = scmp.ge.s32.totalorder %s31, 1
    %s33 = scalar_select %p32, 0, %s31
    %s34 = sadd.s32 1, %s18
    %s35 = scalar_select %p32, %s34, %s18
    %p36 = scmp.ge.s32.totalorder %s35, 2
    %s37 = scalar_select %p36, 0, %s35
    %s38 = ssub.s32 %s18, %s37
    %s39 = ssub.s32 %s19, %s33
    %s40 = sor.u32 %s38, %s39
    %p41 = scmp.eq.s32.totalorder %s40, 0
    %s43 = sadd.s32 %s42, 1
    %s44 = scalar_select %p41, %s42, %s43
    %p47 = pneg %p41
    %p48 = scmp.eq.s32.totalorder %s11, 1
    %p49 = por %p47, %p48
    %p50 = scmp.ne.s32.totalorder %s42, %s45
    %p51 = scmp.eq.s32.totalorder %s11, 0
    %p52 = por %p50, %p51
    %p53 = scmp.ne.s32.totalorder %s42, %s45
    %p54 = scmp.eq.s32.totalorder %s16, 1
    %p55 = por %p53, %p54
    %p56 = scmp.ne.s32.totalorder %s45, %s46
    %p57 = scmp.eq.s32.totalorder %s16, 0
    %p58 = por %p56, %p57
    %p59 = scmp.ne.s32.totalorder %s45, %s46
    %p60 = scmp.eq.s32.totalorder %s17, 1
    %p61 = por %p59, %p60
    %p63 = scmp.ne.s32.totalorder %s46, %s62
    %p64 = scmp.eq.s32.totalorder %s17, 0
    %p65 = por %p63, %p64
    %s66 = ssub.s32 %s20, %s29
    %p67 = scmp.eq.s32.totalorder %s66, 0
    %s69 = sadd.s32 %s68, 1
    %s70 = scalar_select %p67, %s68, %s69
    %p73 = pneg %p67
    %p74 = scmp.eq.s32.totalorder %s11, 1
    %p75 = por %p73, %p74
    %p76 = scmp.ne.s32.totalorder %s68, %s71
    %p77 = scmp.eq.s32.totalorder %s11, 0
    %p78 = por %p76, %p77
    %p79 = scmp.ne.s32.totalorder %s68, %s71
    %p80 = scmp.eq.s32.totalorder %s16, 1
    %p81 = por %p79, %p80
    %p82 = scmp.ne.s32.totalorder %s71, %s72
    %p83 = scmp.eq.s32.totalorder %s16, 0
    %p84 = por %p82, %p83
    %p85 = scmp.ne.s32.totalorder %s71, %s72
    %p86 = scmp.eq.s32.totalorder %s17, 1
    %p87 = por %p85, %p86
    %p89 = scmp.ne.s32.totalorder %s72, %s88
    %p90 = scmp.eq.s32.totalorder %s17, 0
    %p91 = por %p89, %p90
    %s92 = ssub.s32 %s18, %s37
    %s93 = ssub.s32 %s19, %s33
    %s94 = sor.u32 %s92, %s93
    %s95 = ssub.s32 %s20, %s29
    %s96 = sor.u32 %s94, %s95
    %p97 = scmp.eq.s32.totalorder %s96, 0
    %s99 = sadd.s32 %s98, 1
    %s100 = scalar_select %p97, %s98, %s99
    %p103 = pneg %p97
    %p104 = scmp.eq.s32.totalorder %s11, 1
    %p105 = por %p103, %p104
    %p106 = scmp.ne.s32.totalorder %s98, %s101
    %p107 = scmp.eq.s32.totalorder %s11, 0
    %p108 = por %p106, %p107
    %p109 = scmp.ne.s32.totalorder %s98, %s101
    %p110 = scmp.eq.s32.totalorder %s16, 1
    %p111 = por %p109, %p110
    %p112 = scmp.ne.s32.totalorder %s101, %s102
    %p113 = scmp.eq.s32.totalorder %s16, 0
    %p114 = por %p112, %p113
    %p115 = scmp.ne.s32.totalorder %s101, %s102
    %p116 = scmp.eq.s32.totalorder %s17, 1
    %p117 = por %p115, %p116
    %p119 = scmp.ne.s32.totalorder %s102, %s118
    %p120 = scmp.eq.s32.totalorder %s17, 0
    %p121 = por %p119, %p120
    %s122 = ssub.s32 %s18, %s37
    %s123 = ssub.s32 %s19, %s33
    %s124 = sor.u32 %s122, %s123
    %s125 = ssub.s32 %s20, %s29
    %s126 = sor.u32 %s124, %s125
    %p127 = scmp.eq.s32.totalorder %s126, 0
    %s129 = sadd.s32 %s128, 1
    %s130 = scalar_select %p127, %s128, %s129
    %p133 = pneg %p127
    %p134 = scmp.eq.s32.totalorder %s11, 1
    %p135 = por %p133, %p134
    %p136 = scmp.ne.s32.totalorder %s128, %s131
    %p137 = scmp.eq.s32.totalorder %s11, 0
    %p138 = por %p136, %p137
    %p139 = scmp.ne.s32.totalorder %s128, %s131
    %p140 = scmp.eq.s32.totalorder %s16, 1
    %p141 = por %p139, %p140
    %p142 = scmp.ne.s32.totalorder %s131, %s132
    %p143 = scmp.eq.s32.totalorder %s16, 0
    %p144 = por %p142, %p143
    %p145 = scmp.ne.s32.totalorder %s131, %s132
    %p146 = scmp.eq.s32.totalorder %s17, 1
    %p147 = por %p145, %p146
    %p149 = scmp.ne.s32.totalorder %s132, %s148
    %p150 = scmp.eq.s32.totalorder %s17, 0
    %p151 = por %p149, %p150
    %s152 = ssub.s32 %s18, %s37
    %s153 = ssub.s32 %s19, %s33
    %s154 = sor.u32 %s152, %s153
    %s155 = ssub.s32 %s20, %s29
    %s156 = sor.u32 %s154, %s155
    %p157 = scmp.eq.s32.totalorder %s156, 0
    %s159 = sadd.s32 %s158, 1
    %s160 = scalar_select %p157, %s158, %s159
    %p163 = pneg %p157
    %p164 = scmp.eq.s32.totalorder %s11, 1
    %p165 = por %p163, %p164
    %p166 = scmp.ne.s32.totalorder %s158, %s161
    %p167 = scmp.eq.s32.totalorder %s11, 0
    %p168 = por %p166, %p167
    %p169 = scmp.ne.s32.totalorder %s158, %s161
    %p170 = scmp.eq.s32.totalorder %s16, 1
    %p171 = por %p169, %p170
    %p172 = scmp.ne.s32.totalorder %s161, %s162
    %p173 = scmp.eq.s32.totalorder %s16, 0
    %p174 = por %p172, %p173
    %p175 = scmp.ne.s32.totalorder %s161, %s162
    %p176 = scmp.eq.s32.totalorder %s17, 1
    %p177 = por %p175, %p176
    %p179 = scmp.ne.s32.totalorder %s162, %s178
    %p180 = scmp.eq.s32.totalorder %s17, 0
    %p181 = por %p179, %p180
    %p182 = scmp.le.s32.totalorder 1, %s11
    %p183 = scmp.lt.s32.totalorder %s11, 3
    %p184 = pnand %p182, %p183
    %p185 = pneg %p184
    // Predicated region
    $region9: #{_conv_bn_silu_impl.2} parent=5 // pred_check
      _
    $region10: #{_conv_bn_silu_impl.2} parent=5 // pred_check_branch
      %187 = sbr.rel (%p184) target = $region12
    $region11: #{_conv_bn_silu_impl.2} parent=5 // pred_region
      %s188 = ssub.s32 %s11, 1
      // Predicated region
      $region13: #{_conv_bn_silu_impl.2} parent=11 // pred_check
        %p189 = pneg %p84
      $region14: #{_conv_bn_silu_impl.2} parent=11 // pred_check_branch
        %191 = sbr.rel (%p189) target = $region16
      $region15: #{_conv_bn_silu_impl.2} parent=11 // pred_region
        %p192 = scmp.lt.s32.totalorder %s23, 0
        %s193 = scalar_select %p192, %s23, 0
        %s194 = smul.addr %s193, 4
        %s195 = scalar_lea.vmem %s1, %s194
      $region16: #{_conv_bn_silu_impl.2} parent=11 // pred_fallthru
        _
    $region12: #{_conv_bn_silu_impl.2} parent=5 // pred_fallthru
      _
    %p196 = scmp.lt.s32.totalorder %s11, 2
    // Predicated region
    $region17: #{_conv_bn_silu_impl.2} parent=5 // pred_check
      %p197 = pneg %p196
    $region18: #{_conv_bn_silu_impl.2} parent=5 // pred_check_branch
      %199 = sbr.rel (%p197) target = $region20
    $region19: #{_conv_bn_silu_impl.2} parent=5 // pred_region
      // Predicated region
      $region21: #{_conv_bn_silu_impl.2} parent=19 // pred_check
        %p200 = pneg %p52
      $region22: #{_conv_bn_silu_impl.2} parent=19 // pred_check_branch
        %202 = sbr.rel (%p200) target = $region24
      $region23: #{_conv_bn_silu_impl.2} parent=19 // pred_region
        %p203 = scmp.lt.s32.totalorder %s18, 1
        %s204 = scalar_select %p203, %s18, 1
        %p205 = scmp.lt.s32.totalorder %s19, 0
        %s206 = scalar_select %p205, %s19, 0
        %s207 = smul.addr %s206, 54
        %s208 = smul.addr %s204, 54
        %s209 = sadd.s32 %s207, %s208
        %s210 = smul.addr %s209, 4
        %s211 = scalar_lea.vmem %s0, %s210
      $region24: #{_conv_bn_silu_impl.2} parent=19 // pred_fallthru
        _
    $region20: #{_conv_bn_silu_impl.2} parent=5 // pred_fallthru
      _
    %p212 = scmp.le.s32.totalorder 1, %s11
    %p213 = scmp.lt.s32.totalorder %s11, 3
    %p214 = pnand %p212, %p213
    %p215 = pneg %p214
    // Predicated region
    $region25: #{_conv_bn_silu_impl.2} parent=5 // pred_check
      _
    $region26: #{_conv_bn_silu_impl.2} parent=5 // pred_check_branch
      %217 = sbr.rel (%p214) target = $region28
    $region27: #{_conv_bn_silu_impl.2} parent=5 // pred_region
      %s218 = ssub.s32 %s11, 1
      %p219 = scmp.lt.s32.totalorder %s21, 1
      %s220 = scalar_select %p219, %s21, 1
      %p221 = scmp.lt.s32.totalorder %s22, 0
      %s222 = scalar_select %p221, %s22, 0
      %s223 = smul.addr %s222, 54
      %s224 = smul.addr %s220, 54
      %s225 = sadd.s32 %s223, %s224
      %s226 = smul.addr %s225, 4
      %s227 = scalar_lea.vmem %s0, %s226
      %p228 = pneg %p58
      %p229 = pneg %p55
      %p230 = scmp.lt.s32.totalorder %s23, 0
      %s231 = scalar_select %p230, %s23, 0
      %s232 = smul.addr %s231, 4
      %s233 = scalar_lea.vmem %s1, %s232
      %p234 = pneg %p84
      %p235 = pneg %p81
      %p236 = pneg %p114
      %p237 = pneg %p111
      %s238 = smul.u32 32, %s22
      %p239 = scmp.lt.s32.totalorder %s21, 1
      %s240 = scalar_select %p239, %s21, 1
      %p241 = scmp.lt.s32.totalorder %s238, 31
      %s242 = scalar_select %p241, %s238, 31
      %p243 = scmp.lt.s32.totalorder %s23, 0
      %s244 = scalar_select %p243, %s23, 0
      %s245 = sadd.s32 %s244, %s242
      %s246 = smul.addr %s240, 32
      %s247 = sadd.s32 %s245, %s246
      %s248 = smul.addr %s247, 4
      %s249 = scalar_lea.vmem %s2, %s248
      %p250 = pneg %p144
      %p251 = pneg %p141
      %p252 = scmp.lt.s32.totalorder %s21, 1
      %s253 = scalar_select %p252, %s21, 1
      %p254 = scmp.lt.s32.totalorder %s22, 0
      %s255 = scalar_select %p254, %s22, 0
      %p256 = scmp.lt.s32.totalorder %s23, 0
      %s257 = scalar_select %p256, %s23, 0
      %s258 = sadd.s32 %s257, %s255
      %s259 = sadd.s32 %s258, %s253
      %s260 = scalar_lea.vmem %s3, %s259
      %p261 = pneg %p174
      %p262 = pneg %p171
      %p263 = scmp.lt.s32.totalorder %s21, 1
      %s264 = scalar_select %p263, %s21, 1
      %p265 = scmp.lt.s32.totalorder %s22, 0
      %s266 = scalar_select %p265, %s22, 0
      %p267 = scmp.lt.s32.totalorder %s23, 0
      %s268 = scalar_select %p267, %s23, 0
      %s269 = sadd.s32 %s268, %s266
      %s270 = sadd.s32 %s269, %s264
      %s271 = scalar_lea.vmem %s4, %s270
      %p272 = scmp.lt.s32.totalorder %s21, 1
      %s273 = scalar_select %p272, %s21, 1
      %p274 = scmp.lt.s32.totalorder %s22, 0
      %s275 = scalar_select %p274, %s22, 0
      %s276 = smul.addr %s275, 54
      %s277 = smul.addr %s273, 54
      %s278 = sadd.s32 %s276, %s277
      %s279 = smul.addr %s278, 4
      %s280 = scalar_lea.vmem %s0, %s279
      %p281 = scmp.lt.s32.totalorder %s23, 0
      %s282 = scalar_select %p281, %s23, 0
      %s283 = smul.addr %s282, 4
      %s284 = scalar_lea.vmem %s1, %s283
      %s285 = smul.u32 32, %s22
      %p286 = scmp.lt.s32.totalorder %s21, 1
      %s287 = scalar_select %p286, %s21, 1
      %p288 = scmp.lt.s32.totalorder %s285, 31
      %s289 = scalar_select %p288, %s285, 31
      %p290 = scmp.lt.s32.totalorder %s23, 0
      %s291 = scalar_select %p290, %s23, 0
      %s292 = sadd.s32 %s291, %s289
      %s293 = smul.addr %s287, 32
      %s294 = sadd.s32 %s292, %s293
      %s295 = smul.addr %s294, 4
      %s296 = scalar_lea.vmem %s2, %s295
      %s297 = smul.u32 32, %s22
      %p298 = scmp.lt.s32.totalorder %s21, 1
      %s299 = scalar_select %p298, %s21, 1
      %p300 = scmp.lt.s32.totalorder %s22, 0
      %s301 = scalar_select %p300, %s22, 0
      %p302 = scmp.lt.s32.totalorder %s23, 0
      %s303 = scalar_select %p302, %s23, 0
      %s304 = sadd.s32 %s303, %s301
      %s305 = sadd.s32 %s304, %s299
      %s306 = scalar_lea.vmem %s3, %s305
      %p307 = scmp.lt.s32.totalorder %s21, 1
      %s308 = scalar_select %p307, %s21, 1
      %p309 = scmp.lt.s32.totalorder %s22, 0
      %s310 = scalar_select %p309, %s22, 0
      %p311 = scmp.lt.s32.totalorder %s23, 0
      %s312 = scalar_select %p311, %s23, 0
      %s313 = sadd.s32 %s312, %s310
      %s314 = sadd.s32 %s313, %s308
      %s315 = scalar_lea.vmem %s4, %s314
      %v317 = vld [vmem:[%s280] sm:$0xf]
      %v318 = vld [vmem:[%s280 + $0x4] sm:$0xf]
      %v319 = vld [vmem:[%s280 + $0xc] sm:$0xf]
      %v320 = vld [vmem:[%s280 + $0x10] sm:$0xf]
      %v321 = vld [vmem:[%s280 + $0x18] sm:$0xf]
      %v322 = vld [vmem:[%s280 + $0x1c] sm:$0xf]
      %v323 = vld [vmem:[%s280 + $0x24] sm:$0xf]
      %v324 = vld [vmem:[%s280 + $0x28] sm:$0xf]
      %v325 = vld [vmem:[%s280 + $0x30] sm:$0xf]
      %v326 = vld [vmem:[%s280 + $0x34] sm:$0xf]
      %v327 = vld [vmem:[%s280 + $0x3c] sm:$0xf]
      %v328 = vld [vmem:[%s280 + $0x40] sm:$0xf]
      %v329 = vld [vmem:[%s280 + $0x48] sm:$0xf]
      %v330 = vld [vmem:[%s280 + $0x4c] sm:$0xf]
      %v331 = vld [vmem:[%s280 + $0x54] sm:$0xf]
      %v332 = vld [vmem:[%s280 + $0x58] sm:$0xf]
      %v333 = vld [vmem:[%s280 + $0x60] sm:$0xf]
      %v334 = vld [vmem:[%s280 + $0x64] sm:$0xf]
      %v335 = vld [vmem:[%s280 + $0x6c] sm:$0xf]
      %v336 = vld [vmem:[%s280 + $0x70] sm:$0xf]
      %v337 = vld [vmem:[%s280 + $0x78] sm:$0xf]
      %v338 = vld [vmem:[%s280 + $0x7c] sm:$0xf]
      %v339 = vld [vmem:[%s280 + $0x84] sm:$0xf]
      %v340 = vld [vmem:[%s280 + $0x88] sm:$0xf]
      %v341 = vld [vmem:[%s280 + $0x90] sm:$0xf]
      %v342 = vld [vmem:[%s280 + $0x94] sm:$0xf]
      %v343 = vld [vmem:[%s280 + $0x9c] sm:$0xf]
      %v344 = vld [vmem:[%s280 + $0xa0] sm:$0xf]
      %v345 = vld [vmem:[%s280 + $0xa8] sm:$0xf]
      %v346 = vld [vmem:[%s280 + $0xac] sm:$0xf]
      %v347 = vld [vmem:[%s280 + $0xb4] sm:$0xf]
      %v348 = vld [vmem:[%s280 + $0xb8] sm:$0xf]
      %v349 = vld [vmem:[%s280 + $0x8] sm:$0x1]
      %v350 = vld [vmem:[%s280 + $0x14] sm:$0x1]
      %v351 = vld [vmem:[%s280 + $0x20] sm:$0x1]
      %v352 = vld [vmem:[%s280 + $0x2c] sm:$0x1]
      %v353 = vld [vmem:[%s280 + $0x38] sm:$0x1]
      %v354 = vld [vmem:[%s280 + $0x44] sm:$0x1]
      %v355 = vld [vmem:[%s280 + $0x50] sm:$0x1]
      %v356 = vld [vmem:[%s280 + $0x5c] sm:$0x1]
      %v357 = vld [vmem:[%s280 + $0x68] sm:$0x1]
      %v358 = vld [vmem:[%s280 + $0x74] sm:$0x1]
      %v359 = vld [vmem:[%s280 + $0x80] sm:$0x1]
      %v360 = vld [vmem:[%s280 + $0x8c] sm:$0x1]
      %v361 = vld [vmem:[%s280 + $0x98] sm:$0x1]
      %v362 = vld [vmem:[%s280 + $0xa4] sm:$0x1]
      %v363 = vld [vmem:[%s280 + $0xb0] sm:$0x1]
      %v364 = vld [vmem:[%s280 + $0xbc] sm:$0x1]
      %v365 = vld [vmem:[%s280] sm:$0xe]
      %v366 = vld [vmem:[%s280 + $0xc] sm:$0xe]
      %v367 = vld [vmem:[%s280 + $0x18] sm:$0xe]
      %v368 = vld [vmem:[%s280 + $0x24] sm:$0xe]
      %v369 = vld [vmem:[%s280 + $0x30] sm:$0xe]
      %v370 = vld [vmem:[%s280 + $0x3c] sm:$0xe]
      %v371 = vld [vmem:[%s280 + $0x48] sm:$0xe]
      %v372 = vld [vmem:[%s280 + $0x54] sm:$0xe]
      %v373 = vld [vmem:[%s280 + $0x60] sm:$0xe]
      %v374 = vld [vmem:[%s280 + $0x6c] sm:$0xe]
      %v375 = vld [vmem:[%s280 + $0x78] sm:$0xe]
      %v376 = vld [vmem:[%s280 + $0x84] sm:$0xe]
      %v377 = vld [vmem:[%s280 + $0x90] sm:$0xe]
      %v378 = vld [vmem:[%s280 + $0x9c] sm:$0xe]
      %v379 = vld [vmem:[%s280 + $0xa8] sm:$0xe]
      %v380 = vld [vmem:[%s280 + $0xb4] sm:$0xe]
      %s381 = scalar_lea.vmem %s280, 12
      %v382 = vld [vmem:[%s381] sm:$0xf]
      %v383 = vld [vmem:[%s381 + $0x4] sm:$0xf]
      %v384 = vld [vmem:[%s381 + $0xc] sm:$0xf]
      %v385 = vld [vmem:[%s381 + $0x10] sm:$0xf]
      %v386 = vld [vmem:[%s381 + $0x18] sm:$0xf]
      %v387 = vld [vmem:[%s381 + $0x1c] sm:$0xf]
      %v388 = vld [vmem:[%s381 + $0x24] sm:$0xf]
      %v389 = vld [vmem:[%s381 + $0x28] sm:$0xf]
      %v390 = vld [vmem:[%s381 + $0x30] sm:$0xf]
      %v391 = vld [vmem:[%s381 + $0x34] sm:$0xf]
      %v392 = vld [vmem:[%s381 + $0x3c] sm:$0xf]
      %v393 = vld [vmem:[%s381 + $0x40] sm:$0xf]
      %v394 = vld [vmem:[%s381 + $0x48] sm:$0xf]
      %v395 = vld [vmem:[%s381 + $0x4c] sm:$0xf]
      %v396 = vld [vmem:[%s381 + $0x54] sm:$0xf]
      %v397 = vld [vmem:[%s381 + $0x58] sm:$0xf]
      %v398 = vld [vmem:[%s381 + $0x60] sm:$0xf]
      %v399 = vld [vmem:[%s381 + $0x64] sm:$0xf]
      %v400 = vld [vmem:[%s381 + $0x6c] sm:$0xf]
      %v401 = vld [vmem:[%s381 + $0x70] sm:$0xf]
      %v402 = vld [vmem:[%s381 + $0x78] sm:$0xf]
      %v403 = vld [vmem:[%s381 + $0x7c] sm:$0xf]
      %v404 = vld [vmem:[%s381 + $0x84] sm:$0xf]
      %v405 = vld [vmem:[%s381 + $0x88] sm:$0xf]
      %v406 = vld [vmem:[%s381 + $0x90] sm:$0xf]
      %v407 = vld [vmem:[%s381 + $0x94] sm:$0xf]
      %v408 = vld [vmem:[%s381 + $0x9c] sm:$0xf]
      %v409 = vld [vmem:[%s381 + $0xa0] sm:$0xf]
      %v410 = vld [vmem:[%s381 + $0xa8] sm:$0xf]
      %v411 = vld [vmem:[%s381 + $0xac] sm:$0xf]
      %v412 = vld [vmem:[%s381 + $0xb4] sm:$0xf]
      %v413 = vld [vmem:[%s381 + $0xb8] sm:$0xf]
      %v414 = vld [vmem:[%s381 + $0x8] sm:$0x1]
      %v415 = vld [vmem:[%s381 + $0x14] sm:$0x1]
      %v416 = vld [vmem:[%s381 + $0x20] sm:$0x1]
      %v417 = vld [vmem:[%s381 + $0x2c] sm:$0x1]
      %v418 = vld [vmem:[%s381 + $0x38] sm:$0x1]
      %v419 = vld [vmem:[%s381 + $0x44] sm:$0x1]
      %v420 = vld [vmem:[%s381 + $0x50] sm:$0x1]
      %v421 = vld [vmem:[%s381 + $0x5c] sm:$0x1]
      %v422 = vld [vmem:[%s381 + $0x68] sm:$0x1]
      %v423 = vld [vmem:[%s381 + $0x74] sm:$0x1]
      %v424 = vld [vmem:[%s381 + $0x80] sm:$0x1]
      %v425 = vld [vmem:[%s381 + $0x8c] sm:$0x1]
      %v426 = vld [vmem:[%s381 + $0x98] sm:$0x1]
      %v427 = vld [vmem:[%s381 + $0xa4] sm:$0x1]
      %v428 = vld [vmem:[%s381 + $0xb0] sm:$0x1]
      %v429 = vld [vmem:[%s381 + $0xbc] sm:$0x1]
      %v430 = vld [vmem:[%s381] sm:$0xe]
      %v431 = vld [vmem:[%s381 + $0xc] sm:$0xe]
      %v432 = vld [vmem:[%s381 + $0x18] sm:$0xe]
      %v433 = vld [vmem:[%s381 + $0x24] sm:$0xe]
      %v434 = vld [vmem:[%s381 + $0x30] sm:$0xe]
      %v435 = vld [vmem:[%s381 + $0x3c] sm:$0xe]
      %v436 = vld [vmem:[%s381 + $0x48] sm:$0xe]
      %v437 = vld [vmem:[%s381 + $0x54] sm:$0xe]
      %v438 = vld [vmem:[%s381 + $0x60] sm:$0xe]
      %v439 = vld [vmem:[%s381 + $0x6c] sm:$0xe]
      %v440 = vld [vmem:[%s381 + $0x78] sm:$0xe]
      %v441 = vld [vmem:[%s381 + $0x84] sm:$0xe]
      %v442 = vld [vmem:[%s381 + $0x90] sm:$0xe]
      %v443 = vld [vmem:[%s381 + $0x9c] sm:$0xe]
      %v444 = vld [vmem:[%s381 + $0xa8] sm:$0xe]
      %v445 = vld [vmem:[%s381 + $0xb4] sm:$0xe]
      %s446 = scalar_lea.vmem %s280, 24
      %v447 = vld [vmem:[%s446] sm:$0xf]
      %v448 = vld [vmem:[%s446 + $0x4] sm:$0xf]
      %v449 = vld [vmem:[%s446 + $0xc] sm:$0xf]
      %v450 = vld [vmem:[%s446 + $0x10] sm:$0xf]
      %v451 = vld [vmem:[%s446 + $0x18] sm:$0xf]
      %v452 = vld [vmem:[%s446 + $0x1c] sm:$0xf]
      %v453 = vld [vmem:[%s446 + $0x24] sm:$0xf]
      %v454 = vld [vmem:[%s446 + $0x28] sm:$0xf]
      %v455 = vld [vmem:[%s446 + $0x30] sm:$0xf]
      %v456 = vld [vmem:[%s446 + $0x34] sm:$0xf]
      %v457 = vld [vmem:[%s446 + $0x3c] sm:$0xf]
      %v458 = vld [vmem:[%s446 + $0x40] sm:$0xf]
      %v459 = vld [vmem:[%s446 + $0x48] sm:$0xf]
      %v460 = vld [vmem:[%s446 + $0x4c] sm:$0xf]
      %v461 = vld [vmem:[%s446 + $0x54] sm:$0xf]
      %v462 = vld [vmem:[%s446 + $0x58] sm:$0xf]
      %v463 = vld [vmem:[%s446 + $0x60] sm:$0xf]
      %v464 = vld [vmem:[%s446 + $0x64] sm:$0xf]
      %v465 = vld [vmem:[%s446 + $0x6c] sm:$0xf]
      %v466 = vld [vmem:[%s446 + $0x70] sm:$0xf]
      %v467 = vld [vmem:[%s446 + $0x78] sm:$0xf]
      %v468 = vld [vmem:[%s446 + $0x7c] sm:$0xf]
      %v469 = vld [vmem:[%s446 + $0x84] sm:$0xf]
      %v470 = vld [vmem:[%s446 + $0x88] sm:$0xf]
      %v471 = vld [vmem:[%s446 + $0x90] sm:$0xf]
      %v472 = vld [vmem:[%s446 + $0x94] sm:$0xf]
      %v473 = vld [vmem:[%s446 + $0x9c] sm:$0xf]
      %v474 = vld [vmem:[%s446 + $0xa0] sm:$0xf]
      %v475 = vld [vmem:[%s446 + $0xa8] sm:$0xf]
      %v476 = vld [vmem:[%s446 + $0xac] sm:$0xf]
      %v477 = vld [vmem:[%s446 + $0xb4] sm:$0xf]
      %v478 = vld [vmem:[%s446 + $0xb8] sm:$0xf]
      %v479 = vld [vmem:[%s446 + $0x8] sm:$0x1]
      %v480 = vld [vmem:[%s446 + $0x14] sm:$0x1]
      %v481 = vld [vmem:[%s446 + $0x20] sm:$0x1]
      %v482 = vld [vmem:[%s446 + $0x2c] sm:$0x1]
      %v483 = vld [vmem:[%s446 + $0x38] sm:$0x1]
      %v484 = vld [vmem:[%s446 + $0x44] sm:$0x1]
      %v485 = vld [vmem:[%s446 + $0x50] sm:$0x1]
      %v486 = vld [vmem:[%s446 + $0x5c] sm:$0x1]
      %v487 = vld [vmem:[%s446 + $0x68] sm:$0x1]
      %v488 = vld [vmem:[%s446 + $0x74] sm:$0x1]
      %v489 = vld [vmem:[%s446 + $0x80] sm:$0x1]
      %v490 = vld [vmem:[%s446 + $0x8c] sm:$0x1]
      %v491 = vld [vmem:[%s446 + $0x98] sm:$0x1]
      %v492 = vld [vmem:[%s446 + $0xa4] sm:$0x1]
      %v493 = vld [vmem:[%s446 + $0xb0] sm:$0x1]
      %v494 = vld [vmem:[%s446 + $0xbc] sm:$0x1]
      %v495 = vld [vmem:[%s446] sm:$0xe]
      %v496 = vld [vmem:[%s446 + $0xc] sm:$0xe]
      %v497 = vld [vmem:[%s446 + $0x18] sm:$0xe]
      %v498 = vld [vmem:[%s446 + $0x24] sm:$0xe]
      %v499 = vld [vmem:[%s446 + $0x30] sm:$0xe]
      %v500 = vld [vmem:[%s446 + $0x3c] sm:$0xe]
      %v501 = vld [vmem:[%s446 + $0x48] sm:$0xe]
      %v502 = vld [vmem:[%s446 + $0x54] sm:$0xe]
      %v503 = vld [vmem:[%s446 + $0x60] sm:$0xe]
      %v504 = vld [vmem:[%s446 + $0x6c] sm:$0xe]
      %v505 = vld [vmem:[%s446 + $0x78] sm:$0xe]
      %v506 = vld [vmem:[%s446 + $0x84] sm:$0xe]
      %v507 = vld [vmem:[%s446 + $0x90] sm:$0xe]
      %v508 = vld [vmem:[%s446 + $0x9c] sm:$0xe]
      %v509 = vld [vmem:[%s446 + $0xa8] sm:$0xe]
      %v510 = vld [vmem:[%s446 + $0xb4] sm:$0xe]
      %v543 = vunpack.c.l.b16 %v317
      %v544 = vunpack.c.l.b16 %v318
      %v545 = vunpack.c.l.b16 %v319
      %v546 = vunpack.c.l.b16 %v320
      %v547 = vunpack.c.l.b16 %v321
      %v548 = vunpack.c.l.b16 %v322
      %v549 = vunpack.c.l.b16 %v323
      %v550 = vunpack.c.l.b16 %v324
      %v551 = vunpack.c.l.b16 %v325
      %v552 = vunpack.c.l.b16 %v326
      %v553 = vunpack.c.l.b16 %v327
      %v554 = vunpack.c.l.b16 %v328
      %v555 = vunpack.c.l.b16 %v329
      %v556 = vunpack.c.l.b16 %v330
      %v557 = vunpack.c.l.b16 %v331
      %v558 = vunpack.c.l.b16 %v332
      %v559 = vunpack.c.l.b16 %v333
      %v560 = vunpack.c.l.b16 %v334
      %v561 = vunpack.c.l.b16 %v335
      %v562 = vunpack.c.l.b16 %v336
      %v563 = vunpack.c.l.b16 %v337
      %v564 = vunpack.c.l.b16 %v338
      %v565 = vunpack.c.l.b16 %v339
      %v566 = vunpack.c.l.b16 %v340
      %v567 = vunpack.c.l.b16 %v341
      %v568 = vunpack.c.l.b16 %v342
      %v569 = vunpack.c.l.b16 %v343
      %v570 = vunpack.c.l.b16 %v344
      %v571 = vunpack.c.l.b16 %v345
      %v572 = vunpack.c.l.b16 %v346
      %v573 = vunpack.c.l.b16 %v347
      %v574 = vunpack.c.l.b16 %v348
      %v575 = vpack.c.b16 %v544, %v543
      %v576 = vpack.c.b16 %v546, %v545
      %v577 = vpack.c.b16 %v548, %v547
      %v578 = vpack.c.b16 %v550, %v549
      %v579 = vpack.c.b16 %v552, %v551
      %v580 = vpack.c.b16 %v554, %v553
      %v581 = vpack.c.b16 %v556, %v555
      %v582 = vpack.c.b16 %v558, %v557
      %v583 = vpack.c.b16 %v560, %v559
      %v584 = vpack.c.b16 %v562, %v561
      %v585 = vpack.c.b16 %v564, %v563
      %v586 = vpack.c.b16 %v566, %v565
      %v587 = vpack.c.b16 %v568, %v567
      %v588 = vpack.c.b16 %v570, %v569
      %v589 = vpack.c.b16 %v572, %v571
      %v590 = vpack.c.b16 %v574, %v573
      %v607 = vunpack.c.l.b16 %v349
      %v608 = vunpack.c.l.b16 %v350
      %v609 = vunpack.c.l.b16 %v351
      %v610 = vunpack.c.l.b16 %v352
      %v611 = vunpack.c.l.b16 %v353
      %v612 = vunpack.c.l.b16 %v354
      %v613 = vunpack.c.l.b16 %v355
      %v614 = vunpack.c.l.b16 %v356
      %v615 = vunpack.c.l.b16 %v357
      %v616 = vunpack.c.l.b16 %v358
      %v617 = vunpack.c.l.b16 %v359
      %v618 = vunpack.c.l.b16 %v360
      %v619 = vunpack.c.l.b16 %v361
      %v620 = vunpack.c.l.b16 %v362
      %v621 = vunpack.c.l.b16 %v363
      %v622 = vunpack.c.l.b16 %v364
      %v623 = vpack.c.b16 %v607, %v607
      %v624 = vpack.c.b16 %v608, %v608
      %v625 = vpack.c.b16 %v609, %v609
      %v626 = vpack.c.b16 %v610, %v610
      %v627 = vpack.c.b16 %v611, %v611
      %v628 = vpack.c.b16 %v612, %v612
      %v629 = vpack.c.b16 %v613, %v613
      %v630 = vpack.c.b16 %v614, %v614
      %v631 = vpack.c.b16 %v615, %v615
      %v632 = vpack.c.b16 %v616, %v616
      %v633 = vpack.c.b16 %v617, %v617
      %v634 = vpack.c.b16 %v618, %v618
      %v635 = vpack.c.b16 %v619, %v619
      %v636 = vpack.c.b16 %v620, %v620
      %v637 = vpack.c.b16 %v621, %v621
      %v638 = vpack.c.b16 %v622, %v622
      %vm639 = vsmask.f32 7424
      %v641 = vshrl.u32 %v575, 16
      %v643 = vshll.u32 %v575, 16
      %v645 = vrot.slane %v643, 1
      %v646 = vor.u32 %v641, %v645
      %v648 = vshll.u32 %v623, 16
      %v650 = vrot.slane %v648, 1
      %v651 = vsel %vm639, %v646, %v650
      %v653 = vshrl.u32 %v576, 16
      %v655 = vshll.u32 %v576, 16
      %v657 = vrot.slane %v655, 1
      %v658 = vor.u32 %v653, %v657
      %v660 = vshll.u32 %v624, 16
      %v662 = vrot.slane %v660, 1
      %v663 = vsel %vm639, %v658, %v662
      %v665 = vshrl.u32 %v577, 16
      %v667 = vshll.u32 %v577, 16
      %v669 = vrot.slane %v667, 1
      %v670 = vor.u32 %v665, %v669
      %v672 = vshll.u32 %v625, 16
      %v674 = vrot.slane %v672, 1
      %v675 = vsel %vm639, %v670, %v674
      %v677 = vshrl.u32 %v578, 16
      %v679 = vshll.u32 %v578, 16
      %v681 = vrot.slane %v679, 1
      %v682 = vor.u32 %v677, %v681
      %v684 = vshll.u32 %v626, 16
      %v686 = vrot.slane %v684, 1
      %v687 = vsel %vm639, %v682, %v686
      %v689 = vshrl.u32 %v579, 16
      %v691 = vshll.u32 %v579, 16
      %v693 = vrot.slane %v691, 1
      %v694 = vor.u32 %v689, %v693
      %v696 = vshll.u32 %v627, 16
      %v698 = vrot.slane %v696, 1
      %v699 = vsel %vm639, %v694, %v698
      %v701 = vshrl.u32 %v580, 16
      %v703 = vshll.u32 %v580, 16
      %v705 = vrot.slane %v703, 1
      %v706 = vor.u32 %v701, %v705
      %v708 = vshll.u32 %v628, 16
      %v710 = vrot.slane %v708, 1
      %v711 = vsel %vm639, %v706, %v710
      %v713 = vshrl.u32 %v581, 16
      %v715 = vshll.u32 %v581, 16
      %v717 = vrot.slane %v715, 1
      %v718 = vor.u32 %v713, %v717
      %v720 = vshll.u32 %v629, 16
      %v722 = vrot.slane %v720, 1
      %v723 = vsel %vm639, %v718, %v722
      %v725 = vshrl.u32 %v582, 16
      %v727 = vshll.u32 %v582, 16
      %v729 = vrot.slane %v727, 1
      %v730 = vor.u32 %v725, %v729
      %v732 = vshll.u32 %v630, 16
      %v734 = vrot.slane %v732, 1
      %v735 = vsel %vm639, %v730, %v734
      %v737 = vshrl.u32 %v583, 16
      %v739 = vshll.u32 %v583, 16
      %v741 = vrot.slane %v739, 1
      %v742 = vor.u32 %v737, %v741
      %v744 = vshll.u32 %v631, 16
      %v746 = vrot.slane %v744, 1
      %v747 = vsel %vm639, %v742, %v746
      %v749 = vshrl.u32 %v584, 16
      %v751 = vshll.u32 %v584, 16
      %v753 = vrot.slane %v751, 1
      %v754 = vor.u32 %v749, %v753
      %v756 = vshll.u32 %v632, 16
      %v758 = vrot.slane %v756, 1
      %v759 = vsel %vm639, %v754, %v758
      %v761 = vshrl.u32 %v585, 16
      %v763 = vshll.u32 %v585, 16
      %v765 = vrot.slane %v763, 1
      %v766 = vor.u32 %v761, %v765
      %v768 = vshll.u32 %v633, 16
      %v770 = vrot.slane %v768, 1
      %v771 = vsel %vm639, %v766, %v770
      %v773 = vshrl.u32 %v586, 16
      %v775 = vshll.u32 %v586, 16
      %v777 = vrot.slane %v775, 1
      %v778 = vor.u32 %v773, %v777
      %v780 = vshll.u32 %v634, 16
      %v782 = vrot.slane %v780, 1
      %v783 = vsel %vm639, %v778, %v782
      %v785 = vshrl.u32 %v587, 16
      %v787 = vshll.u32 %v587, 16
      %v789 = vrot.slane %v787, 1
      %v790 = vor.u32 %v785, %v789
      %v792 = vshll.u32 %v635, 16
      %v794 = vrot.slane %v792, 1
      %v795 = vsel %vm639, %v790, %v794
      %v797 = vshrl.u32 %v588, 16
      %v799 = vshll.u32 %v588, 16
      %v801 = vrot.slane %v799, 1
      %v802 = vor.u32 %v797, %v801
      %v804 = vshll.u32 %v636, 16
      %v806 = vrot.slane %v804, 1
      %v807 = vsel %vm639, %v802, %v806
      %v809 = vshrl.u32 %v589, 16
      %v811 = vshll.u32 %v589, 16
      %v813 = vrot.slane %v811, 1
      %v814 = vor.u32 %v809, %v813
      %v816 = vshll.u32 %v637, 16
      %v818 = vrot.slane %v816, 1
      %v819 = vsel %vm639, %v814, %v818
      %v821 = vshrl.u32 %v590, 16
      %v823 = vshll.u32 %v590, 16
      %v825 = vrot.slane %v823, 1
      %v826 = vor.u32 %v821, %v825
      %v828 = vshll.u32 %v638, 16
      %v830 = vrot.slane %v828, 1
      %v831 = vsel %vm639, %v826, %v830
      %832 = vrot.lane.b32.xlu0 %v651, 16
      %v833 = vpop.permute.xlu0 %832
      %834 = vrot.lane.b32.xlu0 %v663, 16
      %v835 = vpop.permute.xlu0 %834
      %836 = vrot.lane.b32.xlu0 %v675, 16
      %v837 = vpop.permute.xlu0 %836
      %838 = vrot.lane.b32.xlu0 %v687, 16
      %v839 = vpop.permute.xlu0 %838
      %840 = vrot.lane.b32.xlu0 %v699, 16
      %v841 = vpop.permute.xlu0 %840
      %842 = vrot.lane.b32.xlu0 %v711, 16
      %v843 = vpop.permute.xlu0 %842
      %844 = vrot.lane.b32.xlu0 %v723, 16
      %v845 = vpop.permute.xlu0 %844
      %846 = vrot.lane.b32.xlu0 %v735, 16
      %v847 = vpop.permute.xlu0 %846
      %848 = vrot.lane.b32.xlu0 %v747, 16
      %v849 = vpop.permute.xlu0 %848
      %850 = vrot.lane.b32.xlu0 %v759, 16
      %v851 = vpop.permute.xlu0 %850
      %852 = vrot.lane.b32.xlu0 %v771, 16
      %v853 = vpop.permute.xlu0 %852
      %854 = vrot.lane.b32.xlu0 %v783, 16
      %v855 = vpop.permute.xlu0 %854
      %856 = vrot.lane.b32.xlu0 %v795, 16
      %v857 = vpop.permute.xlu0 %856
      %858 = vrot.lane.b32.xlu0 %v807, 16
      %v859 = vpop.permute.xlu0 %858
      %860 = vrot.lane.b32.xlu0 %v819, 16
      %v861 = vpop.permute.xlu0 %860
      %862 = vrot.lane.b32.xlu0 %v831, 16
      %v863 = vpop.permute.xlu0 %862
      %v880 = vunpack.c.l.b16 %v365
      %v881 = vunpack.c.l.b16 %v366
      %v882 = vunpack.c.l.b16 %v367
      %v883 = vunpack.c.l.b16 %v368
      %v884 = vunpack.c.l.b16 %v369
      %v885 = vunpack.c.l.b16 %v370
      %v886 = vunpack.c.l.b16 %v371
      %v887 = vunpack.c.l.b16 %v372
      %v888 = vunpack.c.l.b16 %v373
      %v889 = vunpack.c.l.b16 %v374
      %v890 = vunpack.c.l.b16 %v375
      %v891 = vunpack.c.l.b16 %v376
      %v892 = vunpack.c.l.b16 %v377
      %v893 = vunpack.c.l.b16 %v378
      %v894 = vunpack.c.l.b16 %v379
      %v895 = vunpack.c.l.b16 %v380
      %v896 = vpack.c.b16 %v544, %v880
      %v897 = vpack.c.b16 %v546, %v881
      %v898 = vpack.c.b16 %v548, %v882
      %v899 = vpack.c.b16 %v550, %v883
      %v900 = vpack.c.b16 %v552, %v884
      %v901 = vpack.c.b16 %v554, %v885
      %v902 = vpack.c.b16 %v556, %v886
      %v903 = vpack.c.b16 %v558, %v887
      %v904 = vpack.c.b16 %v560, %v888
      %v905 = vpack.c.b16 %v562, %v889
      %v906 = vpack.c.b16 %v564, %v890
      %v907 = vpack.c.b16 %v566, %v891
      %v908 = vpack.c.b16 %v568, %v892
      %v909 = vpack.c.b16 %v570, %v893
      %v910 = vpack.c.b16 %v572, %v894
      %v911 = vpack.c.b16 %v574, %v895
      %vm912 = vcmask 1046528
      %v913 = vrot.slane %v896, 1
      %v914 = vrot.slane %v623, 1
      %v915 = vsel %vm912, %v913, %v914
      %v916 = vrot.slane %v897, 1
      %v917 = vrot.slane %v624, 1
      %v918 = vsel %vm912, %v916, %v917
      %v919 = vrot.slane %v898, 1
      %v920 = vrot.slane %v625, 1
      %v921 = vsel %vm912, %v919, %v920
      %v922 = vrot.slane %v899, 1
      %v923 = vrot.slane %v626, 1
      %v924 = vsel %vm912, %v922, %v923
      %v925 = vrot.slane %v900, 1
      %v926 = vrot.slane %v627, 1
      %v927 = vsel %vm912, %v925, %v926
      %v928 = vrot.slane %v901, 1
      %v929 = vrot.slane %v628, 1
      %v930 = vsel %vm912, %v928, %v929
      %v931 = vrot.slane %v902, 1
      %v932 = vrot.slane %v629, 1
      %v933 = vsel %vm912, %v931, %v932
      %v934 = vrot.slane %v903, 1
      %v935 = vrot.slane %v630, 1
      %v936 = vsel %vm912, %v934, %v935
      %v937 = vrot.slane %v904, 1
      %v938 = vrot.slane %v631, 1
      %v939 = vsel %vm912, %v937, %v938
      %v940 = vrot.slane %v905, 1
      %v941 = vrot.slane %v632, 1
      %v942 = vsel %vm912, %v940, %v941
      %v943 = vrot.slane %v906, 1
      %v944 = vrot.slane %v633, 1
      %v945 = vsel %vm912, %v943, %v944
      %v946 = vrot.slane %v907, 1
      %v947 = vrot.slane %v634, 1
      %v948 = vsel %vm912, %v946, %v947
      %v949 = vrot.slane %v908, 1
      %v950 = vrot.slane %v635, 1
      %v951 = vsel %vm912, %v949, %v950
      %v952 = vrot.slane %v909, 1
      %v953 = vrot.slane %v636, 1
      %v954 = vsel %vm912, %v952, %v953
      %v955 = vrot.slane %v910, 1
      %v956 = vrot.slane %v637, 1
      %v957 = vsel %vm912, %v955, %v956
      %v958 = vrot.slane %v911, 1
      %v959 = vrot.slane %v638, 1
      %v960 = vsel %vm912, %v958, %v959
      %961 = vrot.lane.b32.xlu0 %v915, 32
      %v962 = vpop.permute.xlu0 %961
      %963 = vrot.lane.b32.xlu0 %v918, 32
      %v964 = vpop.permute.xlu0 %963
      %965 = vrot.lane.b32.xlu0 %v921, 32
      %v966 = vpop.permute.xlu0 %965
      %967 = vrot.lane.b32.xlu0 %v924, 32
      %v968 = vpop.permute.xlu0 %967
      %969 = vrot.lane.b32.xlu0 %v927, 32
      %v970 = vpop.permute.xlu0 %969
      %971 = vrot.lane.b32.xlu0 %v930, 32
      %v972 = vpop.permute.xlu0 %971
      %973 = vrot.lane.b32.xlu0 %v933, 32
      %v974 = vpop.permute.xlu0 %973
      %975 = vrot.lane.b32.xlu0 %v936, 32
      %v976 = vpop.permute.xlu0 %975
      %977 = vrot.lane.b32.xlu0 %v939, 32
      %v978 = vpop.permute.xlu0 %977
      %979 = vrot.lane.b32.xlu0 %v942, 32
      %v980 = vpop.permute.xlu0 %979
      %981 = vrot.lane.b32.xlu0 %v945, 32
      %v982 = vpop.permute.xlu0 %981
      %983 = vrot.lane.b32.xlu0 %v948, 32
      %v984 = vpop.permute.xlu0 %983
      %985 = vrot.lane.b32.xlu0 %v951, 32
      %v986 = vpop.permute.xlu0 %985
      %987 = vrot.lane.b32.xlu0 %v954, 32
      %v988 = vpop.permute.xlu0 %987
      %989 = vrot.lane.b32.xlu0 %v957, 32
      %v990 = vpop.permute.xlu0 %989
      %991 = vrot.lane.b32.xlu0 %v960, 32
      %v992 = vpop.permute.xlu0 %991
      %v1025 = vunpack.c.l.b16 %v382
      %v1026 = vunpack.c.l.b16 %v383
      %v1027 = vunpack.c.l.b16 %v384
      %v1028 = vunpack.c.l.b16 %v385
      %v1029 = vunpack.c.l.b16 %v386
      %v1030 = vunpack.c.l.b16 %v387
      %v1031 = vunpack.c.l.b16 %v388
      %v1032 = vunpack.c.l.b16 %v389
      %v1033 = vunpack.c.l.b16 %v390
      %v1034 = vunpack.c.l.b16 %v391
      %v1035 = vunpack.c.l.b16 %v392
      %v1036 = vunpack.c.l.b16 %v393
      %v1037 = vunpack.c.l.b16 %v394
      %v1038 = vunpack.c.l.b16 %v395
      %v1039 = vunpack.c.l.b16 %v396
      %v1040 = vunpack.c.l.b16 %v397
      %v1041 = vunpack.c.l.b16 %v398
      %v1042 = vunpack.c.l.b16 %v399
      %v1043 = vunpack.c.l.b16 %v400
      %v1044 = vunpack.c.l.b16 %v401
      %v1045 = vunpack.c.l.b16 %v402
      %v1046 = vunpack.c.l.b16 %v403
      %v1047 = vunpack.c.l.b16 %v404
      %v1048 = vunpack.c.l.b16 %v405
      %v1049 = vunpack.c.l.b16 %v406
      %v1050 = vunpack.c.l.b16 %v407
      %v1051 = vunpack.c.l.b16 %v408
      %v1052 = vunpack.c.l.b16 %v409
      %v1053 = vunpack.c.l.b16 %v410
      %v1054 = vunpack.c.l.b16 %v411
      %v1055 = vunpack.c.l.b16 %v412
      %v1056 = vunpack.c.l.b16 %v413
      %v1057 = vpack.c.b16 %v1026, %v1025
      %v1058 = vpack.c.b16 %v1028, %v1027
      %v1059 = vpack.c.b16 %v1030, %v1029
      %v1060 = vpack.c.b16 %v1032, %v1031
      %v1061 = vpack.c.b16 %v1034, %v1033
      %v1062 = vpack.c.b16 %v1036, %v1035
      %v1063 = vpack.c.b16 %v1038, %v1037
      %v1064 = vpack.c.b16 %v1040, %v1039
      %v1065 = vpack.c.b16 %v1042, %v1041
      %v1066 = vpack.c.b16 %v1044, %v1043
      %v1067 = vpack.c.b16 %v1046, %v1045
      %v1068 = vpack.c.b16 %v1048, %v1047
      %v1069 = vpack.c.b16 %v1050, %v1049
      %v1070 = vpack.c.b16 %v1052, %v1051
      %v1071 = vpack.c.b16 %v1054, %v1053
      %v1072 = vpack.c.b16 %v1056, %v1055
      %1073 = vrot.lane.b32.xlu0 %v1057, 48
      %v1074 = vpop.permute.xlu0 %1073
      %1075 = vrot.lane.b32.xlu0 %v1058, 48
      %v1076 = vpop.permute.xlu0 %1075
      %1077 = vrot.lane.b32.xlu0 %v1059, 48
      %v1078 = vpop.permute.xlu0 %1077
      %1079 = vrot.lane.b32.xlu0 %v1060, 48
      %v1080 = vpop.permute.xlu0 %1079
      %1081 = vrot.lane.b32.xlu0 %v1061, 48
      %v1082 = vpop.permute.xlu0 %1081
      %1083 = vrot.lane.b32.xlu0 %v1062, 48
      %v1084 = vpop.permute.xlu0 %1083
      %1085 = vrot.lane.b32.xlu0 %v1063, 48
      %v1086 = vpop.permute.xlu0 %1085
      %1087 = vrot.lane.b32.xlu0 %v1064, 48
      %v1088 = vpop.permute.xlu0 %1087
      %1089 = vrot.lane.b32.xlu0 %v1065, 48
      %v1090 = vpop.permute.xlu0 %1089
      %1091 = vrot.lane.b32.xlu0 %v1066, 48
      %v1092 = vpop.permute.xlu0 %1091
      %1093 = vrot.lane.b32.xlu0 %v1067, 48
      %v1094 = vpop.permute.xlu0 %1093
      %1095 = vrot.lane.b32.xlu0 %v1068, 48
      %v1096 = vpop.permute.xlu0 %1095
      %1097 = vrot.lane.b32.xlu0 %v1069, 48
      %v1098 = vpop.permute.xlu0 %1097
      %1099 = vrot.lane.b32.xlu0 %v1070, 48
      %v1100 = vpop.permute.xlu0 %1099
      %1101 = vrot.lane.b32.xlu0 %v1071, 48
      %v1102 = vpop.permute.xlu0 %1101
      %1103 = vrot.lane.b32.xlu0 %v1072, 48
      %v1104 = vpop.permute.xlu0 %1103
      %v1121 = vunpack.c.l.b16 %v414
      %v1122 = vunpack.c.l.b16 %v415
      %v1123 = vunpack.c.l.b16 %v416
      %v1124 = vunpack.c.l.b16 %v417
      %v1125 = vunpack.c.l.b16 %v418
      %v1126 = vunpack.c.l.b16 %v419
      %v1127 = vunpack.c.l.b16 %v420
      %v1128 = vunpack.c.l.b16 %v421
      %v1129 = vunpack.c.l.b16 %v422
      %v1130 = vunpack.c.l.b16 %v423
      %v1131 = vunpack.c.l.b16 %v424
      %v1132 = vunpack.c.l.b16 %v425
      %v1133 = vunpack.c.l.b16 %v426
      %v1134 = vunpack.c.l.b16 %v427
      %v1135 = vunpack.c.l.b16 %v428
      %v1136 = vunpack.c.l.b16 %v429
      %v1137 = vpack.c.b16 %v1121, %v1121
      %v1138 = vpack.c.b16 %v1122, %v1122
      %v1139 = vpack.c.b16 %v1123, %v1123
      %v1140 = vpack.c.b16 %v1124, %v1124
      %v1141 = vpack.c.b16 %v1125, %v1125
      %v1142 = vpack.c.b16 %v1126, %v1126
      %v1143 = vpack.c.b16 %v1127, %v1127
      %v1144 = vpack.c.b16 %v1128, %v1128
      %v1145 = vpack.c.b16 %v1129, %v1129
      %v1146 = vpack.c.b16 %v1130, %v1130
      %v1147 = vpack.c.b16 %v1131, %v1131
      %v1148 = vpack.c.b16 %v1132, %v1132
      %v1149 = vpack.c.b16 %v1133, %v1133
      %v1150 = vpack.c.b16 %v1134, %v1134
      %v1151 = vpack.c.b16 %v1135, %v1135
      %v1152 = vpack.c.b16 %v1136, %v1136
      %v1154 = vshrl.u32 %v1057, 16
      %v1156 = vshll.u32 %v1057, 16
      %v1158 = vrot.slane %v1156, 1
      %v1159 = vor.u32 %v1154, %v1158
      %v1161 = vshll.u32 %v1137, 16
      %v1163 = vrot.slane %v1161, 1
      %v1164 = vsel %vm639, %v1159, %v1163
      %v1166 = vshrl.u32 %v1058, 16
      %v1168 = vshll.u32 %v1058, 16
      %v1170 = vrot.slane %v1168, 1
      %v1171 = vor.u32 %v1166, %v1170
      %v1173 = vshll.u32 %v1138, 16
      %v1175 = vrot.slane %v1173, 1
      %v1176 = vsel %vm639, %v1171, %v1175
      %v1178 = vshrl.u32 %v1059, 16
      %v1180 = vshll.u32 %v1059, 16
      %v1182 = vrot.slane %v1180, 1
      %v1183 = vor.u32 %v1178, %v1182
      %v1185 = vshll.u32 %v1139, 16
      %v1187 = vrot.slane %v1185, 1
      %v1188 = vsel %vm639, %v1183, %v1187
      %v1190 = vshrl.u32 %v1060, 16
      %v1192 = vshll.u32 %v1060, 16
      %v1194 = vrot.slane %v1192, 1
      %v1195 = vor.u32 %v1190, %v1194
      %v1197 = vshll.u32 %v1140, 16
      %v1199 = vrot.slane %v1197, 1
      %v1200 = vsel %vm639, %v1195, %v1199
      %v1202 = vshrl.u32 %v1061, 16
      %v1204 = vshll.u32 %v1061, 16
      %v1206 = vrot.slane %v1204, 1
      %v1207 = vor.u32 %v1202, %v1206
      %v1209 = vshll.u32 %v1141, 16
      %v1211 = vrot.slane %v1209, 1
      %v1212 = vsel %vm639, %v1207, %v1211
      %v1214 = vshrl.u32 %v1062, 16
      %v1216 = vshll.u32 %v1062, 16
      %v1218 = vrot.slane %v1216, 1
      %v1219 = vor.u32 %v1214, %v1218
      %v1221 = vshll.u32 %v1142, 16
      %v1223 = vrot.slane %v1221, 1
      %v1224 = vsel %vm639, %v1219, %v1223
      %v1226 = vshrl.u32 %v1063, 16
      %v1228 = vshll.u32 %v1063, 16
      %v1230 = vrot.slane %v1228, 1
      %v1231 = vor.u32 %v1226, %v1230
      %v1233 = vshll.u32 %v1143, 16
      %v1235 = vrot.slane %v1233, 1
      %v1236 = vsel %vm639, %v1231, %v1235
      %v1238 = vshrl.u32 %v1064, 16
      %v1240 = vshll.u32 %v1064, 16
      %v1242 = vrot.slane %v1240, 1
      %v1243 = vor.u32 %v1238, %v1242
      %v1245 = vshll.u32 %v1144, 16
      %v1247 = vrot.slane %v1245, 1
      %v1248 = vsel %vm639, %v1243, %v1247
      %v1250 = vshrl.u32 %v1065, 16
      %v1252 = vshll.u32 %v1065, 16
      %v1254 = vrot.slane %v1252, 1
      %v1255 = vor.u32 %v1250, %v1254
      %v1257 = vshll.u32 %v1145, 16
      %v1259 = vrot.slane %v1257, 1
      %v1260 = vsel %vm639, %v1255, %v1259
      %v1262 = vshrl.u32 %v1066, 16
      %v1264 = vshll.u32 %v1066, 16
      %v1266 = vrot.slane %v1264, 1
      %v1267 = vor.u32 %v1262, %v1266
      %v1269 = vshll.u32 %v1146, 16
      %v1271 = vrot.slane %v1269, 1
      %v1272 = vsel %vm639, %v1267, %v1271
      %v1274 = vshrl.u32 %v1067, 16
      %v1276 = vshll.u32 %v1067, 16
      %v1278 = vrot.slane %v1276, 1
      %v1279 = vor.u32 %v1274, %v1278
      %v1281 = vshll.u32 %v1147, 16
      %v1283 = vrot.slane %v1281, 1
      %v1284 = vsel %vm639, %v1279, %v1283
      %v1286 = vshrl.u32 %v1068, 16
      %v1288 = vshll.u32 %v1068, 16
      %v1290 = vrot.slane %v1288, 1
      %v1291 = vor.u32 %v1286, %v1290
      %v1293 = vshll.u32 %v1148, 16
      %v1295 = vrot.slane %v1293, 1
      %v1296 = vsel %vm639, %v1291, %v1295
      %v1298 = vshrl.u32 %v1069, 16
      %v1300 = vshll.u32 %v1069, 16
      %v1302 = vrot.slane %v1300, 1
      %v1303 = vor.u32 %v1298, %v1302
      %v1305 = vshll.u32 %v1149, 16
      %v1307 = vrot.slane %v1305, 1
      %v1308 = vsel %vm639, %v1303, %v1307
      %v1310 = vshrl.u32 %v1070, 16
      %v1312 = vshll.u32 %v1070, 16
      %v1314 = vrot.slane %v1312, 1
      %v1315 = vor.u32 %v1310, %v1314
      %v1317 = vshll.u32 %v1150, 16
      %v1319 = vrot.slane %v1317, 1
      %v1320 = vsel %vm639, %v1315, %v1319
      %v1322 = vshrl.u32 %v1071, 16
      %v1324 = vshll.u32 %v1071, 16
      %v1326 = vrot.slane %v1324, 1
      %v1327 = vor.u32 %v1322, %v1326
      %v1329 = vshll.u32 %v1151, 16
      %v1331 = vrot.slane %v1329, 1
      %v1332 = vsel %vm639, %v1327, %v1331
      %v1334 = vshrl.u32 %v1072, 16
      %v1336 = vshll.u32 %v1072, 16
      %v1338 = vrot.slane %v1336, 1
      %v1339 = vor.u32 %v1334, %v1338
      %v1341 = vshll.u32 %v1152, 16
      %v1343 = vrot.slane %v1341, 1
      %v1344 = vsel %vm639, %v1339, %v1343
      %1345 = vrot.lane.b32.xlu0 %v1164, 64
      %v1346 = vpop.permute.xlu0 %1345
      %1347 = vrot.lane.b32.xlu0 %v1176, 64
      %v1348 = vpop.permute.xlu0 %1347
      %1349 = vrot.lane.b32.xlu0 %v1188, 64
      %v1350 = vpop.permute.xlu0 %1349
      %1351 = vrot.lane.b32.xlu0 %v1200, 64
      %v1352 = vpop.permute.xlu0 %1351
      %1353 = vrot.lane.b32.xlu0 %v1212, 64
      %v1354 = vpop.permute.xlu0 %1353
      %1355 = vrot.lane.b32.xlu0 %v1224, 64
      %v1356 = vpop.permute.xlu0 %1355
      %1357 = vrot.lane.b32.xlu0 %v1236, 64
      %v1358 = vpop.permute.xlu0 %1357
      %1359 = vrot.lane.b32.xlu0 %v1248, 64
      %v1360 = vpop.permute.xlu0 %1359
      %1361 = vrot.lane.b32.xlu0 %v1260, 64
      %v1362 = vpop.permute.xlu0 %1361
      %1363 = vrot.lane.b32.xlu0 %v1272, 64
      %v1364 = vpop.permute.xlu0 %1363
      %1365 = vrot.lane.b32.xlu0 %v1284, 64
      %v1366 = vpop.permute.xlu0 %1365
      %1367 = vrot.lane.b32.xlu0 %v1296, 64
      %v1368 = vpop.permute.xlu0 %1367
      %1369 = vrot.lane.b32.xlu0 %v1308, 64
      %v1370 = vpop.permute.xlu0 %1369
      %1371 = vrot.lane.b32.xlu0 %v1320, 64
      %v1372 = vpop.permute.xlu0 %1371
      %1373 = vrot.lane.b32.xlu0 %v1332, 64
      %v1374 = vpop.permute.xlu0 %1373
      %1375 = vrot.lane.b32.xlu0 %v1344, 64
      %v1376 = vpop.permute.xlu0 %1375
      %v1393 = vunpack.c.l.b16 %v430
      %v1394 = vunpack.c.l.b16 %v431
      %v1395 = vunpack.c.l.b16 %v432
      %v1396 = vunpack.c.l.b16 %v433
      %v1397 = vunpack.c.l.b16 %v434
      %v1398 = vunpack.c.l.b16 %v435
      %v1399 = vunpack.c.l.b16 %v436
      %v1400 = vunpack.c.l.b16 %v437
      %v1401 = vunpack.c.l.b16 %v438
      %v1402 = vunpack.c.l.b16 %v439
      %v1403 = vunpack.c.l.b16 %v440
      %v1404 = vunpack.c.l.b16 %v441
      %v1405 = vunpack.c.l.b16 %v442
      %v1406 = vunpack.c.l.b16 %v443
      %v1407 = vunpack.c.l.b16 %v444
      %v1408 = vunpack.c.l.b16 %v445
      %v1409 = vpack.c.b16 %v1026, %v1393
      %v1410 = vpack.c.b16 %v1028, %v1394
      %v1411 = vpack.c.b16 %v1030, %v1395
      %v1412 = vpack.c.b16 %v1032, %v1396
      %v1413 = vpack.c.b16 %v1034, %v1397
      %v1414 = vpack.c.b16 %v1036, %v1398
      %v1415 = vpack.c.b16 %v1038, %v1399
      %v1416 = vpack.c.b16 %v1040, %v1400
      %v1417 = vpack.c.b16 %v1042, %v1401
      %v1418 = vpack.c.b16 %v1044, %v1402
      %v1419 = vpack.c.b16 %v1046, %v1403
      %v1420 = vpack.c.b16 %v1048, %v1404
      %v1421 = vpack.c.b16 %v1050, %v1405
      %v1422 = vpack.c.b16 %v1052, %v1406
      %v1423 = vpack.c.b16 %v1054, %v1407
      %v1424 = vpack.c.b16 %v1056, %v1408
      %v1425 = vrot.slane %v1409, 1
      %v1426 = vrot.slane %v1137, 1
      %v1427 = vsel %vm912, %v1425, %v1426
      %v1428 = vrot.slane %v1410, 1
      %v1429 = vrot.slane %v1138, 1
      %v1430 = vsel %vm912, %v1428, %v1429
      %v1431 = vrot.slane %v1411, 1
      %v1432 = vrot.slane %v1139, 1
      %v1433 = vsel %vm912, %v1431, %v1432
      %v1434 = vrot.slane %v1412, 1
      %v1435 = vrot.slane %v1140, 1
      %v1436 = vsel %vm912, %v1434, %v1435
      %v1437 = vrot.slane %v1413, 1
      %v1438 = vrot.slane %v1141, 1
      %v1439 = vsel %vm912, %v1437, %v1438
      %v1440 = vrot.slane %v1414, 1
      %v1441 = vrot.slane %v1142, 1
      %v1442 = vsel %vm912, %v1440, %v1441
      %v1443 = vrot.slane %v1415, 1
      %v1444 = vrot.slane %v1143, 1
      %v1445 = vsel %vm912, %v1443, %v1444
      %v1446 = vrot.slane %v1416, 1
      %v1447 = vrot.slane %v1144, 1
      %v1448 = vsel %vm912, %v1446, %v1447
      %v1449 = vrot.slane %v1417, 1
      %v1450 = vrot.slane %v1145, 1
      %v1451 = vsel %vm912, %v1449, %v1450
      %v1452 = vrot.slane %v1418, 1
      %v1453 = vrot.slane %v1146, 1
      %v1454 = vsel %vm912, %v1452, %v1453
      %v1455 = vrot.slane %v1419, 1
      %v1456 = vrot.slane %v1147, 1
      %v1457 = vsel %vm912, %v1455, %v1456
      %v1458 = vrot.slane %v1420, 1
      %v1459 = vrot.slane %v1148, 1
      %v1460 = vsel %vm912, %v1458, %v1459
      %v1461 = vrot.slane %v1421, 1
      %v1462 = vrot.slane %v1149, 1
      %v1463 = vsel %vm912, %v1461, %v1462
      %v1464 = vrot.slane %v1422, 1
      %v1465 = vrot.slane %v1150, 1
      %v1466 = vsel %vm912, %v1464, %v1465
      %v1467 = vrot.slane %v1423, 1
      %v1468 = vrot.slane %v1151, 1
      %v1469 = vsel %vm912, %v1467, %v1468
      %v1470 = vrot.slane %v1424, 1
      %v1471 = vrot.slane %v1152, 1
      %v1472 = vsel %vm912, %v1470, %v1471
      %1473 = vrot.lane.b32.xlu0 %v1427, 80
      %v1474 = vpop.permute.xlu0 %1473
      %1475 = vrot.lane.b32.xlu0 %v1430, 80
      %v1476 = vpop.permute.xlu0 %1475
      %1477 = vrot.lane.b32.xlu0 %v1433, 80
      %v1478 = vpop.permute.xlu0 %1477
      %1479 = vrot.lane.b32.xlu0 %v1436, 80
      %v1480 = vpop.permute.xlu0 %1479
      %1481 = vrot.lane.b32.xlu0 %v1439, 80
      %v1482 = vpop.permute.xlu0 %1481
      %1483 = vrot.lane.b32.xlu0 %v1442, 80
      %v1484 = vpop.permute.xlu0 %1483
      %1485 = vrot.lane.b32.xlu0 %v1445, 80
      %v1486 = vpop.permute.xlu0 %1485
      %1487 = vrot.lane.b32.xlu0 %v1448, 80
      %v1488 = vpop.permute.xlu0 %1487
      %1489 = vrot.lane.b32.xlu0 %v1451, 80
      %v1490 = vpop.permute.xlu0 %1489
      %1491 = vrot.lane.b32.xlu0 %v1454, 80
      %v1492 = vpop.permute.xlu0 %1491
      %1493 = vrot.lane.b32.xlu0 %v1457, 80
      %v1494 = vpop.permute.xlu0 %1493
      %1495 = vrot.lane.b32.xlu0 %v1460, 80
      %v1496 = vpop.permute.xlu0 %1495
      %1497 = vrot.lane.b32.xlu0 %v1463, 80
      %v1498 = vpop.permute.xlu0 %1497
      %1499 = vrot.lane.b32.xlu0 %v1466, 80
      %v1500 = vpop.permute.xlu0 %1499
      %1501 = vrot.lane.b32.xlu0 %v1469, 80
      %v1502 = vpop.permute.xlu0 %1501
      %1503 = vrot.lane.b32.xlu0 %v1472, 80
      %v1504 = vpop.permute.xlu0 %1503
      %v1537 = vunpack.c.l.b16 %v447
      %v1538 = vunpack.c.l.b16 %v448
      %v1539 = vunpack.c.l.b16 %v449
      %v1540 = vunpack.c.l.b16 %v450
      %v1541 = vunpack.c.l.b16 %v451
      %v1542 = vunpack.c.l.b16 %v452
      %v1543 = vunpack.c.l.b16 %v453
      %v1544 = vunpack.c.l.b16 %v454
      %v1545 = vunpack.c.l.b16 %v455
      %v1546 = vunpack.c.l.b16 %v456
      %v1547 = vunpack.c.l.b16 %v457
      %v1548 = vunpack.c.l.b16 %v458
      %v1549 = vunpack.c.l.b16 %v459
      %v1550 = vunpack.c.l.b16 %v460
      %v1551 = vunpack.c.l.b16 %v461
      %v1552 = vunpack.c.l.b16 %v462
      %v1553 = vunpack.c.l.b16 %v463
      %v1554 = vunpack.c.l.b16 %v464
      %v1555 = vunpack.c.l.b16 %v465
      %v1556 = vunpack.c.l.b16 %v466
      %v1557 = vunpack.c.l.b16 %v467
      %v1558 = vunpack.c.l.b16 %v468
      %v1559 = vunpack.c.l.b16 %v469
      %v1560 = vunpack.c.l.b16 %v470
      %v1561 = vunpack.c.l.b16 %v471
      %v1562 = vunpack.c.l.b16 %v472
      %v1563 = vunpack.c.l.b16 %v473
      %v1564 = vunpack.c.l.b16 %v474
      %v1565 = vunpack.c.l.b16 %v475
      %v1566 = vunpack.c.l.b16 %v476
      %v1567 = vunpack.c.l.b16 %v477
      %v1568 = vunpack.c.l.b16 %v478
      %v1569 = vpack.c.b16 %v1538, %v1537
      %v1570 = vpack.c.b16 %v1540, %v1539
      %v1571 = vpack.c.b16 %v1542, %v1541
      %v1572 = vpack.c.b16 %v1544, %v1543
      %v1573 = vpack.c.b16 %v1546, %v1545
      %v1574 = vpack.c.b16 %v1548, %v1547
      %v1575 = vpack.c.b16 %v1550, %v1549
      %v1576 = vpack.c.b16 %v1552, %v1551
      %v1577 = vpack.c.b16 %v1554, %v1553
      %v1578 = vpack.c.b16 %v1556, %v1555
      %v1579 = vpack.c.b16 %v1558, %v1557
      %v1580 = vpack.c.b16 %v1560, %v1559
      %v1581 = vpack.c.b16 %v1562, %v1561
      %v1582 = vpack.c.b16 %v1564, %v1563
      %v1583 = vpack.c.b16 %v1566, %v1565
      %v1584 = vpack.c.b16 %v1568, %v1567
      %1585 = vrot.lane.b32.xlu0 %v1569, 96
      %v1586 = vpop.permute.xlu0 %1585
      %1587 = vrot.lane.b32.xlu0 %v1570, 96
      %v1588 = vpop.permute.xlu0 %1587
      %1589 = vrot.lane.b32.xlu0 %v1571, 96
      %v1590 = vpop.permute.xlu0 %1589
      %1591 = vrot.lane.b32.xlu0 %v1572, 96
      %v1592 = vpop.permute.xlu0 %1591
      %1593 = vrot.lane.b32.xlu0 %v1573, 96
      %v1594 = vpop.permute.xlu0 %1593
      %1595 = vrot.lane.b32.xlu0 %v1574, 96
      %v1596 = vpop.permute.xlu0 %1595
      %1597 = vrot.lane.b32.xlu0 %v1575, 96
      %v1598 = vpop.permute.xlu0 %1597
      %1599 = vrot.lane.b32.xlu0 %v1576, 96
      %v1600 = vpop.permute.xlu0 %1599
      %1601 = vrot.lane.b32.xlu0 %v1577, 96
      %v1602 = vpop.permute.xlu0 %1601
      %1603 = vrot.lane.b32.xlu0 %v1578, 96
      %v1604 = vpop.permute.xlu0 %1603
      %1605 = vrot.lane.b32.xlu0 %v1579, 96
      %v1606 = vpop.permute.xlu0 %1605
      %1607 = vrot.lane.b32.xlu0 %v1580, 96
      %v1608 = vpop.permute.xlu0 %1607
      %1609 = vrot.lane.b32.xlu0 %v1581, 96
      %v1610 = vpop.permute.xlu0 %1609
      %1611 = vrot.lane.b32.xlu0 %v1582, 96
      %v1612 = vpop.permute.xlu0 %1611
      %1613 = vrot.lane.b32.xlu0 %v1583, 96
      %v1614 = vpop.permute.xlu0 %1613
      %1615 = vrot.lane.b32.xlu0 %v1584, 96
      %v1616 = vpop.permute.xlu0 %1615
      %v1633 = vunpack.c.l.b16 %v479
      %v1634 = vunpack.c.l.b16 %v480
      %v1635 = vunpack.c.l.b16 %v481
      %v1636 = vunpack.c.l.b16 %v482
      %v1637 = vunpack.c.l.b16 %v483
      %v1638 = vunpack.c.l.b16 %v484
      %v1639 = vunpack.c.l.b16 %v485
      %v1640 = vunpack.c.l.b16 %v486
      %v1641 = vunpack.c.l.b16 %v487
      %v1642 = vunpack.c.l.b16 %v488
      %v1643 = vunpack.c.l.b16 %v489
      %v1644 = vunpack.c.l.b16 %v490
      %v1645 = vunpack.c.l.b16 %v491
      %v1646 = vunpack.c.l.b16 %v492
      %v1647 = vunpack.c.l.b16 %v493
      %v1648 = vunpack.c.l.b16 %v494
      %v1649 = vpack.c.b16 %v1633, %v1633
      %v1650 = vpack.c.b16 %v1634, %v1634
      %v1651 = vpack.c.b16 %v1635, %v1635
      %v1652 = vpack.c.b16 %v1636, %v1636
      %v1653 = vpack.c.b16 %v1637, %v1637
      %v1654 = vpack.c.b16 %v1638, %v1638
      %v1655 = vpack.c.b16 %v1639, %v1639
      %v1656 = vpack.c.b16 %v1640, %v1640
      %v1657 = vpack.c.b16 %v1641, %v1641
      %v1658 = vpack.c.b16 %v1642, %v1642
      %v1659 = vpack.c.b16 %v1643, %v1643
      %v1660 = vpack.c.b16 %v1644, %v1644
      %v1661 = vpack.c.b16 %v1645, %v1645
      %v1662 = vpack.c.b16 %v1646, %v1646
      %v1663 = vpack.c.b16 %v1647, %v1647
      %v1664 = vpack.c.b16 %v1648, %v1648
      %v1666 = vshrl.u32 %v1569, 16
      %v1668 = vshll.u32 %v1569, 16
      %v1670 = vrot.slane %v1668, 1
      %v1671 = vor.u32 %v1666, %v1670
      %v1673 = vshll.u32 %v1649, 16
      %v1675 = vrot.slane %v1673, 1
      %v1676 = vsel %vm639, %v1671, %v1675
      %v1678 = vshrl.u32 %v1570, 16
      %v1680 = vshll.u32 %v1570, 16
      %v1682 = vrot.slane %v1680, 1
      %v1683 = vor.u32 %v1678, %v1682
      %v1685 = vshll.u32 %v1650, 16
      %v1687 = vrot.slane %v1685, 1
      %v1688 = vsel %vm639, %v1683, %v1687
      %v1690 = vshrl.u32 %v1571, 16
      %v1692 = vshll.u32 %v1571, 16
      %v1694 = vrot.slane %v1692, 1
      %v1695 = vor.u32 %v1690, %v1694
      %v1697 = vshll.u32 %v1651, 16
      %v1699 = vrot.slane %v1697, 1
      %v1700 = vsel %vm639, %v1695, %v1699
      %v1702 = vshrl.u32 %v1572, 16
      %v1704 = vshll.u32 %v1572, 16
      %v1706 = vrot.slane %v1704, 1
      %v1707 = vor.u32 %v1702, %v1706
      %v1709 = vshll.u32 %v1652, 16
      %v1711 = vrot.slane %v1709, 1
      %v1712 = vsel %vm639, %v1707, %v1711
      %v1714 = vshrl.u32 %v1573, 16
      %v1716 = vshll.u32 %v1573, 16
      %v1718 = vrot.slane %v1716, 1
      %v1719 = vor.u32 %v1714, %v1718
      %v1721 = vshll.u32 %v1653, 16
      %v1723 = vrot.slane %v1721, 1
      %v1724 = vsel %vm639, %v1719, %v1723
      %v1726 = vshrl.u32 %v1574, 16
      %v1728 = vshll.u32 %v1574, 16
      %v1730 = vrot.slane %v1728, 1
      %v1731 = vor.u32 %v1726, %v1730
      %v1733 = vshll.u32 %v1654, 16
      %v1735 = vrot.slane %v1733, 1
      %v1736 = vsel %vm639, %v1731, %v1735
      %v1738 = vshrl.u32 %v1575, 16
      %v1740 = vshll.u32 %v1575, 16
      %v1742 = vrot.slane %v1740, 1
      %v1743 = vor.u32 %v1738, %v1742
      %v1745 = vshll.u32 %v1655, 16
      %v1747 = vrot.slane %v1745, 1
      %v1748 = vsel %vm639, %v1743, %v1747
      %v1750 = vshrl.u32 %v1576, 16
      %v1752 = vshll.u32 %v1576, 16
      %v1754 = vrot.slane %v1752, 1
      %v1755 = vor.u32 %v1750, %v1754
      %v1757 = vshll.u32 %v1656, 16
      %v1759 = vrot.slane %v1757, 1
      %v1760 = vsel %vm639, %v1755, %v1759
      %v1762 = vshrl.u32 %v1577, 16
      %v1764 = vshll.u32 %v1577, 16
      %v1766 = vrot.slane %v1764, 1
      %v1767 = vor.u32 %v1762, %v1766
      %v1769 = vshll.u32 %v1657, 16
      %v1771 = vrot.slane %v1769, 1
      %v1772 = vsel %vm639, %v1767, %v1771
      %v1774 = vshrl.u32 %v1578, 16
      %v1776 = vshll.u32 %v1578, 16
      %v1778 = vrot.slane %v1776, 1
      %v1779 = vor.u32 %v1774, %v1778
      %v1781 = vshll.u32 %v1658, 16
      %v1783 = vrot.slane %v1781, 1
      %v1784 = vsel %vm639, %v1779, %v1783
      %v1786 = vshrl.u32 %v1579, 16
      %v1788 = vshll.u32 %v1579, 16
      %v1790 = vrot.slane %v1788, 1
      %v1791 = vor.u32 %v1786, %v1790
      %v1793 = vshll.u32 %v1659, 16
      %v1795 = vrot.slane %v1793, 1
      %v1796 = vsel %vm639, %v1791, %v1795
      %v1798 = vshrl.u32 %v1580, 16
      %v1800 = vshll.u32 %v1580, 16
      %v1802 = vrot.slane %v1800, 1
      %v1803 = vor.u32 %v1798, %v1802
      %v1805 = vshll.u32 %v1660, 16
      %v1807 = vrot.slane %v1805, 1
      %v1808 = vsel %vm639, %v1803, %v1807
      %v1810 = vshrl.u32 %v1581, 16
      %v1812 = vshll.u32 %v1581, 16
      %v1814 = vrot.slane %v1812, 1
      %v1815 = vor.u32 %v1810, %v1814
      %v1817 = vshll.u32 %v1661, 16
      %v1819 = vrot.slane %v1817, 1
      %v1820 = vsel %vm639, %v1815, %v1819
      %v1822 = vshrl.u32 %v1582, 16
      %v1824 = vshll.u32 %v1582, 16
      %v1826 = vrot.slane %v1824, 1
      %v1827 = vor.u32 %v1822, %v1826
      %v1829 = vshll.u32 %v1662, 16
      %v1831 = vrot.slane %v1829, 1
      %v1832 = vsel %vm639, %v1827, %v1831
      %v1834 = vshrl.u32 %v1583, 16
      %v1836 = vshll.u32 %v1583, 16
      %v1838 = vrot.slane %v1836, 1
      %v1839 = vor.u32 %v1834, %v1838
      %v1841 = vshll.u32 %v1663, 16
      %v1843 = vrot.slane %v1841, 1
      %v1844 = vsel %vm639, %v1839, %v1843
      %v1846 = vshrl.u32 %v1584, 16
      %v1848 = vshll.u32 %v1584, 16
      %v1850 = vrot.slane %v1848, 1
      %v1851 = vor.u32 %v1846, %v1850
      %v1853 = vshll.u32 %v1664, 16
      %v1855 = vrot.slane %v1853, 1
      %v1856 = vsel %vm639, %v1851, %v1855
      %1857 = vrot.lane.b32.xlu0 %v1676, 112
      %v1858 = vpop.permute.xlu0 %1857
      %1859 = vrot.lane.b32.xlu0 %v1688, 112
      %v1860 = vpop.permute.xlu0 %1859
      %1861 = vrot.lane.b32.xlu0 %v1700, 112
      %v1862 = vpop.permute.xlu0 %1861
      %1863 = vrot.lane.b32.xlu0 %v1712, 112
      %v1864 = vpop.permute.xlu0 %1863
      %1865 = vrot.lane.b32.xlu0 %v1724, 112
      %v1866 = vpop.permute.xlu0 %1865
      %1867 = vrot.lane.b32.xlu0 %v1736, 112
      %v1868 = vpop.permute.xlu0 %1867
      %1869 = vrot.lane.b32.xlu0 %v1748, 112
      %v1870 = vpop.permute.xlu0 %1869
      %1871 = vrot.lane.b32.xlu0 %v1760, 112
      %v1872 = vpop.permute.xlu0 %1871
      %1873 = vrot.lane.b32.xlu0 %v1772, 112
      %v1874 = vpop.permute.xlu0 %1873
      %1875 = vrot.lane.b32.xlu0 %v1784, 112
      %v1876 = vpop.permute.xlu0 %1875
      %1877 = vrot.lane.b32.xlu0 %v1796, 112
      %v1878 = vpop.permute.xlu0 %1877
      %1879 = vrot.lane.b32.xlu0 %v1808, 112
      %v1880 = vpop.permute.xlu0 %1879
      %1881 = vrot.lane.b32.xlu0 %v1820, 112
      %v1882 = vpop.permute.xlu0 %1881
      %1883 = vrot.lane.b32.xlu0 %v1832, 112
      %v1884 = vpop.permute.xlu0 %1883
      %1885 = vrot.lane.b32.xlu0 %v1844, 112
      %v1886 = vpop.permute.xlu0 %1885
      %1887 = vrot.lane.b32.xlu0 %v1856, 112
      %v1888 = vpop.permute.xlu0 %1887
      %v1905 = vunpack.c.l.b16 %v495
      %v1906 = vunpack.c.l.b16 %v496
      %v1907 = vunpack.c.l.b16 %v497
      %v1908 = vunpack.c.l.b16 %v498
      %v1909 = vunpack.c.l.b16 %v499
      %v1910 = vunpack.c.l.b16 %v500
      %v1911 = vunpack.c.l.b16 %v501
      %v1912 = vunpack.c.l.b16 %v502
      %v1913 = vunpack.c.l.b16 %v503
      %v1914 = vunpack.c.l.b16 %v504
      %v1915 = vunpack.c.l.b16 %v505
      %v1916 = vunpack.c.l.b16 %v506
      %v1917 = vunpack.c.l.b16 %v507
      %v1918 = vunpack.c.l.b16 %v508
      %v1919 = vunpack.c.l.b16 %v509
      %v1920 = vunpack.c.l.b16 %v510
      %v1921 = vpack.c.b16 %v1538, %v1905
      %v1922 = vpack.c.b16 %v1540, %v1906
      %v1923 = vpack.c.b16 %v1542, %v1907
      %v1924 = vpack.c.b16 %v1544, %v1908
      %v1925 = vpack.c.b16 %v1546, %v1909
      %v1926 = vpack.c.b16 %v1548, %v1910
      %v1927 = vpack.c.b16 %v1550, %v1911
      %v1928 = vpack.c.b16 %v1552, %v1912
      %v1929 = vpack.c.b16 %v1554, %v1913
      %v1930 = vpack.c.b16 %v1556, %v1914
      %v1931 = vpack.c.b16 %v1558, %v1915
      %v1932 = vpack.c.b16 %v1560, %v1916
      %v1933 = vpack.c.b16 %v1562, %v1917
      %v1934 = vpack.c.b16 %v1564, %v1918
      %v1935 = vpack.c.b16 %v1566, %v1919
      %v1936 = vpack.c.b16 %v1568, %v1920
      %v1937 = vrot.slane %v1921, 1
      %v1938 = vrot.slane %v1649, 1
      %v1939 = vsel %vm912, %v1937, %v1938
      %v1940 = vrot.slane %v1922, 1
      %v1941 = vrot.slane %v1650, 1
      %v1942 = vsel %vm912, %v1940, %v1941
      %v1943 = vrot.slane %v1923, 1
      %v1944 = vrot.slane %v1651, 1
      %v1945 = vsel %vm912, %v1943, %v1944
      %v1946 = vrot.slane %v1924, 1
      %v1947 = vrot.slane %v1652, 1
      %v1948 = vsel %vm912, %v1946, %v1947
      %v1949 = vrot.slane %v1925, 1
      %v1950 = vrot.slane %v1653, 1
      %v1951 = vsel %vm912, %v1949, %v1950
      %v1952 = vrot.slane %v1926, 1
      %v1953 = vrot.slane %v1654, 1
      %v1954 = vsel %vm912, %v1952, %v1953
      %v1955 = vrot.slane %v1927, 1
      %v1956 = vrot.slane %v1655, 1
      %v1957 = vsel %vm912, %v1955, %v1956
      %v1958 = vrot.slane %v1928, 1
      %v1959 = vrot.slane %v1656, 1
      %v1960 = vsel %vm912, %v1958, %v1959
      %v1961 = vrot.slane %v1929, 1
      %v1962 = vrot.slane %v1657, 1
      %v1963 = vsel %vm912, %v1961, %v1962
      %v1964 = vrot.slane %v1930, 1
      %v1965 = vrot.slane %v1658, 1
      %v1966 = vsel %vm912, %v1964, %v1965
      %v1967 = vrot.slane %v1931, 1
      %v1968 = vrot.slane %v1659, 1
      %v1969 = vsel %vm912, %v1967, %v1968
      %v1970 = vrot.slane %v1932, 1
      %v1971 = vrot.slane %v1660, 1
      %v1972 = vsel %vm912, %v1970, %v1971
      %v1973 = vrot.slane %v1933, 1
      %v1974 = vrot.slane %v1661, 1
      %v1975 = vsel %vm912, %v1973, %v1974
      %v1976 = vrot.slane %v1934, 1
      %v1977 = vrot.slane %v1662, 1
      %v1978 = vsel %vm912, %v1976, %v1977
      %v1979 = vrot.slane %v1935, 1
      %v1980 = vrot.slane %v1663, 1
      %v1981 = vsel %vm912, %v1979, %v1980
      %v1982 = vrot.slane %v1936, 1
      %v1983 = vrot.slane %v1664, 1
      %v1984 = vsel %vm912, %v1982, %v1983
      %vm1985 = vcmask 130048
      %v1987 = vsel %vm1985, %v575, %v833
      %v1989 = vsel %vm1985, %v576, %v835
      %v1991 = vsel %vm1985, %v577, %v837
      %v1993 = vsel %vm1985, %v578, %v839
      %v1995 = vsel %vm1985, %v579, %v841
      %v1997 = vsel %vm1985, %v580, %v843
      %v1999 = vsel %vm1985, %v581, %v845
      %v2001 = vsel %vm1985, %v582, %v847
      %v2003 = vsel %vm1985, %v583, %v849
      %v2005 = vsel %vm1985, %v584, %v851
      %v2007 = vsel %vm1985, %v585, %v853
      %v2009 = vsel %vm1985, %v586, %v855
      %v2011 = vsel %vm1985, %v587, %v857
      %v2013 = vsel %vm1985, %v588, %v859
      %v2015 = vsel %vm1985, %v589, %v861
      %v2017 = vsel %vm1985, %v590, %v863
      %vm2018 = vcmask 261120
      %v2020 = vsel %vm2018, %v1987, %v962
      %v2022 = vsel %vm2018, %v1989, %v964
      %v2024 = vsel %vm2018, %v1991, %v966
      %v2026 = vsel %vm2018, %v1993, %v968
      %v2028 = vsel %vm2018, %v1995, %v970
      %v2030 = vsel %vm2018, %v1997, %v972
      %v2032 = vsel %vm2018, %v1999, %v974
      %v2034 = vsel %vm2018, %v2001, %v976
      %v2036 = vsel %vm2018, %v2003, %v978
      %v2038 = vsel %vm2018, %v2005, %v980
      %v2040 = vsel %vm2018, %v2007, %v982
      %v2042 = vsel %vm2018, %v2009, %v984
      %v2044 = vsel %vm2018, %v2011, %v986
      %v2046 = vsel %vm2018, %v2013, %v988
      %v2048 = vsel %vm2018, %v2015, %v990
      %v2050 = vsel %vm2018, %v2017, %v992
      %vm2051 = vcmask 392192
      %v2053 = vsel %vm2051, %v2020, %v1074
      %v2055 = vsel %vm2051, %v2022, %v1076
      %v2057 = vsel %vm2051, %v2024, %v1078
      %v2059 = vsel %vm2051, %v2026, %v1080
      %v2061 = vsel %vm2051, %v2028, %v1082
      %v2063 = vsel %vm2051, %v2030, %v1084
      %v2065 = vsel %vm2051, %v2032, %v1086
      %v2067 = vsel %vm2051, %v2034, %v1088
      %v2069 = vsel %vm2051, %v2036, %v1090
      %v2071 = vsel %vm2051, %v2038, %v1092
      %v2073 = vsel %vm2051, %v2040, %v1094
      %v2075 = vsel %vm2051, %v2042, %v1096
      %v2077 = vsel %vm2051, %v2044, %v1098
      %v2079 = vsel %vm2051, %v2046, %v1100
      %v2081 = vsel %vm2051, %v2048, %v1102
      %v2083 = vsel %vm2051, %v2050, %v1104
      %vm2084 = vcmask 523264
      %v2086 = vsel %vm2084, %v2053, %v1346
      %v2088 = vsel %vm2084, %v2055, %v1348
      %v2090 = vsel %vm2084, %v2057, %v1350
      %v2092 = vsel %vm2084, %v2059, %v1352
      %v2094 = vsel %vm2084, %v2061, %v1354
      %v2096 = vsel %vm2084, %v2063, %v1356
      %v2098 = vsel %vm2084, %v2065, %v1358
      %v2100 = vsel %vm2084, %v2067, %v1360
      %v2102 = vsel %vm2084, %v2069, %v1362
      %v2104 = vsel %vm2084, %v2071, %v1364
      %v2106 = vsel %vm2084, %v2073, %v1366
      %v2108 = vsel %vm2084, %v2075, %v1368
      %v2110 = vsel %vm2084, %v2077, %v1370
      %v2112 = vsel %vm2084, %v2079, %v1372
      %v2114 = vsel %vm2084, %v2081, %v1374
      %v2116 = vsel %vm2084, %v2083, %v1376
      %vm2117 = vcmask 654336
      %v2119 = vsel %vm2117, %v2086, %v1474
      %v2121 = vsel %vm2117, %v2088, %v1476
      %v2123 = vsel %vm2117, %v2090, %v1478
      %v2125 = vsel %vm2117, %v2092, %v1480
      %v2127 = vsel %vm2117, %v2094, %v1482
      %v2129 = vsel %vm2117, %v2096, %v1484
      %v2131 = vsel %vm2117, %v2098, %v1486
      %v2133 = vsel %vm2117, %v2100, %v1488
      %v2135 = vsel %vm2117, %v2102, %v1490
      %v2137 = vsel %vm2117, %v2104, %v1492
      %v2139 = vsel %vm2117, %v2106, %v1494
      %v2141 = vsel %vm2117, %v2108, %v1496
      %v2143 = vsel %vm2117, %v2110, %v1498
      %v2145 = vsel %vm2117, %v2112, %v1500
      %v2147 = vsel %vm2117, %v2114, %v1502
      %v2149 = vsel %vm2117, %v2116, %v1504
      %vm2150 = vcmask 785408
      %v2152 = vsel %vm2150, %v2119, %v1586
      %v2154 = vsel %vm2150, %v2121, %v1588
      %v2156 = vsel %vm2150, %v2123, %v1590
      %v2158 = vsel %vm2150, %v2125, %v1592
      %v2160 = vsel %vm2150, %v2127, %v1594
      %v2162 = vsel %vm2150, %v2129, %v1596
      %v2164 = vsel %vm2150, %v2131, %v1598
      %v2166 = vsel %vm2150, %v2133, %v1600
      %v2168 = vsel %vm2150, %v2135, %v1602
      %v2170 = vsel %vm2150, %v2137, %v1604
      %v2172 = vsel %vm2150, %v2139, %v1606
      %v2174 = vsel %vm2150, %v2141, %v1608
      %v2176 = vsel %vm2150, %v2143, %v1610
      %v2178 = vsel %vm2150, %v2145, %v1612
      %v2180 = vsel %vm2150, %v2147, %v1614
      %v2182 = vsel %vm2150, %v2149, %v1616
      %vm2183 = vcmask 916480
      %v2185 = vsel %vm2183, %v2152, %v1858
      %v2188 = vsel %vm2183, %v2154, %v1860
      %v2191 = vsel %vm2183, %v2156, %v1862
      %v2194 = vsel %vm2183, %v2158, %v1864
      %v2197 = vsel %vm2183, %v2160, %v1866
      %v2200 = vsel %vm2183, %v2162, %v1868
      %v2203 = vsel %vm2183, %v2164, %v1870
      %v2206 = vsel %vm2183, %v2166, %v1872
      %v2209 = vsel %vm2183, %v2168, %v1874
      %v2212 = vsel %vm2183, %v2170, %v1876
      %v2215 = vsel %vm2183, %v2172, %v1878
      %v2218 = vsel %vm2183, %v2174, %v1880
      %v2221 = vsel %vm2183, %v2176, %v1882
      %v2224 = vsel %vm2183, %v2178, %v1884
      %v2227 = vsel %vm2183, %v2180, %v1886
      %v2230 = vsel %vm2183, %v2182, %v1888
      %v2232 = vld [vmem:[%s284] sm:$0xf]
      %v2233 = vld [vmem:[%s284 + $0x4] sm:$0xf]
      %v2234 = vld [vmem:[%s284 + $0x8] sm:$0xf]
      %v2235 = vld [vmem:[%s284 + $0xc] sm:$0xf]
      %v2236 = vld [vmem:[%s284 + $0x10] sm:$0xf]
      %v2237 = vld [vmem:[%s284 + $0x14] sm:$0xf]
      %v2238 = vld [vmem:[%s284 + $0x18] sm:$0xf]
      %v2239 = vld [vmem:[%s284 + $0x1c] sm:$0xf]
      %v2240 = vld [vmem:[%s284 + $0x20] sm:$0xf]
      %v2241 = vld [vmem:[%s284 + $0x24] sm:$0xf]
      %v2242 = vld [vmem:[%s284 + $0x28] sm:$0xf]
      %v2243 = vld [vmem:[%s284 + $0x2c] sm:$0xf]
      %v2244 = vld [vmem:[%s284 + $0x30] sm:$0xf]
      %v2245 = vld [vmem:[%s284 + $0x34] sm:$0xf]
      %v2246 = vld [vmem:[%s284 + $0x38] sm:$0xf]
      %v2247 = vld [vmem:[%s284 + $0x3c] sm:$0xf]
      %v2248 = vld [vmem:[%s284 + $0x40] sm:$0xf]
      %v2249 = vld [vmem:[%s284 + $0x44] sm:$0xf]
      %v2268 = vunpack.c.l.b16 %v2232
      %v2269 = vunpack.c.l.b16 %v2233
      %v2270 = vunpack.c.l.b16 %v2234
      %v2271 = vunpack.c.l.b16 %v2235
      %v2272 = vunpack.c.l.b16 %v2236
      %v2273 = vunpack.c.l.b16 %v2237
      %v2274 = vunpack.c.l.b16 %v2238
      %v2275 = vunpack.c.l.b16 %v2239
      %v2276 = vunpack.c.l.b16 %v2240
      %v2277 = vunpack.c.l.b16 %v2241
      %v2278 = vunpack.c.l.b16 %v2242
      %v2279 = vunpack.c.l.b16 %v2243
      %v2280 = vunpack.c.l.b16 %v2244
      %v2281 = vunpack.c.l.b16 %v2245
      %v2282 = vunpack.c.l.b16 %v2246
      %v2283 = vunpack.c.l.b16 %v2247
      %v2284 = vunpack.c.l.b16 %v2248
      %v2285 = vunpack.c.l.b16 %v2249
      %v2286 = vpack.c.b16 %v2269, %v2268
      %v2287 = vpack.c.b16 %v2271, %v2270
      %v2288 = vpack.c.b16 %v2273, %v2272
      %v2289 = vpack.c.b16 %v2275, %v2274
      %v2290 = vpack.c.b16 %v2277, %v2276
      %v2291 = vpack.c.b16 %v2279, %v2278
      %v2292 = vpack.c.b16 %v2281, %v2280
      %v2293 = vpack.c.b16 %v2283, %v2282
      %v2294 = vpack.c.b16 %v2285, %v2284
      %v2305 = vsel %vm1985, %v1939, 0
      %v2308 = vsel %vm1985, %v1942, 0
      %v2311 = vsel %vm1985, %v1945, 0
      %v2314 = vsel %vm1985, %v1948, 0
      %v2317 = vsel %vm1985, %v1951, 0
      %v2320 = vsel %vm1985, %v1954, 0
      %v2323 = vsel %vm1985, %v1957, 0
      %v2326 = vsel %vm1985, %v1960, 0
      %v2329 = vsel %vm1985, %v1963, 0
      %v2332 = vsel %vm1985, %v1966, 0
      %v2335 = vsel %vm1985, %v1969, 0
      %v2338 = vsel %vm1985, %v1972, 0
      %v2341 = vsel %vm1985, %v1975, 0
      %v2344 = vsel %vm1985, %v1978, 0
      %v2347 = vsel %vm1985, %v1981, 0
      %v2350 = vsel %vm1985, %v1984, 0
      %2352 = vmatpush.bf16.msra.mxu0 %v2293
      %2353 = vmatpush.bf16.msra.mxu0 %v2292
      %2354 = vmatpush.bf16.msra.mxu0 %v2291
      %2355 = vmatpush.bf16.msra.mxu0 %v2290
      %2356 = vmatpush.bf16.msra.mxu0 %v2289
      %2357 = vmatpush.bf16.msra.mxu0 %v2288
      %2358 = vmatpush.bf16.msra.mxu0 %v2287
      %2359 = vmatpush.bf16.msra.mxu0 %v2286
      %2360 = vmatmul.bf16.gmra.mxu0 %v2185
      %v2361 = vpop.f32.mrf.mxu0
      %v2362 = vadd.f32 0.0, %v2361
      %v2363 = vpop.f32.mrf.mxu0
      %v2364 = vadd.f32 0.0, %v2363
      %2365 = vmatmul.bf16.gmra.mxu0 %v2188
      %v2366 = vpop.f32.mrf.mxu0
      %v2367 = vadd.f32 0.0, %v2366
      %v2368 = vpop.f32.mrf.mxu0
      %v2369 = vadd.f32 0.0, %v2368
      %2370 = vmatmul.bf16.gmra.mxu0 %v2191
      %v2371 = vpop.f32.mrf.mxu0
      %v2372 = vadd.f32 0.0, %v2371
      %v2373 = vpop.f32.mrf.mxu0
      %v2374 = vadd.f32 0.0, %v2373
      %2375 = vmatmul.bf16.gmra.mxu0 %v2194
      %v2376 = vpop.f32.mrf.mxu0
      %v2377 = vadd.f32 0.0, %v2376
      %v2378 = vpop.f32.mrf.mxu0
      %v2379 = vadd.f32 0.0, %v2378
      %2380 = vmatmul.bf16.gmra.mxu0 %v2197
      %v2381 = vpop.f32.mrf.mxu0
      %v2382 = vadd.f32 0.0, %v2381
      %v2383 = vpop.f32.mrf.mxu0
      %v2384 = vadd.f32 0.0, %v2383
      %2385 = vmatmul.bf16.gmra.mxu0 %v2200
      %v2386 = vpop.f32.mrf.mxu0
      %v2387 = vadd.f32 0.0, %v2386
      %v2388 = vpop.f32.mrf.mxu0
      %v2389 = vadd.f32 0.0, %v2388
      %2390 = vmatmul.bf16.gmra.mxu0 %v2203
      %v2391 = vpop.f32.mrf.mxu0
      %v2392 = vadd.f32 0.0, %v2391
      %v2393 = vpop.f32.mrf.mxu0
      %v2394 = vadd.f32 0.0, %v2393
      %2395 = vmatmul.bf16.gmra.mxu0 %v2206
      %v2396 = vpop.f32.mrf.mxu0
      %v2397 = vadd.f32 0.0, %v2396
      %v2398 = vpop.f32.mrf.mxu0
      %v2399 = vadd.f32 0.0, %v2398
      %2400 = vmatmul.bf16.gmra.mxu0 %v2209
      %v2401 = vpop.f32.mrf.mxu0
      %v2402 = vadd.f32 0.0, %v2401
      %v2403 = vpop.f32.mrf.mxu0
      %v2404 = vadd.f32 0.0, %v2403
      %2405 = vmatmul.bf16.gmra.mxu0 %v2212
      %v2406 = vpop.f32.mrf.mxu0
      %v2407 = vadd.f32 0.0, %v2406
      %v2408 = vpop.f32.mrf.mxu0
      %v2409 = vadd.f32 0.0, %v2408
      %2410 = vmatmul.bf16.gmra.mxu0 %v2215
      %v2411 = vpop.f32.mrf.mxu0
      %v2412 = vadd.f32 0.0, %v2411
      %v2413 = vpop.f32.mrf.mxu0
      %v2414 = vadd.f32 0.0, %v2413
      %2415 = vmatmul.bf16.gmra.mxu0 %v2218
      %v2416 = vpop.f32.mrf.mxu0
      %v2417 = vadd.f32 0.0, %v2416
      %v2418 = vpop.f32.mrf.mxu0
      %v2419 = vadd.f32 0.0, %v2418
      %2420 = vmatmul.bf16.gmra.mxu0 %v2221
      %v2421 = vpop.f32.mrf.mxu0
      %v2422 = vadd.f32 0.0, %v2421
      %v2423 = vpop.f32.mrf.mxu0
      %v2424 = vadd.f32 0.0, %v2423
      %2425 = vmatmul.bf16.gmra.mxu0 %v2224
      %v2426 = vpop.f32.mrf.mxu0
      %v2427 = vadd.f32 0.0, %v2426
      %v2428 = vpop.f32.mrf.mxu0
      %v2429 = vadd.f32 0.0, %v2428
      %2430 = vmatmul.bf16.gmra.mxu0 %v2227
      %v2431 = vpop.f32.mrf.mxu0
      %v2432 = vadd.f32 0.0, %v2431
      %v2433 = vpop.f32.mrf.mxu0
      %v2434 = vadd.f32 0.0, %v2433
      %2435 = vmatmul.bf16.gmra.mxu0 %v2230
      %v2436 = vpop.f32.mrf.mxu0
      %v2437 = vadd.f32 0.0, %v2436
      %v2438 = vpop.f32.mrf.mxu0
      %v2439 = vadd.f32 0.0, %v2438
      %2440 = vdwg.mxu0
      %2441 = vmatpush.bf16.msra.mxu0 0
      %2442 = vmatpush.bf16.msra.mxu0 0
      %2443 = vmatpush.bf16.msra.mxu0 0
      %2444 = vmatpush.bf16.msra.mxu0 0
      %2445 = vmatpush.bf16.msra.mxu0 0
      %2446 = vmatpush.bf16.msra.mxu0 0
      %2447 = vmatpush.bf16.msra.mxu0 0
      %2448 = vmatpush.bf16.msra.mxu0 %v2294
      %2449 = vmatmul.bf16.gmra.mxu0 %v2305
      %v2450 = vpop.f32.mrf.mxu0
      %v2451 = vadd.f32 %v2362, %v2450
      %v2452 = vpop.f32.mrf.mxu0
      %v2453 = vadd.f32 %v2364, %v2452
      %2454 = vmatmul.bf16.gmra.mxu0 %v2308
      %v2455 = vpop.f32.mrf.mxu0
      %v2456 = vadd.f32 %v2367, %v2455
      %v2457 = vpop.f32.mrf.mxu0
      %v2458 = vadd.f32 %v2369, %v2457
      %2459 = vmatmul.bf16.gmra.mxu0 %v2311
      %v2460 = vpop.f32.mrf.mxu0
      %v2461 = vadd.f32 %v2372, %v2460
      %v2462 = vpop.f32.mrf.mxu0
      %v2463 = vadd.f32 %v2374, %v2462
      %2464 = vmatmul.bf16.gmra.mxu0 %v2314
      %v2465 = vpop.f32.mrf.mxu0
      %v2466 = vadd.f32 %v2377, %v2465
      %v2467 = vpop.f32.mrf.mxu0
      %v2468 = vadd.f32 %v2379, %v2467
      %2469 = vmatmul.bf16.gmra.mxu0 %v2317
      %v2470 = vpop.f32.mrf.mxu0
      %v2471 = vadd.f32 %v2382, %v2470
      %v2472 = vpop.f32.mrf.mxu0
      %v2473 = vadd.f32 %v2384, %v2472
      %2474 = vmatmul.bf16.gmra.mxu0 %v2320
      %v2475 = vpop.f32.mrf.mxu0
      %v2476 = vadd.f32 %v2387, %v2475
      %v2477 = vpop.f32.mrf.mxu0
      %v2478 = vadd.f32 %v2389, %v2477
      %2479 = vmatmul.bf16.gmra.mxu0 %v2323
      %v2480 = vpop.f32.mrf.mxu0
      %v2481 = vadd.f32 %v2392, %v2480
      %v2482 = vpop.f32.mrf.mxu0
      %v2483 = vadd.f32 %v2394, %v2482
      %2484 = vmatmul.bf16.gmra.mxu0 %v2326
      %v2485 = vpop.f32.mrf.mxu0
      %v2486 = vadd.f32 %v2397, %v2485
      %v2487 = vpop.f32.mrf.mxu0
      %v2488 = vadd.f32 %v2399, %v2487
      %2489 = vmatmul.bf16.gmra.mxu0 %v2329
      %v2490 = vpop.f32.mrf.mxu0
      %v2491 = vadd.f32 %v2402, %v2490
      %v2492 = vpop.f32.mrf.mxu0
      %v2493 = vadd.f32 %v2404, %v2492
      %2494 = vmatmul.bf16.gmra.mxu0 %v2332
      %v2495 = vpop.f32.mrf.mxu0
      %v2496 = vadd.f32 %v2407, %v2495
      %v2497 = vpop.f32.mrf.mxu0
      %v2498 = vadd.f32 %v2409, %v2497
      %2499 = vmatmul.bf16.gmra.mxu0 %v2335
      %v2500 = vpop.f32.mrf.mxu0
      %v2501 = vadd.f32 %v2412, %v2500
      %v2502 = vpop.f32.mrf.mxu0
      %v2503 = vadd.f32 %v2414, %v2502
      %2504 = vmatmul.bf16.gmra.mxu0 %v2338
      %v2505 = vpop.f32.mrf.mxu0
      %v2506 = vadd.f32 %v2417, %v2505
      %v2507 = vpop.f32.mrf.mxu0
      %v2508 = vadd.f32 %v2419, %v2507
      %2509 = vmatmul.bf16.gmra.mxu0 %v2341
      %v2510 = vpop.f32.mrf.mxu0
      %v2511 = vadd.f32 %v2422, %v2510
      %v2512 = vpop.f32.mrf.mxu0
      %v2513 = vadd.f32 %v2424, %v2512
      %2514 = vmatmul.bf16.gmra.mxu0 %v2344
      %v2515 = vpop.f32.mrf.mxu0
      %v2516 = vadd.f32 %v2427, %v2515
      %v2517 = vpop.f32.mrf.mxu0
      %v2518 = vadd.f32 %v2429, %v2517
      %2519 = vmatmul.bf16.gmra.mxu0 %v2347
      %v2520 = vpop.f32.mrf.mxu0
      %v2521 = vadd.f32 %v2432, %v2520
      %v2522 = vpop.f32.mrf.mxu0
      %v2523 = vadd.f32 %v2434, %v2522
      %2524 = vmatmul.bf16.gmra.mxu0 %v2350
      %v2525 = vpop.f32.mrf.mxu0
      %v2526 = vadd.f32 %v2437, %v2525
      %v2527 = vpop.f32.mrf.mxu0
      %v2528 = vadd.f32 %v2439, %v2527
      %2529 = vdwg.mxu0
      %v2530 = vpack.c.bf16 %v2451, %v2451
      %v2531 = vpack.c.bf16 %v2453, %v2453
      %v2532 = vpack.c.bf16 %v2456, %v2456
      %v2533 = vpack.c.bf16 %v2458, %v2458
      %v2534 = vpack.c.bf16 %v2461, %v2461
      %v2535 = vpack.c.bf16 %v2463, %v2463
      %v2536 = vpack.c.bf16 %v2466, %v2466
      %v2537 = vpack.c.bf16 %v2468, %v2468
      %v2538 = vpack.c.bf16 %v2471, %v2471
      %v2539 = vpack.c.bf16 %v2473, %v2473
      %v2540 = vpack.c.bf16 %v2476, %v2476
      %v2541 = vpack.c.bf16 %v2478, %v2478
      %v2542 = vpack.c.bf16 %v2481, %v2481
      %v2543 = vpack.c.bf16 %v2483, %v2483
      %v2544 = vpack.c.bf16 %v2486, %v2486
      %v2545 = vpack.c.bf16 %v2488, %v2488
      %v2546 = vpack.c.bf16 %v2491, %v2491
      %v2547 = vpack.c.bf16 %v2493, %v2493
      %v2548 = vpack.c.bf16 %v2496, %v2496
      %v2549 = vpack.c.bf16 %v2498, %v2498
      %v2550 = vpack.c.bf16 %v2501, %v2501
      %v2551 = vpack.c.bf16 %v2503, %v2503
      %v2552 = vpack.c.bf16 %v2506, %v2506
      %v2553 = vpack.c.bf16 %v2508, %v2508
      %v2554 = vpack.c.bf16 %v2511, %v2511
      %v2555 = vpack.c.bf16 %v2513, %v2513
      %v2556 = vpack.c.bf16 %v2516, %v2516
      %v2557 = vpack.c.bf16 %v2518, %v2518
      %v2558 = vpack.c.bf16 %v2521, %v2521
      %v2559 = vpack.c.bf16 %v2523, %v2523
      %v2560 = vpack.c.bf16 %v2526, %v2526
      %v2561 = vpack.c.bf16 %v2528, %v2528
      %2562 = vst [vmem:[%s296] sm:$0xf] %v2530
      %2563 = vst [vmem:[%s296 + $0x4] sm:$0xf] %v2531
      %2564 = vst [vmem:[%s296 + $0x8] sm:$0xf] %v2532
      %2565 = vst [vmem:[%s296 + $0xc] sm:$0xf] %v2533
      %2566 = vst [vmem:[%s296 + $0x10] sm:$0xf] %v2534
      %2567 = vst [vmem:[%s296 + $0x14] sm:$0xf] %v2535
      %2568 = vst [vmem:[%s296 + $0x18] sm:$0xf] %v2536
      %2569 = vst [vmem:[%s296 + $0x1c] sm:$0xf] %v2537
      %2570 = vst [vmem:[%s296 + $0x20] sm:$0xf] %v2538
      %2571 = vst [vmem:[%s296 + $0x24] sm:$0xf] %v2539
      %2572 = vst [vmem:[%s296 + $0x28] sm:$0xf] %v2540
      %2573 = vst [vmem:[%s296 + $0x2c] sm:$0xf] %v2541
      %2574 = vst [vmem:[%s296 + $0x30] sm:$0xf] %v2542
      %2575 = vst [vmem:[%s296 + $0x34] sm:$0xf] %v2543
      %2576 = vst [vmem:[%s296 + $0x38] sm:$0xf] %v2544
      %2577 = vst [vmem:[%s296 + $0x3c] sm:$0xf] %v2545
      %2578 = vst [vmem:[%s296 + $0x40] sm:$0xf] %v2546
      %2579 = vst [vmem:[%s296 + $0x44] sm:$0xf] %v2547
      %2580 = vst [vmem:[%s296 + $0x48] sm:$0xf] %v2548
      %2581 = vst [vmem:[%s296 + $0x4c] sm:$0xf] %v2549
      %2582 = vst [vmem:[%s296 + $0x50] sm:$0xf] %v2550
      %2583 = vst [vmem:[%s296 + $0x54] sm:$0xf] %v2551
      %2584 = vst [vmem:[%s296 + $0x58] sm:$0xf] %v2552
      %2585 = vst [vmem:[%s296 + $0x5c] sm:$0xf] %v2553
      %2586 = vst [vmem:[%s296 + $0x60] sm:$0xf] %v2554
      %2587 = vst [vmem:[%s296 + $0x64] sm:$0xf] %v2555
      %2588 = vst [vmem:[%s296 + $0x68] sm:$0xf] %v2556
      %2589 = vst [vmem:[%s296 + $0x6c] sm:$0xf] %v2557
      %2590 = vst [vmem:[%s296 + $0x70] sm:$0xf] %v2558
      %2591 = vst [vmem:[%s296 + $0x74] sm:$0xf] %v2559
      %2592 = vst [vmem:[%s296 + $0x78] sm:$0xf] %v2560
      %2593 = vst [vmem:[%s296 + $0x7c] sm:$0xf] %v2561
      %v2594 = vunpack.c.l.bf16 %v2530
      %v2595 = vunpack.c.l.bf16 %v2531
      %v2596 = vunpack.c.l.bf16 %v2532
      %v2597 = vunpack.c.l.bf16 %v2533
      %v2598 = vunpack.c.l.bf16 %v2534
      %v2599 = vunpack.c.l.bf16 %v2535
      %v2600 = vunpack.c.l.bf16 %v2536
      %v2601 = vunpack.c.l.bf16 %v2537
      %v2602 = vunpack.c.l.bf16 %v2538
      %v2603 = vunpack.c.l.bf16 %v2539
      %v2604 = vunpack.c.l.bf16 %v2540
      %v2605 = vunpack.c.l.bf16 %v2541
      %v2606 = vunpack.c.l.bf16 %v2542
      %v2607 = vunpack.c.l.bf16 %v2543
      %v2608 = vunpack.c.l.bf16 %v2544
      %v2609 = vunpack.c.l.bf16 %v2545
      %v2610 = vunpack.c.l.bf16 %v2546
      %v2611 = vunpack.c.l.bf16 %v2547
      %v2612 = vunpack.c.l.bf16 %v2548
      %v2613 = vunpack.c.l.bf16 %v2549
      %v2614 = vunpack.c.l.bf16 %v2550
      %v2615 = vunpack.c.l.bf16 %v2551
      %v2616 = vunpack.c.l.bf16 %v2552
      %v2617 = vunpack.c.l.bf16 %v2553
      %v2618 = vunpack.c.l.bf16 %v2554
      %v2619 = vunpack.c.l.bf16 %v2555
      %v2620 = vunpack.c.l.bf16 %v2556
      %v2621 = vunpack.c.l.bf16 %v2557
      %v2622 = vunpack.c.l.bf16 %v2558
      %v2623 = vunpack.c.l.bf16 %v2559
      %v2624 = vunpack.c.l.bf16 %v2560
      %v2625 = vunpack.c.l.bf16 %v2561
      %v2626 = vadd.f32 %v2594, %v2595
      %v2627 = vadd.f32 %v2626, %v2596
      %v2628 = vadd.f32 %v2627, %v2597
      %v2629 = vadd.f32 %v2628, %v2598
      %v2630 = vadd.f32 %v2629, %v2599
      %v2631 = vadd.f32 %v2630, %v2600
      %v2632 = vadd.f32 %v2631, %v2601
      %v2633 = vadd.f32 %v2632, %v2602
      %v2634 = vadd.f32 %v2633, %v2603
      %v2635 = vadd.f32 %v2634, %v2604
      %v2636 = vadd.f32 %v2635, %v2605
      %v2637 = vadd.f32 %v2636, %v2606
      %v2638 = vadd.f32 %v2637, %v2607
      %v2639 = vadd.f32 %v2638, %v2608
      %v2640 = vadd.f32 %v2639, %v2609
      %v2641 = vadd.f32 %v2640, %v2610
      %v2642 = vadd.f32 %v2641, %v2611
      %v2643 = vadd.f32 %v2642, %v2612
      %v2644 = vadd.f32 %v2643, %v2613
      %v2645 = vadd.f32 %v2644, %v2614
      %v2646 = vadd.f32 %v2645, %v2615
      %v2647 = vadd.f32 %v2646, %v2616
      %v2648 = vadd.f32 %v2647, %v2617
      %v2649 = vadd.f32 %v2648, %v2618
      %v2650 = vadd.f32 %v2649, %v2619
      %v2651 = vadd.f32 %v2650, %v2620
      %v2652 = vadd.f32 %v2651, %v2621
      %v2653 = vadd.f32 %v2652, %v2622
      %v2654 = vadd.f32 %v2653, %v2623
      %v2655 = vadd.f32 %v2654, %v2624
      %v2656 = vadd.f32 %v2655, %v2625
      %v2657 = vrot.slane %v2656, 4
      %v2658 = vadd.f32 %v2656, %v2657
      %v2659 = vrot.slane %v2658, 2
      %v2660 = vadd.f32 %v2658, %v2659
      %v2661 = vrot.slane %v2660, 1
      %v2662 = vadd.f32 %v2660, %v2661
      %2663 = vst [vmem:[%s306] sm:$0x1] %v2662
      %v2664 = vmul.f32 %v2594, %v2594
      %v2665 = vmul.f32 %v2595, %v2595
      %v2666 = vmul.f32 %v2596, %v2596
      %v2667 = vmul.f32 %v2597, %v2597
      %v2668 = vmul.f32 %v2598, %v2598
      %v2669 = vmul.f32 %v2599, %v2599
      %v2670 = vmul.f32 %v2600, %v2600
      %v2671 = vmul.f32 %v2601, %v2601
      %v2672 = vmul.f32 %v2602, %v2602
      %v2673 = vmul.f32 %v2603, %v2603
      %v2674 = vmul.f32 %v2604, %v2604
      %v2675 = vmul.f32 %v2605, %v2605
      %v2676 = vmul.f32 %v2606, %v2606
      %v2677 = vmul.f32 %v2607, %v2607
      %v2678 = vmul.f32 %v2608, %v2608
      %v2679 = vmul.f32 %v2609, %v2609
      %v2680 = vmul.f32 %v2610, %v2610
      %v2681 = vmul.f32 %v2611, %v2611
      %v2682 = vmul.f32 %v2612, %v2612
      %v2683 = vmul.f32 %v2613, %v2613
      %v2684 = vmul.f32 %v2614, %v2614
      %v2685 = vmul.f32 %v2615, %v2615
      %v2686 = vmul.f32 %v2616, %v2616
      %v2687 = vmul.f32 %v2617, %v2617
      %v2688 = vmul.f32 %v2618, %v2618
      %v2689 = vmul.f32 %v2619, %v2619
      %v2690 = vmul.f32 %v2620, %v2620
      %v2691 = vmul.f32 %v2621, %v2621
      %v2692 = vmul.f32 %v2622, %v2622
      %v2693 = vmul.f32 %v2623, %v2623
      %v2694 = vmul.f32 %v2624, %v2624
      %v2695 = vmul.f32 %v2625, %v2625
      %v2696 = vadd.f32 %v2664, %v2665
      %v2697 = vadd.f32 %v2696, %v2666
      %v2698 = vadd.f32 %v2697, %v2667
      %v2699 = vadd.f32 %v2698, %v2668
      %v2700 = vadd.f32 %v2699, %v2669
      %v2701 = vadd.f32 %v2700, %v2670
      %v2702 = vadd.f32 %v2701, %v2671
      %v2703 = vadd.f32 %v2702, %v2672
      %v2704 = vadd.f32 %v2703, %v2673
      %v2705 = vadd.f32 %v2704, %v2674
      %v2706 = vadd.f32 %v2705, %v2675
      %v2707 = vadd.f32 %v2706, %v2676
      %v2708 = vadd.f32 %v2707, %v2677
      %v2709 = vadd.f32 %v2708, %v2678
      %v2710 = vadd.f32 %v2709, %v2679
      %v2711 = vadd.f32 %v2710, %v2680
      %v2712 = vadd.f32 %v2711, %v2681
      %v2713 = vadd.f32 %v2712, %v2682
      %v2714 = vadd.f32 %v2713, %v2683
      %v2715 = vadd.f32 %v2714, %v2684
      %v2716 = vadd.f32 %v2715, %v2685
      %v2717 = vadd.f32 %v2716, %v2686
      %v2718 = vadd.f32 %v2717, %v2687
      %v2719 = vadd.f32 %v2718, %v2688
      %v2720 = vadd.f32 %v2719, %v2689
      %v2721 = vadd.f32 %v2720, %v2690
      %v2722 = vadd.f32 %v2721, %v2691
      %v2723 = vadd.f32 %v2722, %v2692
      %v2724 = vadd.f32 %v2723, %v2693
      %v2725 = vadd.f32 %v2724, %v2694
      %v2726 = vadd.f32 %v2725, %v2695
      %v2727 = vrot.slane %v2726, 4
      %v2728 = vadd.f32 %v2726, %v2727
      %v2729 = vrot.slane %v2728, 2
      %v2730 = vadd.f32 %v2728, %v2729
      %v2731 = vrot.slane %v2730, 1
      %v2732 = vadd.f32 %v2730, %v2731
      %2733 = vst [vmem:[%s315] sm:$0x1] %v2732
      %s2734 = smul.u32 32, %s22
      %p2735 = scmp.lt.s32.totalorder %s21, 1
      %s2736 = scalar_select %p2735, %s21, 1
      %p2737 = scmp.lt.s32.totalorder %s2734, 31
      %s2738 = scalar_select %p2737, %s2734, 31
      %p2739 = scmp.lt.s32.totalorder %s23, 0
      %s2740 = scalar_select %p2739, %s23, 0
      %s2741 = sadd.s32 %s2740, %s2738
      %s2742 = smul.addr %s2736, 32
      %s2743 = sadd.s32 %s2741, %s2742
      %s2744 = smul.addr %s2743, 4
      %s2745 = scalar_lea.vmem %s2, %s2744
      %p2746 = scmp.lt.s32.totalorder %s21, 1
      %s2747 = scalar_select %p2746, %s21, 1
      %p2748 = scmp.lt.s32.totalorder %s22, 0
      %s2749 = scalar_select %p2748, %s22, 0
      %p2750 = scmp.lt.s32.totalorder %s23, 0
      %s2751 = scalar_select %p2750, %s23, 0
      %s2752 = sadd.s32 %s2751, %s2749
      %s2753 = sadd.s32 %s2752, %s2747
      %s2754 = scalar_lea.vmem %s3, %s2753
      %p2755 = scmp.lt.s32.totalorder %s21, 1
      %s2756 = scalar_select %p2755, %s21, 1
      %p2757 = scmp.lt.s32.totalorder %s22, 0
      %s2758 = scalar_select %p2757, %s22, 0
      %p2759 = scmp.lt.s32.totalorder %s23, 0
      %s2760 = scalar_select %p2759, %s23, 0
      %s2761 = sadd.s32 %s2760, %s2758
      %s2762 = sadd.s32 %s2761, %s2756
      %s2763 = scalar_lea.vmem %s4, %s2762
      // Predicated region
      $region29: #{_conv_bn_silu_impl.2} parent=27 // pred_check
        %p2764 = pneg %p111
      $region30: #{_conv_bn_silu_impl.2} parent=27 // pred_check_branch
        %2766 = sbr.rel (%p2764) target = $region32
      $region31: #{_conv_bn_silu_impl.2} parent=27 // pred_region
        %s2767 = smul.u32 32, %s22
      $region32: #{_conv_bn_silu_impl.2} parent=27 // pred_fallthru
        _
      // Predicated region
      $region33: #{_conv_bn_silu_impl.2} parent=27 // pred_check
        %p2768 = pneg %p141
      $region34: #{_conv_bn_silu_impl.2} parent=27 // pred_check_branch
        %2770 = sbr.rel (%p2768) target = $region36
      $region35: #{_conv_bn_silu_impl.2} parent=27 // pred_region
        _
      $region36: #{_conv_bn_silu_impl.2} parent=27 // pred_fallthru
        _
      // Predicated region
      $region37: #{_conv_bn_silu_impl.2} parent=27 // pred_check
        %p2771 = pneg %p171
      $region38: #{_conv_bn_silu_impl.2} parent=27 // pred_check_branch
        %2773 = sbr.rel (%p2771) target = $region40
      $region39: #{_conv_bn_silu_impl.2} parent=27 // pred_region
        _
      $region40: #{_conv_bn_silu_impl.2} parent=27 // pred_fallthru
        _
    $region28: #{_conv_bn_silu_impl.2} parent=5 // pred_fallthru
      _
    %p2774 = scmp.le.s32.totalorder 2, %s11
    // Predicated region
    $region41: #{_conv_bn_silu_impl.2} parent=5 // pred_check
      %p2775 = pneg %p2774
    $region42: #{_conv_bn_silu_impl.2} parent=5 // pred_check_branch
      %2777 = sbr.rel (%p2775) target = $region44
    $region43: #{_conv_bn_silu_impl.2} parent=5 // pred_region
      %s2778 = ssub.s32 %s11, 2
      // Predicated region
      $region45: #{_conv_bn_silu_impl.2} parent=43 // pred_check
        %p2779 = pneg %p117
      $region46: #{_conv_bn_silu_impl.2} parent=43 // pred_check_branch
        %2781 = sbr.rel (%p2779) target = $region48
      $region47: #{_conv_bn_silu_impl.2} parent=43 // pred_region
        %s2782 = smul.u32 32, %s25
        %p2783 = scmp.lt.s32.totalorder %s24, 1
        %s2784 = scalar_select %p2783, %s24, 1
        %p2785 = scmp.lt.s32.totalorder %s2782, 31
        %s2786 = scalar_select %p2785, %s2782, 31
        %p2787 = scmp.lt.s32.totalorder %s26, 0
        %s2788 = scalar_select %p2787, %s26, 0
        %s2789 = sadd.s32 %s2788, %s2786
        %s2790 = smul.addr %s2784, 32
        %s2791 = sadd.s32 %s2789, %s2790
        %s2792 = smul.addr %s2791, 4
        %s2793 = scalar_lea.vmem %s2, %s2792
      $region48: #{_conv_bn_silu_impl.2} parent=43 // pred_fallthru
        _
      // Predicated region
      $region49: #{_conv_bn_silu_impl.2} parent=43 // pred_check
        %p2794 = pneg %p147
      $region50: #{_conv_bn_silu_impl.2} parent=43 // pred_check_branch
        %2796 = sbr.rel (%p2794) target = $region52
      $region51: #{_conv_bn_silu_impl.2} parent=43 // pred_region
        %p2797 = scmp.lt.s32.totalorder %s24, 1
        %s2798 = scalar_select %p2797, %s24, 1
        %p2799 = scmp.lt.s32.totalorder %s25, 0
        %s2800 = scalar_select %p2799, %s25, 0
        %p2801 = scmp.lt.s32.totalorder %s26, 0
        %s2802 = scalar_select %p2801, %s26, 0
        %s2803 = sadd.s32 %s2802, %s2800
        %s2804 = sadd.s32 %s2803, %s2798
        %s2805 = scalar_lea.vmem %s3, %s2804
      $region52: #{_conv_bn_silu_impl.2} parent=43 // pred_fallthru
        _
      // Predicated region
      $region53: #{_conv_bn_silu_impl.2} parent=43 // pred_check
        %p2806 = pneg %p177
      $region54: #{_conv_bn_silu_impl.2} parent=43 // pred_check_branch
        %2808 = sbr.rel (%p2806) target = $region56
      $region55: #{_conv_bn_silu_impl.2} parent=43 // pred_region
        %p2809 = scmp.lt.s32.totalorder %s24, 1
        %s2810 = scalar_select %p2809, %s24, 1
        %p2811 = scmp.lt.s32.totalorder %s25, 0
        %s2812 = scalar_select %p2811, %s25, 0
        %p2813 = scmp.lt.s32.totalorder %s26, 0
        %s2814 = scalar_select %p2813, %s26, 0
        %s2815 = sadd.s32 %s2814, %s2812
        %s2816 = sadd.s32 %s2815, %s2810
        %s2817 = scalar_lea.vmem %s4, %s2816
      $region56: #{_conv_bn_silu_impl.2} parent=43 // pred_fallthru
        _
    $region44: #{_conv_bn_silu_impl.2} parent=5 // pred_fallthru
      _
  $region6: #{_conv_bn_silu_impl.2} parent=0 // loop_footer
    %s15 = sadd.s32 1, %s11
  $region7: #{_conv_bn_silu_impl.2} parent=0 // loop_footer_branch
    %10 = sbr.rel target = $region3
  $region8: #{_conv_bn_silu_impl.2} parent=0 // loop_exit
    _

</llo_original>
